<compile_context>
chip_gen: v7x
topology: tpu7x:2x2x1
jax: 0.10.0
libtpu: 0.0.40
codegen_flags: <defaults>
</compile_context>

<pallas_src>
import numpy as np

import jax
import jax.numpy as jnp
from jax.experimental import pallas as pl
from jax.experimental.pallas import tpu as pltpu


# ----------------------------------------------------------------------------
# Fused Pallas kernel
# ----------------------------------------------------------------------------
def _make_fused_kernel(n, h, w, c, pmax, ks_list):
    hp = h + 2 * pmax          # padded rows per image
    m = n * h                  # interior rows of the activation slab
    wc = w * c                 # lanes of the activation slab (lane-dense)
    nb = len(ks_list)
    max_kw = max(ks_list) * wc # stacked-K width of the largest layer
    top = pmax * n             # first interior row of the halo slab

    def kernel(*refs):
        # inputs
        x_ref = refs[0]                               # (m, w*cin) bf16
        wc1_ref, bc1_ref = refs[1], refs[2]           # (w*cin, wc) bf16 / (1, wc) f32
        wcin_ref, bcin_ref = refs[3], refs[4]         # (wc, wc) bf16 / (1, wc) f32
        wb_hbm = refs[5:5 + nb]                       # stacked band weights, HBM (ANY)
        bb_refs = refs[5 + nb:5 + 2 * nb]             # (1, wc) f32 biases, VMEM
        # output
        o_ref = refs[5 + 2 * nb]                      # (m, wc) f32 output slab
        # scratch
        act_ref = refs[6 + 2 * nb]                    # (n*hp, wc) bf16 zero-halo slab
        hxin_ref = refs[7 + 2 * nb]                   # (m, wc) f32 residual
        stage_ref = refs[8 + 2 * nb]                  # (m, max_kw) bf16 stacked LHS
        wbuf_ref = refs[9 + 2 * nb]                   # (2*max_kw, wc) bf16 weight dbl-buf
        sem_ref = refs[10 + 2 * nb]                   # DMA sems, one per slot

        f32, bf16 = jnp.float32, jnp.bfloat16

        def layer_dma(l):
            """Async copy of layer l's stacked band weight: HBM -> slot l%2."""
            kw = ks_list[l] * wc
            off = (l % 2) * max_kw
            return pltpu.make_async_copy(
                wb_hbm[l], wbuf_ref.at[off:off + kw, :], sem_ref.at[l % 2])

        # Kick off layer 0's weight stream immediately: it overlaps with the
        # c1 / convin compute and the halo-slab setup below (perf item #1).
        layer_dma(0).start()

        # ---- c1 : 1x1 conv (1 -> C) + ReLU (no BN) -------------------------
        y = jnp.dot(x_ref[...], wc1_ref[...], preferred_element_type=f32)
        c1 = jnp.maximum(y + bc1_ref[...], 0.0)

        # ---- convin : 1x1 conv (C -> C), BN folded, + ReLU -----------------
        y = jnp.dot(c1.astype(bf16), wcin_ref[...], preferred_element_type=f32)
        hxin = jnp.maximum(y + bcin_ref[...], 0.0)
        hxin_ref[...] = hxin                 # residual kept resident in VMEM (f32)

        # Zero ONLY the halo rows; interior rows are rewritten every layer.
        act_ref[0:top, :] = jnp.zeros((top, wc), bf16)
        act_ref[top + m:top + m + top, :] = jnp.zeros((top, wc), bf16)
        act_ref[top:top + m, :] = hxin.astype(bf16)

        # ---- convblock : 'same' convs, BN folded, + ReLU --------------------
        for l, ks in enumerate(ks_list):
            # Prefetch the NEXT layer's weights into the other slot while this
            # layer stages its LHS and runs on the MXU (perf item #1).
            if l + 1 < nb:
                layer_dma(l + 1).start()

            p = ks // 2
            kw = ks * wc
            # Build the K-stacked LHS: tap i = whole batch shifted by (i - p)
            # rows in H.  Batch is interleaved along sublanes (row = h*n + b),
            # so each tap is ONE contiguous (m, wc) slice of the halo slab —
            # the zero halo supplies the 'same' padding (perf items #2/#3).
            for i in range(ks):
                src = top + (i - p) * n
                stage_ref[:, i * wc:(i + 1) * wc] = act_ref[src:src + m, :]

            layer_dma(l).wait()
            off = (l % 2) * max_kw
            y = jnp.dot(stage_ref[:, 0:kw], wbuf_ref[off:off + kw, :],
                        preferred_element_type=f32)         # K up to 2816
            hx = jnp.maximum(y + bb_refs[l][...], 0.0)

            if l == nb - 1:
                # residual added AFTER the last ReLU (matches the reference)
                o_ref[...] = (hx + hxin_ref[...]).astype(o_ref.dtype)
            else:
                act_ref[top:top + m, :] = hx.astype(bf16)

    return kernel


def tinynet_forward(x_nchw, kparams):
    n, cin, h, w = x_nchw.shape
    wc = kparams["bc1"].shape[-1]
    c = wc // w
    ks_list = tuple(int(wb.shape[0]) // wc for wb in kparams["wb"])
    max_pad = max(ks_list) // 2
    pmax = max(8, ((max_pad + 7) // 8) * 8)       # halo rows, multiple of 8
    hp = h + 2 * pmax
    m = n * h
    max_kw = max(ks_list) * wc

    # NCHW -> batch-interleaved, lane-dense slab: row = h*n + b, lane = w*cin+ci
    x_slab = jnp.transpose(x_nchw, (2, 0, 3, 1)).reshape(m, w * cin)
    x_slab = x_slab.astype(jnp.bfloat16)

    args = [x_slab, kparams["wc1"], kparams["bc1"],
            kparams["wcin"], kparams["bcin"]]
    args += list(kparams["wb"]) + list(kparams["bb"])

    vmem = pl.BlockSpec(memory_space=pltpu.MemorySpace.VMEM)
    hbm = pl.BlockSpec(memory_space=pl.ANY)       # band weights stay in HBM
    nb = len(ks_list)

    # NOTE(scale-up): if H/W/batch grow, add a leading 'parallel' grid axis
    # over row tiles (v7x second TensorCore) and raise vmem_limit_bytes /
    # keep the O(W^2) band weights streamed per layer as done here.
    out_slab = pl.pallas_call(
        _make_fused_kernel(n, h, w, c, pmax, ks_list),
        out_shape=jax.ShapeDtypeStruct((m, wc), jnp.float32),
        in_specs=[vmem] * 5 + [hbm] * nb + [vmem] * nb,
        out_specs=vmem,
        scratch_shapes=[
            pltpu.VMEM((n * hp, wc), jnp.bfloat16),      # zero-halo activation slab
            pltpu.VMEM((m, wc), jnp.float32),            # hxin residual
            pltpu.VMEM((m, max_kw), jnp.bfloat16),       # K-stacked LHS staging
            pltpu.VMEM((2 * max_kw, wc), jnp.bfloat16),  # double-buffered weights
            pltpu.SemaphoreType.DMA((2,)),               # one DMA sem per slot
        ],
    )(*args)

    # NOTE: drop this transpose if the consumer accepts NHWC / the slab layout.
    out = out_slab.reshape(h, n, w, c)
    return jnp.transpose(out, (1, 3, 0, 2))       # back to NCHW


tinynet_forward = jax.jit(tinynet_forward)


# ----------------------------------------------------------------------------
# Parameters: synthetic conv/BN params, BN folding, stacked band-weight packing
# ----------------------------------------------------------------------------
def _resblock_kernel_sizes(max_ks=11, layer_num=6):
    sizes, ks = [], max_ks
    for i in range(layer_num):
        ks = ks - i * 2
        if ks < 3:
            ks = 3
        sizes.append(ks)
    return sizes                                  # [11, 9, 5, 3, 3, 3]


def _conv_params(key, ks, cin, cout, scale=0.05):
    kw, kb = jax.random.split(key)
    w = jax.random.normal(kw, (ks, ks, cin, cout), jnp.float32) * scale
    b = jax.random.normal(kb, (cout,), jnp.float32) * scale
    return w, b


def _bn_params(key, ch):
    k1, k2, k3, k4 = jax.random.split(key, 4)
    gamma = 1.0 + 0.1 * jax.random.normal(k1, (ch,), jnp.float32)
    beta = 0.1 * jax.random.normal(k2, (ch,), jnp.float32)
    mean = 0.1 * jax.random.normal(k3, (ch,), jnp.float32)
    var = 1.0 + 0.1 * jnp.abs(jax.random.normal(k4, (ch,), jnp.float32))
    return gamma, beta, mean, var


def _fold_bn(w_hwio, b, gamma, beta, mean, var, eps=1e-5):
    scale = gamma / jnp.sqrt(var + eps)
    return w_hwio * scale.reshape(1, 1, 1, -1), (b - mean) * scale + beta


def _band_weights(w_hwio, width):
    """Expand (ks, ks, cin, cout) -> (ks, width*cin, width*cout) band matrices.

    band[i] applied to the activation slab shifted by (i - ks//2) rows realises
    the W taps + channel contraction of a stride-1 'same' conv; W zero-padding
    is encoded by the zero entries of the band."""
    wnp = np.asarray(w_hwio, np.float32)
    ks, _, cin, cout = wnp.shape
    p = ks // 2
    band = np.zeros((ks, width * cin, width * cout), np.float32)
    for i in range(ks):
        for wout in range(width):
            for j in range(ks):
                win = wout + j - p
                if 0 <= win < width:
                    band[i, win * cin:(win + 1) * cin,
                         wout * cout:(wout + 1) * cout] = wnp[i, j]
    return band


def init_tinynet_params(seed=42, max_ks=11, layer_num=6, width=16, channels=16):
    key = jax.random.PRNGKey(seed)
    keys = jax.random.split(key, 2 + 2 * (layer_num + 1))
    ki = iter(keys)

    folded = {}
    folded["c1"] = _conv_params(next(ki), 1, 1, channels)           # no BN
    w_, b_ = _conv_params(next(ki), 1, channels, channels)
    folded["convin"] = _fold_bn(w_, b_, *_bn_params(next(ki), channels))
    blk = []
    for ks in _resblock_kernel_sizes(max_ks, layer_num):
        w_, b_ = _conv_params(next(ki), ks, channels, channels)
        blk.append(_fold_bn(w_, b_, *_bn_params(next(ki), channels)))
    folded["block"] = blk

    def pack(w_hwio, bias):
        # Stack the ks band matrices along K -> (ks*width*cin, width*cout) so
        # each layer is a single deep matmul in the kernel.
        band = _band_weights(w_hwio, width)
        ks, kin, kout = band.shape
        stacked = jnp.asarray(band.reshape(ks * kin, kout), jnp.bfloat16)
        brow = jnp.asarray(np.tile(np.asarray(bias, np.float32),
                                   width).reshape(1, -1))
        return stacked, brow

    wc1, bc1 = pack(*folded["c1"])
    wcin, bcin = pack(*folded["convin"])
    wb, bb = [], []
    for w_, b_ in folded["block"]:
        stacked, brow = pack(w_, b_)
        wb.append(stacked)
        bb.append(brow)

    kparams = {"wc1": wc1, "bc1": bc1, "wcin": wcin, "bcin": bcin,
               "wb": wb, "bb": bb}
    return kparams, folded


# ----------------------------------------------------------------------------
# Plain-JAX reference (same folded math) for a numerical cross-check
# ----------------------------------------------------------------------------
def _reference_forward(x_nchw, folded):
    x = jnp.transpose(x_nchw, (0, 2, 3, 1))

    def conv(a, w, b):
        y = jax.lax.conv_general_dilated(
            a, w, window_strides=(1, 1), padding="SAME",
            dimension_numbers=("NHWC", "HWIO", "NHWC"))
        return jnp.maximum(y + b.reshape(1, 1, 1, -1), 0.0)

    c1 = conv(x, *folded["c1"])
    hxin = conv(c1, *folded["convin"])
    hx = hxin
    for w, b in folded["block"]:
        hx = conv(hx, w, b)
    return jnp.transpose(hx + hxin, (0, 3, 1, 2))


if __name__ == "__main__":
    # PyTorch TinyNet expects NCHW input with 1 channel: (N, 1, H, W)
    x = jax.random.normal(jax.random.PRNGKey(0), (2, 1, 16, 16), jnp.float32)
    kparams, folded = init_tinynet_params(seed=42, max_ks=11, layer_num=6,
                                          width=16, channels=16)

    out = tinynet_forward(x, kparams)
    jax.block_until_ready(out)

    assert out.shape == (2, 16, 16, 16), out.shape
    assert bool(jnp.all(jnp.isfinite(out)))

    # bf16 matmul inputs vs f32 reference -> loose tolerance (documented
    # precision tradeoff: activations are re-quantized to bf16 every layer).
    ref = _reference_forward(x, folded)
    assert bool(jnp.allclose(out, ref, rtol=5e-2, atol=5e-2)), (
        float(jnp.max(jnp.abs(out - ref))))

    print("KERNEL_OK")
</pallas_src>

<mosaic_0001>
module attributes {stable_mosaic.version = 11 : i64} {
  func.func @kernel(%arg0: memref<32x16xbf16, #tpu.memory_space<vmem>>, %arg1: memref<16x256xbf16, #tpu.memory_space<vmem>>, %arg2: memref<1x256xf32, #tpu.memory_space<vmem>>, %arg3: memref<256x256xbf16, #tpu.memory_space<vmem>>, %arg4: memref<1x256xf32, #tpu.memory_space<vmem>>, %arg5: memref<2816x256xbf16, #tpu.memory_space<any>>, %arg6: memref<2304x256xbf16, #tpu.memory_space<any>>, %arg7: memref<1280x256xbf16, #tpu.memory_space<any>>, %arg8: memref<768x256xbf16, #tpu.memory_space<any>>, %arg9: memref<768x256xbf16, #tpu.memory_space<any>>, %arg10: memref<768x256xbf16, #tpu.memory_space<any>>, %arg11: memref<1x256xf32, #tpu.memory_space<vmem>>, %arg12: memref<1x256xf32, #tpu.memory_space<vmem>>, %arg13: memref<1x256xf32, #tpu.memory_space<vmem>>, %arg14: memref<1x256xf32, #tpu.memory_space<vmem>>, %arg15: memref<1x256xf32, #tpu.memory_space<vmem>>, %arg16: memref<1x256xf32, #tpu.memory_space<vmem>>, %arg17: memref<32x256xf32, #tpu.memory_space<vmem>>, %arg18: memref<64x256xbf16, #tpu.memory_space<vmem>>, %arg19: memref<32x256xf32, #tpu.memory_space<vmem>>, %arg20: memref<32x2816xbf16, #tpu.memory_space<vmem>>, %arg21: memref<5632x256xbf16, #tpu.memory_space<vmem>>, %arg22: memref<2x!tpu.dma_semaphore, #tpu.memory_space<semaphore_mem>>) attributes {dimension_semantics = [], scalar_prefetch = 0 : i64, scratch_operands = 5 : i64, tpu.core_type = #tpu.core_type<tc>} {
    %c0_i32 = arith.constant 0 : i32
    %c0_i32_0 = arith.constant 0 : i32
    %c0_i32_1 = arith.constant 0 : i32
    %0 = tpu.memref_slice %arg21[%c0_i32_0, %c0_i32_1] : memref<5632x256xbf16, #tpu.memory_space<vmem>> -> memref<2816x256xbf16, #tpu.memory_space<vmem>>
    %1 = tpu.memref_slice %arg22[%c0_i32] : memref<2x!tpu.dma_semaphore, #tpu.memory_space<semaphore_mem>> -> memref<1x!tpu.dma_semaphore, #tpu.memory_space<semaphore_mem>>
    %2 = tpu.memref_squeeze %1 : memref<1x!tpu.dma_semaphore, #tpu.memory_space<semaphore_mem>> -> memref<!tpu.dma_semaphore, #tpu.memory_space<semaphore_mem>>
    tpu.enqueue_dma source(%arg5 : memref<2816x256xbf16, #tpu.memory_space<any>>) target(%0 : memref<2816x256xbf16, #tpu.memory_space<vmem>>) target_semaphore(%2 : memref<!tpu.dma_semaphore, #tpu.memory_space<semaphore_mem>>)
    %c0 = arith.constant 0 : index
    %c0_2 = arith.constant 0 : index
    %3 = vector.load %arg0[%c0, %c0_2] : memref<32x16xbf16, #tpu.memory_space<vmem>>, vector<32x16xbf16>
    %c0_3 = arith.constant 0 : index
    %c0_4 = arith.constant 0 : index
    %4 = vector.load %arg1[%c0_3, %c0_4] : memref<16x256xbf16, #tpu.memory_space<vmem>>, vector<16x256xbf16>
    %cst = arith.constant dense<0.000000e+00> : vector<32x256xf32>
    %5 = tpu.matmul %3, %4, %cst {dimension_numbers = #tpu.dot_dimension_numbers<[1], [0], [0], [1], [0, 0, 1, 1], [], []>} : vector<32x16xbf16>, vector<16x256xbf16>, vector<32x256xf32> -> vector<32x256xf32>
    %c0_5 = arith.constant 0 : index
    %c0_6 = arith.constant 0 : index
    %6 = vector.load %arg2[%c0_5, %c0_6] : memref<1x256xf32, #tpu.memory_space<vmem>>, vector<1x256xf32>
    %7 = vector.broadcast %6 : vector<1x256xf32> to vector<32x256xf32>
    %8 = arith.addf %5, %7 : vector<32x256xf32>
    %cst_7 = arith.constant 0.000000e+00 : f32
    %9 = vector.broadcast %cst_7 : f32 to vector<32x256xf32>
    %10 = arith.maximumf %8, %9 : vector<32x256xf32>
    %11 = arith.truncf %10 : vector<32x256xf32> to vector<32x256xbf16>
    %c0_8 = arith.constant 0 : index
    %c0_9 = arith.constant 0 : index
    %12 = vector.load %arg3[%c0_8, %c0_9] : memref<256x256xbf16, #tpu.memory_space<vmem>>, vector<256x256xbf16>
    %cst_10 = arith.constant dense<0.000000e+00> : vector<32x256xf32>
    %13 = tpu.matmul %11, %12, %cst_10 {dimension_numbers = #tpu.dot_dimension_numbers<[1], [0], [0], [1], [0, 0, 1, 1], [], []>} : vector<32x256xbf16>, vector<256x256xbf16>, vector<32x256xf32> -> vector<32x256xf32>
    %c0_11 = arith.constant 0 : index
    %c0_12 = arith.constant 0 : index
    %14 = vector.load %arg4[%c0_11, %c0_12] : memref<1x256xf32, #tpu.memory_space<vmem>>, vector<1x256xf32>
    %15 = vector.broadcast %14 : vector<1x256xf32> to vector<32x256xf32>
    %16 = arith.addf %13, %15 : vector<32x256xf32>
    %cst_13 = arith.constant 0.000000e+00 : f32
    %17 = vector.broadcast %cst_13 : f32 to vector<32x256xf32>
    %18 = arith.maximumf %16, %17 : vector<32x256xf32>
    %c0_14 = arith.constant 0 : index
    %c0_15 = arith.constant 0 : index
    %19 = vector.load %arg19[%c0_14, %c0_15] : memref<32x256xf32, #tpu.memory_space<vmem>>, vector<32x256xf32>
    tpu.vector_store %arg19[%c0_14, %c0_15], %18 {strides = array<i32>} : memref<32x256xf32, #tpu.memory_space<vmem>>, vector<32x256xf32>,
    %cst_16 = arith.constant 0.000000e+00 : bf16
    %20 = vector.broadcast %cst_16 : bf16 to vector<16x256xbf16>
    %c0_17 = arith.constant 0 : index
    %c0_18 = arith.constant 0 : index
    %21 = vector.load %arg18[%c0_17, %c0_18] : memref<64x256xbf16, #tpu.memory_space<vmem>>, vector<16x256xbf16>
    tpu.vector_store %arg18[%c0_17, %c0_18], %20 {strides = array<i32>} : memref<64x256xbf16, #tpu.memory_space<vmem>>, vector<16x256xbf16>,
    %cst_19 = arith.constant 0.000000e+00 : bf16
    %22 = vector.broadcast %cst_19 : bf16 to vector<16x256xbf16>
    %c48 = arith.constant 48 : index
    %c0_20 = arith.constant 0 : index
    %23 = vector.load %arg18[%c48, %c0_20] : memref<64x256xbf16, #tpu.memory_space<vmem>>, vector<16x256xbf16>
    tpu.vector_store %arg18[%c48, %c0_20], %22 {strides = array<i32>} : memref<64x256xbf16, #tpu.memory_space<vmem>>, vector<16x256xbf16>,
    %24 = arith.truncf %18 : vector<32x256xf32> to vector<32x256xbf16>
    %c16 = arith.constant 16 : index
    %c0_21 = arith.constant 0 : index
    %25 = vector.load %arg18[%c16, %c0_21] : memref<64x256xbf16, #tpu.memory_space<vmem>>, vector<32x256xbf16>
    tpu.vector_store %arg18[%c16, %c0_21], %24 {strides = array<i32>} : memref<64x256xbf16, #tpu.memory_space<vmem>>, vector<32x256xbf16>,
    %c1_i32 = arith.constant 1 : i32
    %c2816_i32 = arith.constant 2816 : i32
    %c0_i32_22 = arith.constant 0 : i32
    %26 = tpu.memref_slice %arg21[%c2816_i32, %c0_i32_22] : memref<5632x256xbf16, #tpu.memory_space<vmem>> -> memref<2304x256xbf16, #tpu.memory_space<vmem>>
    %27 = tpu.memref_slice %arg22[%c1_i32] : memref<2x!tpu.dma_semaphore, #tpu.memory_space<semaphore_mem>> -> memref<1x!tpu.dma_semaphore, #tpu.memory_space<semaphore_mem>>
    %28 = tpu.memref_squeeze %27 : memref<1x!tpu.dma_semaphore, #tpu.memory_space<semaphore_mem>> -> memref<!tpu.dma_semaphore, #tpu.memory_space<semaphore_mem>>
    tpu.enqueue_dma source(%arg6 : memref<2304x256xbf16, #tpu.memory_space<any>>) target(%26 : memref<2304x256xbf16, #tpu.memory_space<vmem>>) target_semaphore(%28 : memref<!tpu.dma_semaphore, #tpu.memory_space<semaphore_mem>>)
    %c6 = arith.constant 6 : index
    %c0_23 = arith.constant 0 : index
    %29 = vector.load %arg18[%c6, %c0_23] : memref<64x256xbf16, #tpu.memory_space<vmem>>, vector<32x256xbf16>
    %c0_24 = arith.constant 0 : index
    %c0_25 = arith.constant 0 : index
    %30 = vector.load %arg20[%c0_24, %c0_25] : memref<32x2816xbf16, #tpu.memory_space<vmem>>, vector<32x256xbf16>
    tpu.vector_store %arg20[%c0_24, %c0_25], %29 {strides = array<i32>} : memref<32x2816xbf16, #tpu.memory_space<vmem>>, vector<32x256xbf16>,
    %c8 = arith.constant 8 : index
    %c0_26 = arith.constant 0 : index
    %31 = vector.load %arg18[%c8, %c0_26] : memref<64x256xbf16, #tpu.memory_space<vmem>>, vector<32x256xbf16>
    %c0_27 = arith.constant 0 : index
    %c256 = arith.constant 256 : index
    %32 = vector.load %arg20[%c0_27, %c256] : memref<32x2816xbf16, #tpu.memory_space<vmem>>, vector<32x256xbf16>
    tpu.vector_store %arg20[%c0_27, %c256], %31 {strides = array<i32>} : memref<32x2816xbf16, #tpu.memory_space<vmem>>, vector<32x256xbf16>,
    %c10 = arith.constant 10 : index
    %c0_28 = arith.constant 0 : index
    %33 = vector.load %arg18[%c10, %c0_28] : memref<64x256xbf16, #tpu.memory_space<vmem>>, vector<32x256xbf16>
    %c0_29 = arith.constant 0 : index
    %c512 = arith.constant 512 : index
    %34 = vector.load %arg20[%c0_29, %c512] : memref<32x2816xbf16, #tpu.memory_space<vmem>>, vector<32x256xbf16>
    tpu.vector_store %arg20[%c0_29, %c512], %33 {strides = array<i32>} : memref<32x2816xbf16, #tpu.memory_space<vmem>>, vector<32x256xbf16>,
    %c12 = arith.constant 12 : index
    %c0_30 = arith.constant 0 : index
    %35 = vector.load %arg18[%c12, %c0_30] : memref<64x256xbf16, #tpu.memory_space<vmem>>, vector<32x256xbf16>
    %c0_31 = arith.constant 0 : index
    %c768 = arith.constant 768 : index
    %36 = vector.load %arg20[%c0_31, %c768] : memref<32x2816xbf16, #tpu.memory_space<vmem>>, vector<32x256xbf16>
    tpu.vector_store %arg20[%c0_31, %c768], %35 {strides = array<i32>} : memref<32x2816xbf16, #tpu.memory_space<vmem>>, vector<32x256xbf16>,
    %c14 = arith.constant 14 : index
    %c0_32 = arith.constant 0 : index
    %37 = vector.load %arg18[%c14, %c0_32] : memref<64x256xbf16, #tpu.memory_space<vmem>>, vector<32x256xbf16>
    %c0_33 = arith.constant 0 : index
    %c1024 = arith.constant 1024 : index
    %38 = vector.load %arg20[%c0_33, %c1024] : memref<32x2816xbf16, #tpu.memory_space<vmem>>, vector<32x256xbf16>
    tpu.vector_store %arg20[%c0_33, %c1024], %37 {strides = array<i32>} : memref<32x2816xbf16, #tpu.memory_space<vmem>>, vector<32x256xbf16>,
    %c16_34 = arith.constant 16 : index
    %c0_35 = arith.constant 0 : index
    %39 = vector.load %arg18[%c16_34, %c0_35] : memref<64x256xbf16, #tpu.memory_space<vmem>>, vector<32x256xbf16>
    %c0_36 = arith.constant 0 : index
    %c1280 = arith.constant 1280 : index
    %40 = vector.load %arg20[%c0_36, %c1280] : memref<32x2816xbf16, #tpu.memory_space<vmem>>, vector<32x256xbf16>
    tpu.vector_store %arg20[%c0_36, %c1280], %39 {strides = array<i32>} : memref<32x2816xbf16, #tpu.memory_space<vmem>>, vector<32x256xbf16>,
    %c18 = arith.constant 18 : index
    %c0_37 = arith.constant 0 : index
    %41 = vector.load %arg18[%c18, %c0_37] : memref<64x256xbf16, #tpu.memory_space<vmem>>, vector<32x256xbf16>
    %c0_38 = arith.constant 0 : index
    %c1536 = arith.constant 1536 : index
    %42 = vector.load %arg20[%c0_38, %c1536] : memref<32x2816xbf16, #tpu.memory_space<vmem>>, vector<32x256xbf16>
    tpu.vector_store %arg20[%c0_38, %c1536], %41 {strides = array<i32>} : memref<32x2816xbf16, #tpu.memory_space<vmem>>, vector<32x256xbf16>,
    %c20 = arith.constant 20 : index
    %c0_39 = arith.constant 0 : index
    %43 = vector.load %arg18[%c20, %c0_39] : memref<64x256xbf16, #tpu.memory_space<vmem>>, vector<32x256xbf16>
    %c0_40 = arith.constant 0 : index
    %c1792 = arith.constant 1792 : index
    %44 = vector.load %arg20[%c0_40, %c1792] : memref<32x2816xbf16, #tpu.memory_space<vmem>>, vector<32x256xbf16>
    tpu.vector_store %arg20[%c0_40, %c1792], %43 {strides = array<i32>} : memref<32x2816xbf16, #tpu.memory_space<vmem>>, vector<32x256xbf16>,
    %c22 = arith.constant 22 : index
    %c0_41 = arith.constant 0 : index
    %45 = vector.load %arg18[%c22, %c0_41] : memref<64x256xbf16, #tpu.memory_space<vmem>>, vector<32x256xbf16>
    %c0_42 = arith.constant 0 : index
    %c2048 = arith.constant 2048 : index
    %46 = vector.load %arg20[%c0_42, %c2048] : memref<32x2816xbf16, #tpu.memory_space<vmem>>, vector<32x256xbf16>
    tpu.vector_store %arg20[%c0_42, %c2048], %45 {strides = array<i32>} : memref<32x2816xbf16, #tpu.memory_space<vmem>>, vector<32x256xbf16>,
    %c24 = arith.constant 24 : index
    %c0_43 = arith.constant 0 : index
    %47 = vector.load %arg18[%c24, %c0_43] : memref<64x256xbf16, #tpu.memory_space<vmem>>, vector<32x256xbf16>
    %c0_44 = arith.constant 0 : index
    %c2304 = arith.constant 2304 : index
    %48 = vector.load %arg20[%c0_44, %c2304] : memref<32x2816xbf16, #tpu.memory_space<vmem>>, vector<32x256xbf16>
    tpu.vector_store %arg20[%c0_44, %c2304], %47 {strides = array<i32>} : memref<32x2816xbf16, #tpu.memory_space<vmem>>, vector<32x256xbf16>,
    %c26 = arith.constant 26 : index
    %c0_45 = arith.constant 0 : index
    %49 = vector.load %arg18[%c26, %c0_45] : memref<64x256xbf16, #tpu.memory_space<vmem>>, vector<32x256xbf16>
    %c0_46 = arith.constant 0 : index
    %c2560 = arith.constant 2560 : index
    %50 = vector.load %arg20[%c0_46, %c2560] : memref<32x2816xbf16, #tpu.memory_space<vmem>>, vector<32x256xbf16>
    tpu.vector_store %arg20[%c0_46, %c2560], %49 {strides = array<i32>} : memref<32x2816xbf16, #tpu.memory_space<vmem>>, vector<32x256xbf16>,
    %c0_i32_47 = arith.constant 0 : i32
    %c0_i32_48 = arith.constant 0 : i32
    %c0_i32_49 = arith.constant 0 : i32
    %51 = tpu.memref_slice %arg21[%c0_i32_48, %c0_i32_49] : memref<5632x256xbf16, #tpu.memory_space<vmem>> -> memref<2816x256xbf16, #tpu.memory_space<vmem>>
    %52 = tpu.memref_slice %arg22[%c0_i32_47] : memref<2x!tpu.dma_semaphore, #tpu.memory_space<semaphore_mem>> -> memref<1x!tpu.dma_semaphore, #tpu.memory_space<semaphore_mem>>
    %53 = tpu.memref_squeeze %52 : memref<1x!tpu.dma_semaphore, #tpu.memory_space<semaphore_mem>> -> memref<!tpu.dma_semaphore, #tpu.memory_space<semaphore_mem>>
    tpu.wait_dma2 semaphore(%53 : memref<!tpu.dma_semaphore, #tpu.memory_space<semaphore_mem>>) src(%arg5 : memref<2816x256xbf16, #tpu.memory_space<any>>) dst(%51 : memref<2816x256xbf16, #tpu.memory_space<vmem>>)
    %c0_50 = arith.constant 0 : index
    %c0_51 = arith.constant 0 : index
    %54 = vector.load %arg20[%c0_50, %c0_51] : memref<32x2816xbf16, #tpu.memory_space<vmem>>, vector<32x2816xbf16>
    %c0_52 = arith.constant 0 : index
    %c0_53 = arith.constant 0 : index
    %55 = vector.load %arg21[%c0_52, %c0_53] : memref<5632x256xbf16, #tpu.memory_space<vmem>>, vector<2816x256xbf16>
    %cst_54 = arith.constant dense<0.000000e+00> : vector<32x256xf32>
    %56 = tpu.matmul %54, %55, %cst_54 {dimension_numbers = #tpu.dot_dimension_numbers<[1], [0], [0], [1], [0, 0, 1, 1], [], []>} : vector<32x2816xbf16>, vector<2816x256xbf16>, vector<32x256xf32> -> vector<32x256xf32>
    %c0_55 = arith.constant 0 : index
    %c0_56 = arith.constant 0 : index
    %57 = vector.load %arg11[%c0_55, %c0_56] : memref<1x256xf32, #tpu.memory_space<vmem>>, vector<1x256xf32>
    %58 = vector.broadcast %57 : vector<1x256xf32> to vector<32x256xf32>
    %59 = arith.addf %56, %58 : vector<32x256xf32>
    %cst_57 = arith.constant 0.000000e+00 : f32
    %60 = vector.broadcast %cst_57 : f32 to vector<32x256xf32>
    %61 = arith.maximumf %59, %60 : vector<32x256xf32>
    %62 = arith.truncf %61 : vector<32x256xf32> to vector<32x256xbf16>
    %c16_58 = arith.constant 16 : index
    %c0_59 = arith.constant 0 : index
    %63 = vector.load %arg18[%c16_58, %c0_59] : memref<64x256xbf16, #tpu.memory_space<vmem>>, vector<32x256xbf16>
    tpu.vector_store %arg18[%c16_58, %c0_59], %62 {strides = array<i32>} : memref<64x256xbf16, #tpu.memory_space<vmem>>, vector<32x256xbf16>,
    %c0_i32_60 = arith.constant 0 : i32
    %c0_i32_61 = arith.constant 0 : i32
    %c0_i32_62 = arith.constant 0 : i32
    %64 = tpu.memref_slice %arg21[%c0_i32_61, %c0_i32_62] : memref<5632x256xbf16, #tpu.memory_space<vmem>> -> memref<1280x256xbf16, #tpu.memory_space<vmem>>
    %65 = tpu.memref_slice %arg22[%c0_i32_60] : memref<2x!tpu.dma_semaphore, #tpu.memory_space<semaphore_mem>> -> memref<1x!tpu.dma_semaphore, #tpu.memory_space<semaphore_mem>>
    %66 = tpu.memref_squeeze %65 : memref<1x!tpu.dma_semaphore, #tpu.memory_space<semaphore_mem>> -> memref<!tpu.dma_semaphore, #tpu.memory_space<semaphore_mem>>
    tpu.enqueue_dma source(%arg7 : memref<1280x256xbf16, #tpu.memory_space<any>>) target(%64 : memref<1280x256xbf16, #tpu.memory_space<vmem>>) target_semaphore(%66 : memref<!tpu.dma_semaphore, #tpu.memory_space<semaphore_mem>>)
    %c8_63 = arith.constant 8 : index
    %c0_64 = arith.constant 0 : index
    %67 = vector.load %arg18[%c8_63, %c0_64] : memref<64x256xbf16, #tpu.memory_space<vmem>>, vector<32x256xbf16>
    %c0_65 = arith.constant 0 : index
    %c0_66 = arith.constant 0 : index
    %68 = vector.load %arg20[%c0_65, %c0_66] : memref<32x2816xbf16, #tpu.memory_space<vmem>>, vector<32x256xbf16>
    tpu.vector_store %arg20[%c0_65, %c0_66], %67 {strides = array<i32>} : memref<32x2816xbf16, #tpu.memory_space<vmem>>, vector<32x256xbf16>,
    %c10_67 = arith.constant 10 : index
    %c0_68 = arith.constant 0 : index
    %69 = vector.load %arg18[%c10_67, %c0_68] : memref<64x256xbf16, #tpu.memory_space<vmem>>, vector<32x256xbf16>
    %c0_69 = arith.constant 0 : index
    %c256_70 = arith.constant 256 : index
    %70 = vector.load %arg20[%c0_69, %c256_70] : memref<32x2816xbf16, #tpu.memory_space<vmem>>, vector<32x256xbf16>
    tpu.vector_store %arg20[%c0_69, %c256_70], %69 {strides = array<i32>} : memref<32x2816xbf16, #tpu.memory_space<vmem>>, vector<32x256xbf16>,
    %c12_71 = arith.constant 12 : index
    %c0_72 = arith.constant 0 : index
    %71 = vector.load %arg18[%c12_71, %c0_72] : memref<64x256xbf16, #tpu.memory_space<vmem>>, vector<32x256xbf16>
    %c0_73 = arith.constant 0 : index
    %c512_74 = arith.constant 512 : index
    %72 = vector.load %arg20[%c0_73, %c512_74] : memref<32x2816xbf16, #tpu.memory_space<vmem>>, vector<32x256xbf16>
    tpu.vector_store %arg20[%c0_73, %c512_74], %71 {strides = array<i32>} : memref<32x2816xbf16, #tpu.memory_space<vmem>>, vector<32x256xbf16>,
    %c14_75 = arith.constant 14 : index
    %c0_76 = arith.constant 0 : index
    %73 = vector.load %arg18[%c14_75, %c0_76] : memref<64x256xbf16, #tpu.memory_space<vmem>>, vector<32x256xbf16>
    %c0_77 = arith.constant 0 : index
    %c768_78 = arith.constant 768 : index
    %74 = vector.load %arg20[%c0_77, %c768_78] : memref<32x2816xbf16, #tpu.memory_space<vmem>>, vector<32x256xbf16>
    tpu.vector_store %arg20[%c0_77, %c768_78], %73 {strides = array<i32>} : memref<32x2816xbf16, #tpu.memory_space<vmem>>, vector<32x256xbf16>,
    %c16_79 = arith.constant 16 : index
    %c0_80 = arith.constant 0 : index
    %75 = vector.load %arg18[%c16_79, %c0_80] : memref<64x256xbf16, #tpu.memory_space<vmem>>, vector<32x256xbf16>
    %c0_81 = arith.constant 0 : index
    %c1024_82 = arith.constant 1024 : index
    %76 = vector.load %arg20[%c0_81, %c1024_82] : memref<32x2816xbf16, #tpu.memory_space<vmem>>, vector<32x256xbf16>
    tpu.vector_store %arg20[%c0_81, %c1024_82], %75 {strides = array<i32>} : memref<32x2816xbf16, #tpu.memory_space<vmem>>, vector<32x256xbf16>,
    %c18_83 = arith.constant 18 : index
    %c0_84 = arith.constant 0 : index
    %77 = vector.load %arg18[%c18_83, %c0_84] : memref<64x256xbf16, #tpu.memory_space<vmem>>, vector<32x256xbf16>
    %c0_85 = arith.constant 0 : index
    %c1280_86 = arith.constant 1280 : index
    %78 = vector.load %arg20[%c0_85, %c1280_86] : memref<32x2816xbf16, #tpu.memory_space<vmem>>, vector<32x256xbf16>
    tpu.vector_store %arg20[%c0_85, %c1280_86], %77 {strides = array<i32>} : memref<32x2816xbf16, #tpu.memory_space<vmem>>, vector<32x256xbf16>,
    %c20_87 = arith.constant 20 : index
    %c0_88 = arith.constant 0 : index
    %79 = vector.load %arg18[%c20_87, %c0_88] : memref<64x256xbf16, #tpu.memory_space<vmem>>, vector<32x256xbf16>
    %c0_89 = arith.constant 0 : index
    %c1536_90 = arith.constant 1536 : index
    %80 = vector.load %arg20[%c0_89, %c1536_90] : memref<32x2816xbf16, #tpu.memory_space<vmem>>, vector<32x256xbf16>
    tpu.vector_store %arg20[%c0_89, %c1536_90], %79 {strides = array<i32>} : memref<32x2816xbf16, #tpu.memory_space<vmem>>, vector<32x256xbf16>,
    %c22_91 = arith.constant 22 : index
    %c0_92 = arith.constant 0 : index
    %81 = vector.load %arg18[%c22_91, %c0_92] : memref<64x256xbf16, #tpu.memory_space<vmem>>, vector<32x256xbf16>
    %c0_93 = arith.constant 0 : index
    %c1792_94 = arith.constant 1792 : index
    %82 = vector.load %arg20[%c0_93, %c1792_94] : memref<32x2816xbf16, #tpu.memory_space<vmem>>, vector<32x256xbf16>
    tpu.vector_store %arg20[%c0_93, %c1792_94], %81 {strides = array<i32>} : memref<32x2816xbf16, #tpu.memory_space<vmem>>, vector<32x256xbf16>,
    %c24_95 = arith.constant 24 : index
    %c0_96 = arith.constant 0 : index
    %83 = vector.load %arg18[%c24_95, %c0_96] : memref<64x256xbf16, #tpu.memory_space<vmem>>, vector<32x256xbf16>
    %c0_97 = arith.constant 0 : index
    %c2048_98 = arith.constant 2048 : index
    %84 = vector.load %arg20[%c0_97, %c2048_98] : memref<32x2816xbf16, #tpu.memory_space<vmem>>, vector<32x256xbf16>
    tpu.vector_store %arg20[%c0_97, %c2048_98], %83 {strides = array<i32>} : memref<32x2816xbf16, #tpu.memory_space<vmem>>, vector<32x256xbf16>,
    %c1_i32_99 = arith.constant 1 : i32
    %c2816_i32_100 = arith.constant 2816 : i32
    %c0_i32_101 = arith.constant 0 : i32
    %85 = tpu.memref_slice %arg21[%c2816_i32_100, %c0_i32_101] : memref<5632x256xbf16, #tpu.memory_space<vmem>> -> memref<2304x256xbf16, #tpu.memory_space<vmem>>
    %86 = tpu.memref_slice %arg22[%c1_i32_99] : memref<2x!tpu.dma_semaphore, #tpu.memory_space<semaphore_mem>> -> memref<1x!tpu.dma_semaphore, #tpu.memory_space<semaphore_mem>>
    %87 = tpu.memref_squeeze %86 : memref<1x!tpu.dma_semaphore, #tpu.memory_space<semaphore_mem>> -> memref<!tpu.dma_semaphore, #tpu.memory_space<semaphore_mem>>
    tpu.wait_dma2 semaphore(%87 : memref<!tpu.dma_semaphore, #tpu.memory_space<semaphore_mem>>) src(%arg6 : memref<2304x256xbf16, #tpu.memory_space<any>>) dst(%85 : memref<2304x256xbf16, #tpu.memory_space<vmem>>)
    %c0_102 = arith.constant 0 : index
    %c0_103 = arith.constant 0 : index
    %88 = vector.load %arg20[%c0_102, %c0_103] : memref<32x2816xbf16, #tpu.memory_space<vmem>>, vector<32x2304xbf16>
    %c2816 = arith.constant 2816 : index
    %c0_104 = arith.constant 0 : index
    %89 = vector.load %arg21[%c2816, %c0_104] : memref<5632x256xbf16, #tpu.memory_space<vmem>>, vector<2304x256xbf16>
    %cst_105 = arith.constant dense<0.000000e+00> : vector<32x256xf32>
    %90 = tpu.matmul %88, %89, %cst_105 {dimension_numbers = #tpu.dot_dimension_numbers<[1], [0], [0], [1], [0, 0, 1, 1], [], []>} : vector<32x2304xbf16>, vector<2304x256xbf16>, vector<32x256xf32> -> vector<32x256xf32>
    %c0_106 = arith.constant 0 : index
    %c0_107 = arith.constant 0 : index
    %91 = vector.load %arg12[%c0_106, %c0_107] : memref<1x256xf32, #tpu.memory_space<vmem>>, vector<1x256xf32>
    %92 = vector.broadcast %91 : vector<1x256xf32> to vector<32x256xf32>
    %93 = arith.addf %90, %92 : vector<32x256xf32>
    %cst_108 = arith.constant 0.000000e+00 : f32
    %94 = vector.broadcast %cst_108 : f32 to vector<32x256xf32>
    %95 = arith.maximumf %93, %94 : vector<32x256xf32>
    %96 = arith.truncf %95 : vector<32x256xf32> to vector<32x256xbf16>
    %c16_109 = arith.constant 16 : index
    %c0_110 = arith.constant 0 : index
    %97 = vector.load %arg18[%c16_109, %c0_110] : memref<64x256xbf16, #tpu.memory_space<vmem>>, vector<32x256xbf16>
    tpu.vector_store %arg18[%c16_109, %c0_110], %96 {strides = array<i32>} : memref<64x256xbf16, #tpu.memory_space<vmem>>, vector<32x256xbf16>,
    %c1_i32_111 = arith.constant 1 : i32
    %c2816_i32_112 = arith.constant 2816 : i32
    %c0_i32_113 = arith.constant 0 : i32
    %98 = tpu.memref_slice %arg21[%c2816_i32_112, %c0_i32_113] : memref<5632x256xbf16, #tpu.memory_space<vmem>> -> memref<768x256xbf16, #tpu.memory_space<vmem>>
    %99 = tpu.memref_slice %arg22[%c1_i32_111] : memref<2x!tpu.dma_semaphore, #tpu.memory_space<semaphore_mem>> -> memref<1x!tpu.dma_semaphore, #tpu.memory_space<semaphore_mem>>
    %100 = tpu.memref_squeeze %99 : memref<1x!tpu.dma_semaphore, #tpu.memory_space<semaphore_mem>> -> memref<!tpu.dma_semaphore, #tpu.memory_space<semaphore_mem>>
    tpu.enqueue_dma source(%arg8 : memref<768x256xbf16, #tpu.memory_space<any>>) target(%98 : memref<768x256xbf16, #tpu.memory_space<vmem>>) target_semaphore(%100 : memref<!tpu.dma_semaphore, #tpu.memory_space<semaphore_mem>>)
    %c12_114 = arith.constant 12 : index
    %c0_115 = arith.constant 0 : index
    %101 = vector.load %arg18[%c12_114, %c0_115] : memref<64x256xbf16, #tpu.memory_space<vmem>>, vector<32x256xbf16>
    %c0_116 = arith.constant 0 : index
    %c0_117 = arith.constant 0 : index
    %102 = vector.load %arg20[%c0_116, %c0_117] : memref<32x2816xbf16, #tpu.memory_space<vmem>>, vector<32x256xbf16>
    tpu.vector_store %arg20[%c0_116, %c0_117], %101 {strides = array<i32>} : memref<32x2816xbf16, #tpu.memory_space<vmem>>, vector<32x256xbf16>,
    %c14_118 = arith.constant 14 : index
    %c0_119 = arith.constant 0 : index
    %103 = vector.load %arg18[%c14_118, %c0_119] : memref<64x256xbf16, #tpu.memory_space<vmem>>, vector<32x256xbf16>
    %c0_120 = arith.constant 0 : index
    %c256_121 = arith.constant 256 : index
    %104 = vector.load %arg20[%c0_120, %c256_121] : memref<32x2816xbf16, #tpu.memory_space<vmem>>, vector<32x256xbf16>
    tpu.vector_store %arg20[%c0_120, %c256_121], %103 {strides = array<i32>} : memref<32x2816xbf16, #tpu.memory_space<vmem>>, vector<32x256xbf16>,
    %c16_122 = arith.constant 16 : index
    %c0_123 = arith.constant 0 : index
    %105 = vector.load %arg18[%c16_122, %c0_123] : memref<64x256xbf16, #tpu.memory_space<vmem>>, vector<32x256xbf16>
    %c0_124 = arith.constant 0 : index
    %c512_125 = arith.constant 512 : index
    %106 = vector.load %arg20[%c0_124, %c512_125] : memref<32x2816xbf16, #tpu.memory_space<vmem>>, vector<32x256xbf16>
    tpu.vector_store %arg20[%c0_124, %c512_125], %105 {strides = array<i32>} : memref<32x2816xbf16, #tpu.memory_space<vmem>>, vector<32x256xbf16>,
    %c18_126 = arith.constant 18 : index
    %c0_127 = arith.constant 0 : index
    %107 = vector.load %arg18[%c18_126, %c0_127] : memref<64x256xbf16, #tpu.memory_space<vmem>>, vector<32x256xbf16>
    %c0_128 = arith.constant 0 : index
    %c768_129 = arith.constant 768 : index
    %108 = vector.load %arg20[%c0_128, %c768_129] : memref<32x2816xbf16, #tpu.memory_space<vmem>>, vector<32x256xbf16>
    tpu.vector_store %arg20[%c0_128, %c768_129], %107 {strides = array<i32>} : memref<32x2816xbf16, #tpu.memory_space<vmem>>, vector<32x256xbf16>,
    %c20_130 = arith.constant 20 : index
    %c0_131 = arith.constant 0 : index
    %109 = vector.load %arg18[%c20_130, %c0_131] : memref<64x256xbf16, #tpu.memory_space<vmem>>, vector<32x256xbf16>
    %c0_132 = arith.constant 0 : index
    %c1024_133 = arith.constant 1024 : index
    %110 = vector.load %arg20[%c0_132, %c1024_133] : memref<32x2816xbf16, #tpu.memory_space<vmem>>, vector<32x256xbf16>
    tpu.vector_store %arg20[%c0_132, %c1024_133], %109 {strides = array<i32>} : memref<32x2816xbf16, #tpu.memory_space<vmem>>, vector<32x256xbf16>,
    %c0_i32_134 = arith.constant 0 : i32
    %c0_i32_135 = arith.constant 0 : i32
    %c0_i32_136 = arith.constant 0 : i32
    %111 = tpu.memref_slice %arg21[%c0_i32_135, %c0_i32_136] : memref<5632x256xbf16, #tpu.memory_space<vmem>> -> memref<1280x256xbf16, #tpu.memory_space<vmem>>
    %112 = tpu.memref_slice %arg22[%c0_i32_134] : memref<2x!tpu.dma_semaphore, #tpu.memory_space<semaphore_mem>> -> memref<1x!tpu.dma_semaphore, #tpu.memory_space<semaphore_mem>>
    %113 = tpu.memref_squeeze %112 : memref<1x!tpu.dma_semaphore, #tpu.memory_space<semaphore_mem>> -> memref<!tpu.dma_semaphore, #tpu.memory_space<semaphore_mem>>
    tpu.wait_dma2 semaphore(%113 : memref<!tpu.dma_semaphore, #tpu.memory_space<semaphore_mem>>) src(%arg7 : memref<1280x256xbf16, #tpu.memory_space<any>>) dst(%111 : memref<1280x256xbf16, #tpu.memory_space<vmem>>)
    %c0_137 = arith.constant 0 : index
    %c0_138 = arith.constant 0 : index
    %114 = vector.load %arg20[%c0_137, %c0_138] : memref<32x2816xbf16, #tpu.memory_space<vmem>>, vector<32x1280xbf16>
    %c0_139 = arith.constant 0 : index
    %c0_140 = arith.constant 0 : index
    %115 = vector.load %arg21[%c0_139, %c0_140] : memref<5632x256xbf16, #tpu.memory_space<vmem>>, vector<1280x256xbf16>
    %cst_141 = arith.constant dense<0.000000e+00> : vector<32x256xf32>
    %116 = tpu.matmul %114, %115, %cst_141 {dimension_numbers = #tpu.dot_dimension_numbers<[1], [0], [0], [1], [0, 0, 1, 1], [], []>} : vector<32x1280xbf16>, vector<1280x256xbf16>, vector<32x256xf32> -> vector<32x256xf32>
    %c0_142 = arith.constant 0 : index
    %c0_143 = arith.constant 0 : index
    %117 = vector.load %arg13[%c0_142, %c0_143] : memref<1x256xf32, #tpu.memory_space<vmem>>, vector<1x256xf32>
    %118 = vector.broadcast %117 : vector<1x256xf32> to vector<32x256xf32>
    %119 = arith.addf %116, %118 : vector<32x256xf32>
    %cst_144 = arith.constant 0.000000e+00 : f32
    %120 = vector.broadcast %cst_144 : f32 to vector<32x256xf32>
    %121 = arith.maximumf %119, %120 : vector<32x256xf32>
    %122 = arith.truncf %121 : vector<32x256xf32> to vector<32x256xbf16>
    %c16_145 = arith.constant 16 : index
    %c0_146 = arith.constant 0 : index
    %123 = vector.load %arg18[%c16_145, %c0_146] : memref<64x256xbf16, #tpu.memory_space<vmem>>, vector<32x256xbf16>
    tpu.vector_store %arg18[%c16_145, %c0_146], %122 {strides = array<i32>} : memref<64x256xbf16, #tpu.memory_space<vmem>>, vector<32x256xbf16>,
    %c0_i32_147 = arith.constant 0 : i32
    %c0_i32_148 = arith.constant 0 : i32
    %c0_i32_149 = arith.constant 0 : i32
    %124 = tpu.memref_slice %arg21[%c0_i32_148, %c0_i32_149] : memref<5632x256xbf16, #tpu.memory_space<vmem>> -> memref<768x256xbf16, #tpu.memory_space<vmem>>
    %125 = tpu.memref_slice %arg22[%c0_i32_147] : memref<2x!tpu.dma_semaphore, #tpu.memory_space<semaphore_mem>> -> memref<1x!tpu.dma_semaphore, #tpu.memory_space<semaphore_mem>>
    %126 = tpu.memref_squeeze %125 : memref<1x!tpu.dma_semaphore, #tpu.memory_space<semaphore_mem>> -> memref<!tpu.dma_semaphore, #tpu.memory_space<semaphore_mem>>
    tpu.enqueue_dma source(%arg9 : memref<768x256xbf16, #tpu.memory_space<any>>) target(%124 : memref<768x256xbf16, #tpu.memory_space<vmem>>) target_semaphore(%126 : memref<!tpu.dma_semaphore, #tpu.memory_space<semaphore_mem>>)
    %c14_150 = arith.constant 14 : index
    %c0_151 = arith.constant 0 : index
    %127 = vector.load %arg18[%c14_150, %c0_151] : memref<64x256xbf16, #tpu.memory_space<vmem>>, vector<32x256xbf16>
    %c0_152 = arith.constant 0 : index
    %c0_153 = arith.constant 0 : index
    %128 = vector.load %arg20[%c0_152, %c0_153] : memref<32x2816xbf16, #tpu.memory_space<vmem>>, vector<32x256xbf16>
    tpu.vector_store %arg20[%c0_152, %c0_153], %127 {strides = array<i32>} : memref<32x2816xbf16, #tpu.memory_space<vmem>>, vector<32x256xbf16>,
    %c16_154 = arith.constant 16 : index
    %c0_155 = arith.constant 0 : index
    %129 = vector.load %arg18[%c16_154, %c0_155] : memref<64x256xbf16, #tpu.memory_space<vmem>>, vector<32x256xbf16>
    %c0_156 = arith.constant 0 : index
    %c256_157 = arith.constant 256 : index
    %130 = vector.load %arg20[%c0_156, %c256_157] : memref<32x2816xbf16, #tpu.memory_space<vmem>>, vector<32x256xbf16>
    tpu.vector_store %arg20[%c0_156, %c256_157], %129 {strides = array<i32>} : memref<32x2816xbf16, #tpu.memory_space<vmem>>, vector<32x256xbf16>,
    %c18_158 = arith.constant 18 : index
    %c0_159 = arith.constant 0 : index
    %131 = vector.load %arg18[%c18_158, %c0_159] : memref<64x256xbf16, #tpu.memory_space<vmem>>, vector<32x256xbf16>
    %c0_160 = arith.constant 0 : index
    %c512_161 = arith.constant 512 : index
    %132 = vector.load %arg20[%c0_160, %c512_161] : memref<32x2816xbf16, #tpu.memory_space<vmem>>, vector<32x256xbf16>
    tpu.vector_store %arg20[%c0_160, %c512_161], %131 {strides = array<i32>} : memref<32x2816xbf16, #tpu.memory_space<vmem>>, vector<32x256xbf16>,
    %c1_i32_162 = arith.constant 1 : i32
    %c2816_i32_163 = arith.constant 2816 : i32
    %c0_i32_164 = arith.constant 0 : i32
    %133 = tpu.memref_slice %arg21[%c2816_i32_163, %c0_i32_164] : memref<5632x256xbf16, #tpu.memory_space<vmem>> -> memref<768x256xbf16, #tpu.memory_space<vmem>>
    %134 = tpu.memref_slice %arg22[%c1_i32_162] : memref<2x!tpu.dma_semaphore, #tpu.memory_space<semaphore_mem>> -> memref<1x!tpu.dma_semaphore, #tpu.memory_space<semaphore_mem>>
    %135 = tpu.memref_squeeze %134 : memref<1x!tpu.dma_semaphore, #tpu.memory_space<semaphore_mem>> -> memref<!tpu.dma_semaphore, #tpu.memory_space<semaphore_mem>>
    tpu.wait_dma2 semaphore(%135 : memref<!tpu.dma_semaphore, #tpu.memory_space<semaphore_mem>>) src(%arg8 : memref<768x256xbf16, #tpu.memory_space<any>>) dst(%133 : memref<768x256xbf16, #tpu.memory_space<vmem>>)
    %c0_165 = arith.constant 0 : index
    %c0_166 = arith.constant 0 : index
    %136 = vector.load %arg20[%c0_165, %c0_166] : memref<32x2816xbf16, #tpu.memory_space<vmem>>, vector<32x768xbf16>
    %c2816_167 = arith.constant 2816 : index
    %c0_168 = arith.constant 0 : index
    %137 = vector.load %arg21[%c2816_167, %c0_168] : memref<5632x256xbf16, #tpu.memory_space<vmem>>, vector<768x256xbf16>
    %cst_169 = arith.constant dense<0.000000e+00> : vector<32x256xf32>
    %138 = tpu.matmul %136, %137, %cst_169 {dimension_numbers = #tpu.dot_dimension_numbers<[1], [0], [0], [1], [0, 0, 1, 1], [], []>} : vector<32x768xbf16>, vector<768x256xbf16>, vector<32x256xf32> -> vector<32x256xf32>
    %c0_170 = arith.constant 0 : index
    %c0_171 = arith.constant 0 : index
    %139 = vector.load %arg14[%c0_170, %c0_171] : memref<1x256xf32, #tpu.memory_space<vmem>>, vector<1x256xf32>
    %140 = vector.broadcast %139 : vector<1x256xf32> to vector<32x256xf32>
    %141 = arith.addf %138, %140 : vector<32x256xf32>
    %cst_172 = arith.constant 0.000000e+00 : f32
    %142 = vector.broadcast %cst_172 : f32 to vector<32x256xf32>
    %143 = arith.maximumf %141, %142 : vector<32x256xf32>
    %144 = arith.truncf %143 : vector<32x256xf32> to vector<32x256xbf16>
    %c16_173 = arith.constant 16 : index
    %c0_174 = arith.constant 0 : index
    %145 = vector.load %arg18[%c16_173, %c0_174] : memref<64x256xbf16, #tpu.memory_space<vmem>>, vector<32x256xbf16>
    tpu.vector_store %arg18[%c16_173, %c0_174], %144 {strides = array<i32>} : memref<64x256xbf16, #tpu.memory_space<vmem>>, vector<32x256xbf16>,
    %c1_i32_175 = arith.constant 1 : i32
    %c2816_i32_176 = arith.constant 2816 : i32
    %c0_i32_177 = arith.constant 0 : i32
    %146 = tpu.memref_slice %arg21[%c2816_i32_176, %c0_i32_177] : memref<5632x256xbf16, #tpu.memory_space<vmem>> -> memref<768x256xbf16, #tpu.memory_space<vmem>>
    %147 = tpu.memref_slice %arg22[%c1_i32_175] : memref<2x!tpu.dma_semaphore, #tpu.memory_space<semaphore_mem>> -> memref<1x!tpu.dma_semaphore, #tpu.memory_space<semaphore_mem>>
    %148 = tpu.memref_squeeze %147 : memref<1x!tpu.dma_semaphore, #tpu.memory_space<semaphore_mem>> -> memref<!tpu.dma_semaphore, #tpu.memory_space<semaphore_mem>>
    tpu.enqueue_dma source(%arg10 : memref<768x256xbf16, #tpu.memory_space<any>>) target(%146 : memref<768x256xbf16, #tpu.memory_space<vmem>>) target_semaphore(%148 : memref<!tpu.dma_semaphore, #tpu.memory_space<semaphore_mem>>)
    %c14_178 = arith.constant 14 : index
    %c0_179 = arith.constant 0 : index
    %149 = vector.load %arg18[%c14_178, %c0_179] : memref<64x256xbf16, #tpu.memory_space<vmem>>, vector<32x256xbf16>
    %c0_180 = arith.constant 0 : index
    %c0_181 = arith.constant 0 : index
    %150 = vector.load %arg20[%c0_180, %c0_181] : memref<32x2816xbf16, #tpu.memory_space<vmem>>, vector<32x256xbf16>
    tpu.vector_store %arg20[%c0_180, %c0_181], %149 {strides = array<i32>} : memref<32x2816xbf16, #tpu.memory_space<vmem>>, vector<32x256xbf16>,
    %c16_182 = arith.constant 16 : index
    %c0_183 = arith.constant 0 : index
    %151 = vector.load %arg18[%c16_182, %c0_183] : memref<64x256xbf16, #tpu.memory_space<vmem>>, vector<32x256xbf16>
    %c0_184 = arith.constant 0 : index
    %c256_185 = arith.constant 256 : index
    %152 = vector.load %arg20[%c0_184, %c256_185] : memref<32x2816xbf16, #tpu.memory_space<vmem>>, vector<32x256xbf16>
    tpu.vector_store %arg20[%c0_184, %c256_185], %151 {strides = array<i32>} : memref<32x2816xbf16, #tpu.memory_space<vmem>>, vector<32x256xbf16>,
    %c18_186 = arith.constant 18 : index
    %c0_187 = arith.constant 0 : index
    %153 = vector.load %arg18[%c18_186, %c0_187] : memref<64x256xbf16, #tpu.memory_space<vmem>>, vector<32x256xbf16>
    %c0_188 = arith.constant 0 : index
    %c512_189 = arith.constant 512 : index
    %154 = vector.load %arg20[%c0_188, %c512_189] : memref<32x2816xbf16, #tpu.memory_space<vmem>>, vector<32x256xbf16>
    tpu.vector_store %arg20[%c0_188, %c512_189], %153 {strides = array<i32>} : memref<32x2816xbf16, #tpu.memory_space<vmem>>, vector<32x256xbf16>,
    %c0_i32_190 = arith.constant 0 : i32
    %c0_i32_191 = arith.constant 0 : i32
    %c0_i32_192 = arith.constant 0 : i32
    %155 = tpu.memref_slice %arg21[%c0_i32_191, %c0_i32_192] : memref<5632x256xbf16, #tpu.memory_space<vmem>> -> memref<768x256xbf16, #tpu.memory_space<vmem>>
    %156 = tpu.memref_slice %arg22[%c0_i32_190] : memref<2x!tpu.dma_semaphore, #tpu.memory_space<semaphore_mem>> -> memref<1x!tpu.dma_semaphore, #tpu.memory_space<semaphore_mem>>
    %157 = tpu.memref_squeeze %156 : memref<1x!tpu.dma_semaphore, #tpu.memory_space<semaphore_mem>> -> memref<!tpu.dma_semaphore, #tpu.memory_space<semaphore_mem>>
    tpu.wait_dma2 semaphore(%157 : memref<!tpu.dma_semaphore, #tpu.memory_space<semaphore_mem>>) src(%arg9 : memref<768x256xbf16, #tpu.memory_space<any>>) dst(%155 : memref<768x256xbf16, #tpu.memory_space<vmem>>)
    %c0_193 = arith.constant 0 : index
    %c0_194 = arith.constant 0 : index
    %158 = vector.load %arg20[%c0_193, %c0_194] : memref<32x2816xbf16, #tpu.memory_space<vmem>>, vector<32x768xbf16>
    %c0_195 = arith.constant 0 : index
    %c0_196 = arith.constant 0 : index
    %159 = vector.load %arg21[%c0_195, %c0_196] : memref<5632x256xbf16, #tpu.memory_space<vmem>>, vector<768x256xbf16>
    %cst_197 = arith.constant dense<0.000000e+00> : vector<32x256xf32>
    %160 = tpu.matmul %158, %159, %cst_197 {dimension_numbers = #tpu.dot_dimension_numbers<[1], [0], [0], [1], [0, 0, 1, 1], [], []>} : vector<32x768xbf16>, vector<768x256xbf16>, vector<32x256xf32> -> vector<32x256xf32>
    %c0_198 = arith.constant 0 : index
    %c0_199 = arith.constant 0 : index
    %161 = vector.load %arg15[%c0_198, %c0_199] : memref<1x256xf32, #tpu.memory_space<vmem>>, vector<1x256xf32>
    %162 = vector.broadcast %161 : vector<1x256xf32> to vector<32x256xf32>
    %163 = arith.addf %160, %162 : vector<32x256xf32>
    %cst_200 = arith.constant 0.000000e+00 : f32
    %164 = vector.broadcast %cst_200 : f32 to vector<32x256xf32>
    %165 = arith.maximumf %163, %164 : vector<32x256xf32>
    %166 = arith.truncf %165 : vector<32x256xf32> to vector<32x256xbf16>
    %c16_201 = arith.constant 16 : index
    %c0_202 = arith.constant 0 : index
    %167 = vector.load %arg18[%c16_201, %c0_202] : memref<64x256xbf16, #tpu.memory_space<vmem>>, vector<32x256xbf16>
    tpu.vector_store %arg18[%c16_201, %c0_202], %166 {strides = array<i32>} : memref<64x256xbf16, #tpu.memory_space<vmem>>, vector<32x256xbf16>,
    %c14_203 = arith.constant 14 : index
    %c0_204 = arith.constant 0 : index
    %168 = vector.load %arg18[%c14_203, %c0_204] : memref<64x256xbf16, #tpu.memory_space<vmem>>, vector<32x256xbf16>
    %c0_205 = arith.constant 0 : index
    %c0_206 = arith.constant 0 : index
    %169 = vector.load %arg20[%c0_205, %c0_206] : memref<32x2816xbf16, #tpu.memory_space<vmem>>, vector<32x256xbf16>
    tpu.vector_store %arg20[%c0_205, %c0_206], %168 {strides = array<i32>} : memref<32x2816xbf16, #tpu.memory_space<vmem>>, vector<32x256xbf16>,
    %c16_207 = arith.constant 16 : index
    %c0_208 = arith.constant 0 : index
    %170 = vector.load %arg18[%c16_207, %c0_208] : memref<64x256xbf16, #tpu.memory_space<vmem>>, vector<32x256xbf16>
    %c0_209 = arith.constant 0 : index
    %c256_210 = arith.constant 256 : index
    %171 = vector.load %arg20[%c0_209, %c256_210] : memref<32x2816xbf16, #tpu.memory_space<vmem>>, vector<32x256xbf16>
    tpu.vector_store %arg20[%c0_209, %c256_210], %170 {strides = array<i32>} : memref<32x2816xbf16, #tpu.memory_space<vmem>>, vector<32x256xbf16>,
    %c18_211 = arith.constant 18 : index
    %c0_212 = arith.constant 0 : index
    %172 = vector.load %arg18[%c18_211, %c0_212] : memref<64x256xbf16, #tpu.memory_space<vmem>>, vector<32x256xbf16>
    %c0_213 = arith.constant 0 : index
    %c512_214 = arith.constant 512 : index
    %173 = vector.load %arg20[%c0_213, %c512_214] : memref<32x2816xbf16, #tpu.memory_space<vmem>>, vector<32x256xbf16>
    tpu.vector_store %arg20[%c0_213, %c512_214], %172 {strides = array<i32>} : memref<32x2816xbf16, #tpu.memory_space<vmem>>, vector<32x256xbf16>,
    %c1_i32_215 = arith.constant 1 : i32
    %c2816_i32_216 = arith.constant 2816 : i32
    %c0_i32_217 = arith.constant 0 : i32
    %174 = tpu.memref_slice %arg21[%c2816_i32_216, %c0_i32_217] : memref<5632x256xbf16, #tpu.memory_space<vmem>> -> memref<768x256xbf16, #tpu.memory_space<vmem>>
    %175 = tpu.memref_slice %arg22[%c1_i32_215] : memref<2x!tpu.dma_semaphore, #tpu.memory_space<semaphore_mem>> -> memref<1x!tpu.dma_semaphore, #tpu.memory_space<semaphore_mem>>
    %176 = tpu.memref_squeeze %175 : memref<1x!tpu.dma_semaphore, #tpu.memory_space<semaphore_mem>> -> memref<!tpu.dma_semaphore, #tpu.memory_space<semaphore_mem>>
    tpu.wait_dma2 semaphore(%176 : memref<!tpu.dma_semaphore, #tpu.memory_space<semaphore_mem>>) src(%arg10 : memref<768x256xbf16, #tpu.memory_space<any>>) dst(%174 : memref<768x256xbf16, #tpu.memory_space<vmem>>)
    %c0_218 = arith.constant 0 : index
    %c0_219 = arith.constant 0 : index
    %177 = vector.load %arg20[%c0_218, %c0_219] : memref<32x2816xbf16, #tpu.memory_space<vmem>>, vector<32x768xbf16>
    %c2816_220 = arith.constant 2816 : index
    %c0_221 = arith.constant 0 : index
    %178 = vector.load %arg21[%c2816_220, %c0_221] : memref<5632x256xbf16, #tpu.memory_space<vmem>>, vector<768x256xbf16>
    %cst_222 = arith.constant dense<0.000000e+00> : vector<32x256xf32>
    %179 = tpu.matmul %177, %178, %cst_222 {dimension_numbers = #tpu.dot_dimension_numbers<[1], [0], [0], [1], [0, 0, 1, 1], [], []>} : vector<32x768xbf16>, vector<768x256xbf16>, vector<32x256xf32> -> vector<32x256xf32>
    %c0_223 = arith.constant 0 : index
    %c0_224 = arith.constant 0 : index
    %180 = vector.load %arg16[%c0_223, %c0_224] : memref<1x256xf32, #tpu.memory_space<vmem>>, vector<1x256xf32>
    %181 = vector.broadcast %180 : vector<1x256xf32> to vector<32x256xf32>
    %182 = arith.addf %179, %181 : vector<32x256xf32>
    %cst_225 = arith.constant 0.000000e+00 : f32
    %183 = vector.broadcast %cst_225 : f32 to vector<32x256xf32>
    %184 = arith.maximumf %182, %183 : vector<32x256xf32>
    %c0_226 = arith.constant 0 : index
    %c0_227 = arith.constant 0 : index
    %185 = vector.load %arg19[%c0_226, %c0_227] : memref<32x256xf32, #tpu.memory_space<vmem>>, vector<32x256xf32>
    %186 = arith.addf %184, %185 : vector<32x256xf32>
    %c0_228 = arith.constant 0 : index
    %c0_229 = arith.constant 0 : index
    %187 = vector.load %arg17[%c0_228, %c0_229] : memref<32x256xf32, #tpu.memory_space<vmem>>, vector<32x256xf32>
    tpu.vector_store %arg17[%c0_228, %c0_229], %186 {strides = array<i32>} : memref<32x256xf32, #tpu.memory_space<vmem>>, vector<32x256xf32>,
    return
  }
}

</mosaic_0001>

<llo_original>
// kernel: tinynet_forward.1
$region0: #{tinynet_forward.1}
  #allocation0 [shape = 'u32[]', space=smem, size = 0x4, offset = 0x4, fixed_abs, tag = 'smem constant byte address 0x4 - core index']
  #allocation1 [shape = 'u32[144,128]{1,0:T(1,128)}', space=vmem, size = 0x12000, scoped, tag = 'internal scratch']
  #allocation2 [shape = 'bf16[64,256]{1,0:T(16,128)(2,1)}', space=vmem, size = 0x8000, scoped, tag = 'scratch operand']
  #allocation3 [shape = 'f32[32,256]{1,0:T(8,128)}', space=vmem, size = 0x8000, scoped, tag = 'scratch operand']
  #allocation4 [shape = 'bf16[32,2816]{1,0:T(16,128)(2,1)}', space=vmem, size = 0x2c000, scoped, tag = 'scratch operand']
  #allocation5 [shape = 'bf16[5632,256]{1,0:T(16,128)(2,1)}', space=vmem, size = 0x2c0000, scoped, tag = 'scratch operand']
  #allocation6 [shape = 's32[2]{0}', space=sflag, size = 0x8, scoped, tag = 'scratch operand']
  #allocation23 [shape = 's32[]', space=sflag, size = 0x4, offset = 0, fixed_abs, tag = 'sflag constant byte address 0x0 - dummy sync flag']
  #allocation25 [shape = 's32[]', space=sflag, size = 0x4, offset = 0, fixed_abs, tag = 'sflag constant byte address 0x0 - dummy sync flag']
  #allocation27 [shape = 's32[]', space=sflag, size = 0x4, offset = 0, fixed_abs, tag = 'sflag constant byte address 0x0 - dummy sync flag']
  #allocation29 [shape = 's32[]', space=sflag, size = 0x4, offset = 0, fixed_abs, tag = 'sflag constant byte address 0x0 - dummy sync flag']
  #allocation31 [shape = 's32[]', space=sflag, size = 0x4, offset = 0, fixed_abs, tag = 'sflag constant byte address 0x0 - dummy sync flag']
  #allocation33 [shape = 's32[]', space=sflag, size = 0x4, offset = 0, fixed_abs, tag = 'sflag constant byte address 0x0 - dummy sync flag']
  %s0 = inlined_call_operand.vmem [shape: bf16[32,16], index: 0, kind: input, shape index: {}]
  %s1 = inlined_call_operand.hbm [shape: bf16[16,256], index: 1, kind: input, shape index: {}]
  %s2 = inlined_call_operand.hbm [shape: f32[1,256], index: 2, kind: input, shape index: {}]
  %s3 = inlined_call_operand.hbm [shape: bf16[256,256], index: 3, kind: input, shape index: {}]
  %s4 = inlined_call_operand.hbm [shape: f32[1,256], index: 4, kind: input, shape index: {}]
  %s5 = inlined_call_operand.hbm [shape: bf16[2816,256], index: 5, kind: input, shape index: {}]
  %s6 = inlined_call_operand.hbm [shape: bf16[2304,256], index: 6, kind: input, shape index: {}]
  %s7 = inlined_call_operand.hbm [shape: bf16[1280,256], index: 7, kind: input, shape index: {}]
  %s8 = inlined_call_operand.hbm [shape: bf16[768,256], index: 8, kind: input, shape index: {}]
  %s9 = inlined_call_operand.hbm [shape: bf16[768,256], index: 9, kind: input, shape index: {}]
  %s10 = inlined_call_operand.hbm [shape: bf16[768,256], index: 10, kind: input, shape index: {}]
  %s11 = inlined_call_operand.hbm [shape: f32[1,256], index: 11, kind: input, shape index: {}]
  %s12 = inlined_call_operand.hbm [shape: f32[1,256], index: 12, kind: input, shape index: {}]
  %s13 = inlined_call_operand.hbm [shape: f32[1,256], index: 13, kind: input, shape index: {}]
  %s14 = inlined_call_operand.hbm [shape: f32[1,256], index: 14, kind: input, shape index: {}]
  %s15 = inlined_call_operand.hbm [shape: f32[1,256], index: 15, kind: input, shape index: {}]
  %s16 = inlined_call_operand.hbm [shape: f32[1,256], index: 16, kind: input, shape index: {}]
  %s17 = inlined_call_operand.vmem [shape: f32[32,256], index: 17, kind: output, shape index: {}]
  %s18 = sld [smem:[#allocation0]]
  $region94: #{tinynet_forward.1} parent=0
    _
  %s20 = ssub.s32 1, %s18
  %s21 = scalar_select 0, %s20, %s18
  $region1: #{tinynet_forward.1} parent=0
    #allocation7 [shape = 'u8[8192]{0}', space=vmem, size = 0x2000, scoped, tag = 'input window, operand 1, single buffered']
    #allocation8 [shape = 's32[1]{0}', space=sflag, size = 0x4, scoped, tag = 'scoped memory for tinynet_forward.1']
    #allocation9 [shape = 'u8[1024]{0}', space=vmem, size = 0x400, scoped, tag = 'input window, operand 2, single buffered']
    #allocation10 [shape = 's32[1]{0}', space=sflag, size = 0x4, scoped, tag = 'scoped memory for tinynet_forward.1']
    #allocation11 [shape = 'u8[131072]{0}', space=vmem, size = 0x20000, scoped, tag = 'input window, operand 3, single buffered']
    #allocation12 [shape = 'u8[1024]{0}', space=vmem, size = 0x400, scoped, tag = 'input window, operand 4, single buffered']
    #allocation13 [shape = 's32[1]{0}', space=sflag, size = 0x4, scoped, tag = 'scoped memory for tinynet_forward.1']
    #allocation14 [shape = 'u8[1024]{0}', space=vmem, size = 0x400, scoped, tag = 'input window, operand 11, single buffered']
    #allocation15 [shape = 'u8[1024]{0}', space=vmem, size = 0x400, scoped, tag = 'input window, operand 12, single buffered']
    #allocation16 [shape = 's32[1]{0}', space=sflag, size = 0x4, scoped, tag = 'scoped memory for tinynet_forward.1']
    #allocation17 [shape = 'u8[1024]{0}', space=vmem, size = 0x400, scoped, tag = 'input window, operand 13, single buffered']
    #allocation18 [shape = 'u8[1024]{0}', space=vmem, size = 0x400, scoped, tag = 'input window, operand 14, single buffered']
    #allocation19 [shape = 's32[1]{0}', space=sflag, size = 0x4, scoped, tag = 'scoped memory for tinynet_forward.1']
    #allocation20 [shape = 'u8[1024]{0}', space=vmem, size = 0x400, scoped, tag = 'input window, operand 15, single buffered']
    #allocation21 [shape = 'u8[1024]{0}', space=vmem, size = 0x400, scoped, tag = 'input window, operand 16, single buffered']
    #allocation22 [shape = 's32[1]{0}', space=sflag, size = 0x4, scoped, tag = 'scoped memory for tinynet_forward.1']
    #allocation24 [shape = 'u32[9]{0}', space=smem, size = 0x24, scoped, tag = 'DMA stride descriptor']
    #allocation26 [shape = 'u32[9]{0}', space=smem, size = 0x24, scoped, tag = 'DMA stride descriptor']
    #allocation28 [shape = 'u32[9]{0}', space=smem, size = 0x24, scoped, tag = 'DMA stride descriptor']
    #allocation30 [shape = 'u32[9]{0}', space=smem, size = 0x24, scoped, tag = 'DMA stride descriptor']
    #allocation32 [shape = 'u32[9]{0}', space=smem, size = 0x24, scoped, tag = 'DMA stride descriptor']
    #allocation34 [shape = 'u32[9]{0}', space=smem, size = 0x24, scoped, tag = 'DMA stride descriptor']
    %22 = vsyncpa [#allocation8], 0
    %23 = vsyncpa [#allocation10], 0
    %24 = vsyncpa [#allocation13], 0
    %25 = vsyncpa [#allocation16], 0
    %26 = vsyncpa [#allocation19], 0
    %27 = vsyncpa [#allocation22], 0
    // Predicated region
    $region2: #{tinynet_forward.1} parent=1 // pred_check
      _
    $region3: #{tinynet_forward.1} parent=1 // pred_check_branch
      %29 = sbr.rel (0) target = $region5
    $region4: #{tinynet_forward.1} parent=1 // pred_region
      _
    $region5: #{tinynet_forward.1} parent=1 // pred_fallthru
      _
    // Predicated region
    $region6: #{tinynet_forward.1} parent=1 // pred_check
      _
    $region7: #{tinynet_forward.1} parent=1 // pred_check_branch
      %31 = sbr.rel (0) target = $region9
    $region8: #{tinynet_forward.1} parent=1 // pred_region
      %s33 = ssub.s32 256, 256
      %34 = vsyncadd [#allocation8], %s33
      %s35 = sshll.u32 [#allocation7], 4
      %s36 = int_to_ptr.vmem [resolvable:$true] %s35
      %41 = dma.hbm_to_vmem [thread:$0]  %s1, 256, %s36, [#allocation8], 128, 128, 8
    $region9: #{tinynet_forward.1} parent=1 // pred_fallthru
      _
    // Predicated region
    $region10: #{tinynet_forward.1} parent=1 // pred_check
      _
    $region11: #{tinynet_forward.1} parent=1 // pred_check_branch
      %43 = sbr.rel (0) target = $region13
    $region12: #{tinynet_forward.1} parent=1 // pred_region
      %s45 = ssub.s32 32, 32
      %46 = vsyncadd [#allocation10], %s45
      %s48 = sshll.u32 [#allocation9], 4
      %s49 = int_to_ptr.vmem [resolvable:$true] %s48
      %51 = dma.hbm_to_vmem [thread:$0]  %s2, 32, %s49, [#allocation10]
    $region13: #{tinynet_forward.1} parent=1 // pred_fallthru
      _
    // Predicated region
    $region14: #{tinynet_forward.1} parent=1 // pred_check
      _
    $region15: #{tinynet_forward.1} parent=1 // pred_check_branch
      %53 = sbr.rel (0) target = $region17
    $region16: #{tinynet_forward.1} parent=1 // pred_region
      %s55 = ssub.s32 4096, 4096
      %56 = vsyncadd [#allocation10], %s55
      %s57 = sshll.u32 [#allocation11], 4
      %s58 = int_to_ptr.vmem [resolvable:$true] %s57
      %63 = dma.hbm_to_vmem [thread:$0]  %s3, 4096, %s58, [#allocation10], 128, 128, 8
    $region17: #{tinynet_forward.1} parent=1 // pred_fallthru
      _
    // Predicated region
    $region18: #{tinynet_forward.1} parent=1 // pred_check
      _
    $region19: #{tinynet_forward.1} parent=1 // pred_check_branch
      %65 = sbr.rel (0) target = $region21
    $region20: #{tinynet_forward.1} parent=1 // pred_region
      %s67 = ssub.s32 32, 32
      %68 = vsyncadd [#allocation13], %s67
      %s70 = sshll.u32 [#allocation12], 4
      %s71 = int_to_ptr.vmem [resolvable:$true] %s70
      %73 = dma.hbm_to_vmem [thread:$0]  %s4, 32, %s71, [#allocation13]
    $region21: #{tinynet_forward.1} parent=1 // pred_fallthru
      _
    // Predicated region
    $region22: #{tinynet_forward.1} parent=1 // pred_check
      _
    $region23: #{tinynet_forward.1} parent=1 // pred_check_branch
      %75 = sbr.rel (0) target = $region25
    $region24: #{tinynet_forward.1} parent=1 // pred_region
      %s77 = ssub.s32 32, 32
      %78 = vsyncadd [#allocation13], %s77
      %s80 = sshll.u32 [#allocation14], 4
      %s81 = int_to_ptr.vmem [resolvable:$true] %s80
      %83 = dma.hbm_to_vmem [thread:$0]  %s11, 32, %s81, [#allocation13]
    $region25: #{tinynet_forward.1} parent=1 // pred_fallthru
      _
    // Predicated region
    $region26: #{tinynet_forward.1} parent=1 // pred_check
      _
    $region27: #{tinynet_forward.1} parent=1 // pred_check_branch
      %85 = sbr.rel (0) target = $region29
    $region28: #{tinynet_forward.1} parent=1 // pred_region
      %s87 = ssub.s32 32, 32
      %88 = vsyncadd [#allocation16], %s87
      %s90 = sshll.u32 [#allocation15], 4
      %s91 = int_to_ptr.vmem [resolvable:$true] %s90
      %93 = dma.hbm_to_vmem [thread:$0]  %s12, 32, %s91, [#allocation16]
    $region29: #{tinynet_forward.1} parent=1 // pred_fallthru
      _
    // Predicated region
    $region30: #{tinynet_forward.1} parent=1 // pred_check
      _
    $region31: #{tinynet_forward.1} parent=1 // pred_check_branch
      %95 = sbr.rel (0) target = $region33
    $region32: #{tinynet_forward.1} parent=1 // pred_region
      %s97 = ssub.s32 32, 32
      %98 = vsyncadd [#allocation16], %s97
      %s100 = sshll.u32 [#allocation17], 4
      %s101 = int_to_ptr.vmem [resolvable:$true] %s100
      %103 = dma.hbm_to_vmem [thread:$0]  %s13, 32, %s101, [#allocation16]
    $region33: #{tinynet_forward.1} parent=1 // pred_fallthru
      _
    // Predicated region
    $region34: #{tinynet_forward.1} parent=1 // pred_check
      _
    $region35: #{tinynet_forward.1} parent=1 // pred_check_branch
      %105 = sbr.rel (0) target = $region37
    $region36: #{tinynet_forward.1} parent=1 // pred_region
      %s107 = ssub.s32 32, 32
      %108 = vsyncadd [#allocation19], %s107
      %s110 = sshll.u32 [#allocation18], 4
      %s111 = int_to_ptr.vmem [resolvable:$true] %s110
      %113 = dma.hbm_to_vmem [thread:$0]  %s14, 32, %s111, [#allocation19]
    $region37: #{tinynet_forward.1} parent=1 // pred_fallthru
      _
    // Predicated region
    $region38: #{tinynet_forward.1} parent=1 // pred_check
      _
    $region39: #{tinynet_forward.1} parent=1 // pred_check_branch
      %115 = sbr.rel (0) target = $region41
    $region40: #{tinynet_forward.1} parent=1 // pred_region
      %s117 = ssub.s32 32, 32
      %118 = vsyncadd [#allocation19], %s117
      %s120 = sshll.u32 [#allocation20], 4
      %s121 = int_to_ptr.vmem [resolvable:$true] %s120
      %123 = dma.hbm_to_vmem [thread:$0]  %s15, 32, %s121, [#allocation19]
    $region41: #{tinynet_forward.1} parent=1 // pred_fallthru
      _
    // Predicated region
    $region42: #{tinynet_forward.1} parent=1 // pred_check
      _
    $region43: #{tinynet_forward.1} parent=1 // pred_check_branch
      %125 = sbr.rel (0) target = $region45
    $region44: #{tinynet_forward.1} parent=1 // pred_region
      %s127 = ssub.s32 32, 32
      %128 = vsyncadd [#allocation22], %s127
      %s130 = sshll.u32 [#allocation21], 4
      %s131 = int_to_ptr.vmem [resolvable:$true] %s130
      %133 = dma.hbm_to_vmem [thread:$0]  %s16, 32, %s131, [#allocation22]
    $region45: #{tinynet_forward.1} parent=1 // pred_fallthru
      _
    // Predicated region
    $region46: #{tinynet_forward.1} parent=1 // pred_check
      _
    $region47: #{tinynet_forward.1} parent=1 // pred_check_branch
      %135 = sbr.rel (0) target = $region49
    $region48: #{tinynet_forward.1} parent=1 // pred_region
      %136 = dma.done [#allocation8], 256
    $region49: #{tinynet_forward.1} parent=1 // pred_fallthru
      _
    // Predicated region
    $region50: #{tinynet_forward.1} parent=1 // pred_check
      _
    $region51: #{tinynet_forward.1} parent=1 // pred_check_branch
      %138 = sbr.rel (0) target = $region53
    $region52: #{tinynet_forward.1} parent=1 // pred_region
      %139 = dma.done [#allocation10], 32
    $region53: #{tinynet_forward.1} parent=1 // pred_fallthru
      _
    // Predicated region
    $region54: #{tinynet_forward.1} parent=1 // pred_check
      _
    $region55: #{tinynet_forward.1} parent=1 // pred_check_branch
      %141 = sbr.rel (0) target = $region57
    $region56: #{tinynet_forward.1} parent=1 // pred_region
      %142 = dma.done [#allocation10], 4096
    $region57: #{tinynet_forward.1} parent=1 // pred_fallthru
      _
    // Predicated region
    $region58: #{tinynet_forward.1} parent=1 // pred_check
      _
    $region59: #{tinynet_forward.1} parent=1 // pred_check_branch
      %144 = sbr.rel (0) target = $region61
    $region60: #{tinynet_forward.1} parent=1 // pred_region
      %145 = dma.done [#allocation13], 32
    $region61: #{tinynet_forward.1} parent=1 // pred_fallthru
      _
    // Predicated region
    $region62: #{tinynet_forward.1} parent=1 // pred_check
      _
    $region63: #{tinynet_forward.1} parent=1 // pred_check_branch
      %147 = sbr.rel (0) target = $region65
    $region64: #{tinynet_forward.1} parent=1 // pred_region
      %148 = dma.done [#allocation13], 32
    $region65: #{tinynet_forward.1} parent=1 // pred_fallthru
      _
    // Predicated region
    $region66: #{tinynet_forward.1} parent=1 // pred_check
      _
    $region67: #{tinynet_forward.1} parent=1 // pred_check_branch
      %150 = sbr.rel (0) target = $region69
    $region68: #{tinynet_forward.1} parent=1 // pred_region
      %151 = dma.done [#allocation16], 32
    $region69: #{tinynet_forward.1} parent=1 // pred_fallthru
      _
    // Predicated region
    $region70: #{tinynet_forward.1} parent=1 // pred_check
      _
    $region71: #{tinynet_forward.1} parent=1 // pred_check_branch
      %153 = sbr.rel (0) target = $region73
    $region72: #{tinynet_forward.1} parent=1 // pred_region
      %154 = dma.done [#allocation16], 32
    $region73: #{tinynet_forward.1} parent=1 // pred_fallthru
      _
    // Predicated region
    $region74: #{tinynet_forward.1} parent=1 // pred_check
      _
    $region75: #{tinynet_forward.1} parent=1 // pred_check_branch
      %156 = sbr.rel (0) target = $region77
    $region76: #{tinynet_forward.1} parent=1 // pred_region
      %157 = dma.done [#allocation19], 32
    $region77: #{tinynet_forward.1} parent=1 // pred_fallthru
      _
    // Predicated region
    $region78: #{tinynet_forward.1} parent=1 // pred_check
      _
    $region79: #{tinynet_forward.1} parent=1 // pred_check_branch
      %159 = sbr.rel (0) target = $region81
    $region80: #{tinynet_forward.1} parent=1 // pred_region
      %160 = dma.done [#allocation19], 32
    $region81: #{tinynet_forward.1} parent=1 // pred_fallthru
      _
    // Predicated region
    $region82: #{tinynet_forward.1} parent=1 // pred_check
      _
    $region83: #{tinynet_forward.1} parent=1 // pred_check_branch
      %162 = sbr.rel (0) target = $region85
    $region84: #{tinynet_forward.1} parent=1 // pred_region
      %163 = dma.done [#allocation22], 32
    $region85: #{tinynet_forward.1} parent=1 // pred_fallthru
      _
    %s166 = sshll.u32 1, 14
    %s167 = sxor.u32 4294967295, %s166
    %s169 = sld [smem:[#allocation0]]
    %s170 = sadd.s32 2, %s169
    %s172 = sshll.u32 7, 26
    %s173 = sxor.u32 4294967295, %s172
    %s174 = sand.u32 0, %s173
    %s175 = sshll.u32 %s170, 26
    %s176 = sor.u32 %s174, %s175
    %s177 = sshll.u32 [#allocation5], 4
    %s178 = int_to_ptr.vmem [resolvable:$true] %s177
    %181 = sst [smem:[#allocation24]] 256
    %s182 = scalar_lea.smem [#allocation24], 1
    %183 = sst [smem:[%s182]] 256
    %s184 = scalar_lea.smem [#allocation24], 2
    %185 = sst [smem:[%s184]] 2
    %s186 = scalar_lea.smem [#allocation24], 3
    %187 = sst [smem:[%s186]] 64
    %s188 = scalar_lea.smem [#allocation24], 4
    %189 = sst [smem:[%s188]] 128
    %s190 = scalar_lea.smem [#allocation24], 5
    %191 = sst [smem:[%s190]] 2
    %s192 = scalar_lea.smem [#allocation24], 6
    %193 = sst [smem:[%s192]] 128
    %s194 = scalar_lea.smem [#allocation24], 7
    %195 = sst [smem:[%s194]] 64
    %s196 = scalar_lea.smem [#allocation24], 8
    %197 = sst [smem:[%s196]] 4
    %199 = dma.general %s5, 45056, %s178, [#allocation6], [#allocation23], [#allocation24], %s176, 0
    %v200 = vld [vmem:[%s0] sm:$0xf]
    %v201 = vld [vmem:[%s0 + $0x4] sm:$0xf]
    %v202 = vld [vmem:[%s0 + $0x8] sm:$0xf]
    %v203 = vld [vmem:[%s0 + $0xc] sm:$0xf]
    %v204 = vld [vmem:[#allocation7] sm:$0xff]
    %v205 = vld [vmem:[#allocation7 + $0x8] sm:$0xff]
    %v206 = vld [vmem:[#allocation9] sm:$0x3]
    %v208 = vlaneseq
    %v209 = vshrl.u32 %v208, 7
    %v210 = vsub.s32 0, %v209
    %v211 = vrot.slane %v206, %v210
    %v212 = vlaneseq
    %v213 = vshrl.u32 %v212, 7
    %v214 = vsub.s32 1, %v213
    %v215 = vrot.slane %v206, %v214
    %v222 = vunpack.c.l.b16 %v200
    %v223 = vunpack.c.l.b16 %v201
    %v224 = vunpack.c.l.b16 %v202
    %v225 = vunpack.c.l.b16 %v203
    %v226 = vpack.c.b16 %v223, %v222
    %v227 = vpack.c.b16 %v225, %v224
    %v230 = vunpack.c.l.b16 %v204
    %v231 = vunpack.c.h.b16 %v204
    %v232 = vunpack.c.l.b16 %v205
    %v233 = vunpack.c.h.b16 %v205
    %v234 = vpack.c.b16 %v232, %v230
    %v235 = vpack.c.b16 %v233, %v231
    %vm238 = vcmask 130048
    %v240 = vsel %vm238, %v226, 0
    %v243 = vsel %vm238, %v227, 0
    %245 = vmatprep.subr.bf16.mxu0 %v235
    %246 = vmatpush1.bf16.msra.mxu0 %v234
    %247 = vmatprep.subr.bf16.mxu0 0
    %248 = vmatpush1.bf16.msra.mxu0 0
    %249 = vmatprep.subr.bf16.mxu0 0
    %250 = vmatpush1.bf16.msra.mxu0 0
    %251 = vmatprep.subr.bf16.mxu0 0
    %252 = vmatpush1.bf16.msra.mxu0 0
    %253 = vmatprep.subr.bf16.mxu0 0
    %254 = vmatpush1.bf16.msra.mxu0 0
    %255 = vmatprep.subr.bf16.mxu0 0
    %256 = vmatpush1.bf16.msra.mxu0 0
    %257 = vmatprep.subr.bf16.mxu0 0
    %258 = vmatpush1.bf16.msra.mxu0 0
    %259 = vmatprep.subr.bf16.mxu0 0
    %260 = vmatpush1.bf16.msra.mxu0 0
    %261 = vmatprep.subr.bf16.mxu0 0
    %262 = vmatpush1.bf16.msra.mxu0 0
    %263 = vmatprep.subr.bf16.mxu0 0
    %264 = vmatpush1.bf16.msra.mxu0 0
    %265 = vmatprep.subr.bf16.mxu0 0
    %266 = vmatpush1.bf16.msra.mxu0 0
    %267 = vmatprep.subr.bf16.mxu0 0
    %268 = vmatpush1.bf16.msra.mxu0 0
    %269 = vmatprep.subr.bf16.mxu0 0
    %270 = vmatpush1.bf16.msra.mxu0 0
    %271 = vmatprep.subr.bf16.mxu0 0
    %272 = vmatpush1.bf16.msra.mxu0 0
    %273 = vmatprep.subr.bf16.mxu0 0
    %274 = vmatpush1.bf16.msra.mxu0 0
    %275 = vmatprep.subr.bf16.mxu0 0
    %276 = vmatpush1.bf16.msra.mxu0 0
    %277 = vmatprep.mubr.bf16.mxu0 0
    %278 = vmatmul.mubr.bf16.gmra.mrb[0].mxu0 %v240
    %v279 = vpop.f32.mrb[0].mxu0
    %v280 = vadd.f32 %v211, %v279
    %v281 = vpop.f32.mrb[0].mxu0
    %v282 = vadd.f32 %v215, %v281
    %v283 = vpop.f32.mrb[0].mxu0
    %v284 = vadd.f32 %v211, %v283
    %v285 = vpop.f32.mrb[0].mxu0
    %v286 = vadd.f32 %v215, %v285
    %287 = vmatprep.mubr.bf16.mxu0 0
    %288 = vmatmul.mubr.bf16.gmra.mrb[0].mxu0 %v243
    %v289 = vpop.f32.mrb[0].mxu0
    %v290 = vadd.f32 %v211, %v289
    %v291 = vpop.f32.mrb[0].mxu0
    %v292 = vadd.f32 %v215, %v291
    %v293 = vpop.f32.mrb[0].mxu0
    %v294 = vadd.f32 %v211, %v293
    %v295 = vpop.f32.mrb[0].mxu0
    %v296 = vadd.f32 %v215, %v295
    %297 = vdwg.mxu0
    %v298 = vmax.f32 %v280, 0.0
    %v299 = vmax.f32 %v282, 0.0
    %v300 = vmax.f32 %v284, 0.0
    %v301 = vmax.f32 %v286, 0.0
    %v302 = vmax.f32 %v290, 0.0
    %v303 = vmax.f32 %v292, 0.0
    %v304 = vmax.f32 %v294, 0.0
    %v305 = vmax.f32 %v296, 0.0
    %v306 = vpack.c.bf16 %v300, %v298
    %v307 = vpack.c.bf16 %v301, %v299
    %v308 = vpack.c.bf16 %v304, %v302
    %v309 = vpack.c.bf16 %v305, %v303
    %v310 = vld [vmem:[#allocation11] sm:$0xff]
    %v311 = vld [vmem:[#allocation11 + $0x8] sm:$0xff]
    %v312 = vld [vmem:[#allocation11 + $0x10] sm:$0xff]
    %v313 = vld [vmem:[#allocation11 + $0x18] sm:$0xff]
    %v314 = vld [vmem:[#allocation11 + $0x20] sm:$0xff]
    %v315 = vld [vmem:[#allocation11 + $0x28] sm:$0xff]
    %v316 = vld [vmem:[#allocation11 + $0x30] sm:$0xff]
    %v317 = vld [vmem:[#allocation11 + $0x38] sm:$0xff]
    %v318 = vld [vmem:[#allocation11 + $0x40] sm:$0xff]
    %v319 = vld [vmem:[#allocation11 + $0x48] sm:$0xff]
    %v320 = vld [vmem:[#allocation11 + $0x50] sm:$0xff]
    %v321 = vld [vmem:[#allocation11 + $0x58] sm:$0xff]
    %v322 = vld [vmem:[#allocation11 + $0x60] sm:$0xff]
    %v323 = vld [vmem:[#allocation11 + $0x68] sm:$0xff]
    %v324 = vld [vmem:[#allocation11 + $0x70] sm:$0xff]
    %v325 = vld [vmem:[#allocation11 + $0x78] sm:$0xff]
    %v326 = vld [vmem:[#allocation11 + $0x80] sm:$0xff]
    %v327 = vld [vmem:[#allocation11 + $0x88] sm:$0xff]
    %v328 = vld [vmem:[#allocation11 + $0x90] sm:$0xff]
    %v329 = vld [vmem:[#allocation11 + $0x98] sm:$0xff]
    %v330 = vld [vmem:[#allocation11 + $0xa0] sm:$0xff]
    %v331 = vld [vmem:[#allocation11 + $0xa8] sm:$0xff]
    %v332 = vld [vmem:[#allocation11 + $0xb0] sm:$0xff]
    %v333 = vld [vmem:[#allocation11 + $0xb8] sm:$0xff]
    %v334 = vld [vmem:[#allocation11 + $0xc0] sm:$0xff]
    %v335 = vld [vmem:[#allocation11 + $0xc8] sm:$0xff]
    %v336 = vld [vmem:[#allocation11 + $0xd0] sm:$0xff]
    %v337 = vld [vmem:[#allocation11 + $0xd8] sm:$0xff]
    %v338 = vld [vmem:[#allocation11 + $0xe0] sm:$0xff]
    %v339 = vld [vmem:[#allocation11 + $0xe8] sm:$0xff]
    %v340 = vld [vmem:[#allocation11 + $0xf0] sm:$0xff]
    %v341 = vld [vmem:[#allocation11 + $0xf8] sm:$0xff]
    %v342 = vld [vmem:[#allocation12] sm:$0x3]
    %v344 = vlaneseq
    %v345 = vshrl.u32 %v344, 7
    %v346 = vsub.s32 0, %v345
    %v347 = vrot.slane %v342, %v346
    %v348 = vlaneseq
    %v349 = vshrl.u32 %v348, 7
    %v350 = vsub.s32 1, %v349
    %v351 = vrot.slane %v342, %v350
    %v386 = vunpack.c.l.b16 %v310
    %v387 = vunpack.c.h.b16 %v310
    %v388 = vunpack.c.l.b16 %v311
    %v389 = vunpack.c.h.b16 %v311
    %v390 = vunpack.c.l.b16 %v312
    %v391 = vunpack.c.h.b16 %v312
    %v392 = vunpack.c.l.b16 %v313
    %v393 = vunpack.c.h.b16 %v313
    %v394 = vunpack.c.l.b16 %v314
    %v395 = vunpack.c.h.b16 %v314
    %v396 = vunpack.c.l.b16 %v315
    %v397 = vunpack.c.h.b16 %v315
    %v398 = vunpack.c.l.b16 %v316
    %v399 = vunpack.c.h.b16 %v316
    %v400 = vunpack.c.l.b16 %v317
    %v401 = vunpack.c.h.b16 %v317
    %v402 = vunpack.c.l.b16 %v318
    %v403 = vunpack.c.h.b16 %v318
    %v404 = vunpack.c.l.b16 %v319
    %v405 = vunpack.c.h.b16 %v319
    %v406 = vunpack.c.l.b16 %v320
    %v407 = vunpack.c.h.b16 %v320
    %v408 = vunpack.c.l.b16 %v321
    %v409 = vunpack.c.h.b16 %v321
    %v410 = vunpack.c.l.b16 %v322
    %v411 = vunpack.c.h.b16 %v322
    %v412 = vunpack.c.l.b16 %v323
    %v413 = vunpack.c.h.b16 %v323
    %v414 = vunpack.c.l.b16 %v324
    %v415 = vunpack.c.h.b16 %v324
    %v416 = vunpack.c.l.b16 %v325
    %v417 = vunpack.c.h.b16 %v325
    %v418 = vunpack.c.l.b16 %v326
    %v419 = vunpack.c.h.b16 %v326
    %v420 = vunpack.c.l.b16 %v327
    %v421 = vunpack.c.h.b16 %v327
    %v422 = vunpack.c.l.b16 %v328
    %v423 = vunpack.c.h.b16 %v328
    %v424 = vunpack.c.l.b16 %v329
    %v425 = vunpack.c.h.b16 %v329
    %v426 = vunpack.c.l.b16 %v330
    %v427 = vunpack.c.h.b16 %v330
    %v428 = vunpack.c.l.b16 %v331
    %v429 = vunpack.c.h.b16 %v331
    %v430 = vunpack.c.l.b16 %v332
    %v431 = vunpack.c.h.b16 %v332
    %v432 = vunpack.c.l.b16 %v333
    %v433 = vunpack.c.h.b16 %v333
    %v434 = vunpack.c.l.b16 %v334
    %v435 = vunpack.c.h.b16 %v334
    %v436 = vunpack.c.l.b16 %v335
    %v437 = vunpack.c.h.b16 %v335
    %v438 = vunpack.c.l.b16 %v336
    %v439 = vunpack.c.h.b16 %v336
    %v440 = vunpack.c.l.b16 %v337
    %v441 = vunpack.c.h.b16 %v337
    %v442 = vunpack.c.l.b16 %v338
    %v443 = vunpack.c.h.b16 %v338
    %v444 = vunpack.c.l.b16 %v339
    %v445 = vunpack.c.h.b16 %v339
    %v446 = vunpack.c.l.b16 %v340
    %v447 = vunpack.c.h.b16 %v340
    %v448 = vunpack.c.l.b16 %v341
    %v449 = vunpack.c.h.b16 %v341
    %v450 = vpack.c.b16 %v388, %v386
    %v451 = vpack.c.b16 %v389, %v387
    %v452 = vpack.c.b16 %v392, %v390
    %v453 = vpack.c.b16 %v393, %v391
    %v454 = vpack.c.b16 %v396, %v394
    %v455 = vpack.c.b16 %v397, %v395
    %v456 = vpack.c.b16 %v400, %v398
    %v457 = vpack.c.b16 %v401, %v399
    %v458 = vpack.c.b16 %v404, %v402
    %v459 = vpack.c.b16 %v405, %v403
    %v460 = vpack.c.b16 %v408, %v406
    %v461 = vpack.c.b16 %v409, %v407
    %v462 = vpack.c.b16 %v412, %v410
    %v463 = vpack.c.b16 %v413, %v411
    %v464 = vpack.c.b16 %v416, %v414
    %v465 = vpack.c.b16 %v417, %v415
    %v466 = vpack.c.b16 %v420, %v418
    %v467 = vpack.c.b16 %v421, %v419
    %v468 = vpack.c.b16 %v424, %v422
    %v469 = vpack.c.b16 %v425, %v423
    %v470 = vpack.c.b16 %v428, %v426
    %v471 = vpack.c.b16 %v429, %v427
    %v472 = vpack.c.b16 %v432, %v430
    %v473 = vpack.c.b16 %v433, %v431
    %v474 = vpack.c.b16 %v436, %v434
    %v475 = vpack.c.b16 %v437, %v435
    %v476 = vpack.c.b16 %v440, %v438
    %v477 = vpack.c.b16 %v441, %v439
    %v478 = vpack.c.b16 %v444, %v442
    %v479 = vpack.c.b16 %v445, %v443
    %v480 = vpack.c.b16 %v448, %v446
    %v481 = vpack.c.b16 %v449, %v447
    %514 = vmatprep.subr.bf16.mxu0 %v451
    %515 = vmatpush1.bf16.msra.mxu0 %v450
    %516 = vmatprep.subr.bf16.mxu0 %v453
    %517 = vmatpush1.bf16.msra.mxu0 %v452
    %518 = vmatprep.subr.bf16.mxu0 %v455
    %519 = vmatpush1.bf16.msra.mxu0 %v454
    %520 = vmatprep.subr.bf16.mxu0 %v457
    %521 = vmatpush1.bf16.msra.mxu0 %v456
    %522 = vmatprep.subr.bf16.mxu0 %v459
    %523 = vmatpush1.bf16.msra.mxu0 %v458
    %524 = vmatprep.subr.bf16.mxu0 %v461
    %525 = vmatpush1.bf16.msra.mxu0 %v460
    %526 = vmatprep.subr.bf16.mxu0 %v463
    %527 = vmatpush1.bf16.msra.mxu0 %v462
    %528 = vmatprep.subr.bf16.mxu0 %v465
    %529 = vmatpush1.bf16.msra.mxu0 %v464
    %530 = vmatprep.subr.bf16.mxu0 %v467
    %531 = vmatpush1.bf16.msra.mxu0 %v466
    %532 = vmatprep.subr.bf16.mxu0 %v469
    %533 = vmatpush1.bf16.msra.mxu0 %v468
    %534 = vmatprep.subr.bf16.mxu0 %v471
    %535 = vmatpush1.bf16.msra.mxu0 %v470
    %536 = vmatprep.subr.bf16.mxu0 %v473
    %537 = vmatpush1.bf16.msra.mxu0 %v472
    %538 = vmatprep.subr.bf16.mxu0 %v475
    %539 = vmatpush1.bf16.msra.mxu0 %v474
    %540 = vmatprep.subr.bf16.mxu0 %v477
    %541 = vmatpush1.bf16.msra.mxu0 %v476
    %542 = vmatprep.subr.bf16.mxu0 %v479
    %543 = vmatpush1.bf16.msra.mxu0 %v478
    %544 = vmatprep.subr.bf16.mxu0 %v481
    %545 = vmatpush1.bf16.msra.mxu0 %v480
    %546 = vmatprep.mubr.bf16.mxu0 %v307
    %547 = vmatmul.mubr.bf16.gmra.mrb[0].mxu0 %v306
    %v548 = vpop.f32.mrb[0].mxu0
    %v549 = vadd.f32 %v347, %v548
    %v550 = vpop.f32.mrb[0].mxu0
    %v551 = vadd.f32 %v351, %v550
    %v552 = vpop.f32.mrb[0].mxu0
    %v553 = vadd.f32 %v347, %v552
    %v554 = vpop.f32.mrb[0].mxu0
    %v555 = vadd.f32 %v351, %v554
    %556 = vmatprep.mubr.bf16.mxu0 %v309
    %557 = vmatmul.mubr.bf16.gmra.mrb[0].mxu0 %v308
    %v558 = vpop.f32.mrb[0].mxu0
    %v559 = vadd.f32 %v347, %v558
    %v560 = vpop.f32.mrb[0].mxu0
    %v561 = vadd.f32 %v351, %v560
    %v562 = vpop.f32.mrb[0].mxu0
    %v563 = vadd.f32 %v347, %v562
    %v564 = vpop.f32.mrb[0].mxu0
    %v565 = vadd.f32 %v351, %v564
    %566 = vdwg.mxu0
    %v567 = vmax.f32 %v549, 0.0
    %v568 = vmax.f32 %v551, 0.0
    %v569 = vmax.f32 %v553, 0.0
    %v570 = vmax.f32 %v555, 0.0
    %v571 = vmax.f32 %v559, 0.0
    %v572 = vmax.f32 %v561, 0.0
    %v573 = vmax.f32 %v563, 0.0
    %v574 = vmax.f32 %v565, 0.0
    %575 = vst [vmem:[#allocation3] sm:$0xff] %v567
    %576 = vst [vmem:[#allocation3 + $0x8] sm:$0xff] %v568
    %577 = vst [vmem:[#allocation3 + $0x10] sm:$0xff] %v569
    %578 = vst [vmem:[#allocation3 + $0x18] sm:$0xff] %v570
    %579 = vst [vmem:[#allocation3 + $0x20] sm:$0xff] %v571
    %580 = vst [vmem:[#allocation3 + $0x28] sm:$0xff] %v572
    %581 = vst [vmem:[#allocation3 + $0x30] sm:$0xff] %v573
    %582 = vst [vmem:[#allocation3 + $0x38] sm:$0xff] %v574
    %583 = vst [vmem:[#allocation2] sm:$0xff] 0
    %584 = vst [vmem:[#allocation2 + $0x8] sm:$0xff] 0
    %585 = vst [vmem:[#allocation2 + $0x30] sm:$0xff] 0
    %586 = vst [vmem:[#allocation2 + $0x38] sm:$0xff] 0
    %v587 = vpack.c.bf16 %v569, %v567
    %v588 = vpack.c.bf16 %v570, %v568
    %v589 = vpack.c.bf16 %v573, %v571
    %v590 = vpack.c.bf16 %v574, %v572
    %591 = vst [vmem:[#allocation2 + $0x10] sm:$0xff] %v587
    %592 = vst [vmem:[#allocation2 + $0x18] sm:$0xff] %v588
    %593 = vst [vmem:[#allocation2 + $0x20] sm:$0xff] %v589
    %594 = vst [vmem:[#allocation2 + $0x28] sm:$0xff] %v590
    %s595 = scalar_lea.vmem [#allocation5], 2816
    %s596 = scalar_lea.sflag [#allocation6], 1
    %s598 = sshll.u32 1, 14
    %s599 = sxor.u32 4294967295, %s598
    %s601 = sadd.s32 2, %s169
    %s603 = sshll.u32 7, 26
    %s604 = sxor.u32 4294967295, %s603
    %s605 = sand.u32 0, %s604
    %s606 = sshll.u32 %s601, 26
    %s607 = sor.u32 %s605, %s606
    %s608 = sshll.u32 %s595, 4
    %s609 = int_to_ptr.vmem [resolvable:$true] %s608
    %612 = sst [smem:[#allocation26]] 256
    %s613 = scalar_lea.smem [#allocation26], 1
    %614 = sst [smem:[%s613]] 256
    %s615 = scalar_lea.smem [#allocation26], 2
    %616 = sst [smem:[%s615]] 2
    %s617 = scalar_lea.smem [#allocation26], 3
    %618 = sst [smem:[%s617]] 64
    %s619 = scalar_lea.smem [#allocation26], 4
    %620 = sst [smem:[%s619]] 128
    %s621 = scalar_lea.smem [#allocation26], 5
    %622 = sst [smem:[%s621]] 2
    %s623 = scalar_lea.smem [#allocation26], 6
    %624 = sst [smem:[%s623]] 128
    %s625 = scalar_lea.smem [#allocation26], 7
    %626 = sst [smem:[%s625]] 64
    %s627 = scalar_lea.smem [#allocation26], 8
    %628 = sst [smem:[%s627]] 4
    %630 = dma.general %s6, 36864, %s609, %s596, [#allocation25], [#allocation26], %s607, 0
    %v631 = vld [vmem:[#allocation2] sm:$0xf8]
    %v632 = vld [vmem:[#allocation2 + $0x8] sm:$0xf8]
    %v633 = vld [vmem:[#allocation2 + $0x10] sm:$0xff]
    %v634 = vld [vmem:[#allocation2 + $0x18] sm:$0xff]
    %v635 = vld [vmem:[#allocation2 + $0x20] sm:$0x7]
    %v636 = vld [vmem:[#allocation2 + $0x28] sm:$0x7]
    %vm643 = vcmask 1044480
    %v644 = vrot.slane %v631, 3
    %v645 = vrot.slane %v633, 3
    %v646 = vsel %vm643, %v644, %v645
    %v647 = vrot.slane %v632, 3
    %v648 = vrot.slane %v634, 3
    %v649 = vsel %vm643, %v647, %v648
    %v650 = vrot.slane %v635, 3
    %v651 = vsel %vm643, %v645, %v650
    %v652 = vrot.slane %v636, 3
    %v653 = vsel %vm643, %v648, %v652
    %658 = vst [vmem:[#allocation4] sm:$0xff] %v646
    %659 = vst [vmem:[#allocation4 + $0x8] sm:$0xff] %v649
    %660 = vst [vmem:[#allocation4 + $0xb0] sm:$0xff] %v651
    %661 = vst [vmem:[#allocation4 + $0xb8] sm:$0xff] %v653
    %v662 = vld [vmem:[#allocation2] sm:$0xf0]
    %v663 = vld [vmem:[#allocation2 + $0x8] sm:$0xf0]
    %v664 = vld [vmem:[#allocation2 + $0x10] sm:$0xff]
    %v665 = vld [vmem:[#allocation2 + $0x18] sm:$0xff]
    %v666 = vld [vmem:[#allocation2 + $0x20] sm:$0xf]
    %v667 = vld [vmem:[#allocation2 + $0x28] sm:$0xf]
    %vm674 = vcmask 1043456
    %v675 = vrot.slane %v662, 4
    %v676 = vrot.slane %v664, 4
    %v677 = vsel %vm674, %v675, %v676
    %v678 = vrot.slane %v663, 4
    %v679 = vrot.slane %v665, 4
    %v680 = vsel %vm674, %v678, %v679
    %v681 = vrot.slane %v666, 4
    %v682 = vsel %vm674, %v676, %v681
    %v683 = vrot.slane %v667, 4
    %v684 = vsel %vm674, %v679, %v683
    %689 = vst [vmem:[#allocation4 + $0x10] sm:$0xff] %v677
    %690 = vst [vmem:[#allocation4 + $0x18] sm:$0xff] %v680
    %691 = vst [vmem:[#allocation4 + $0xc0] sm:$0xff] %v682
    %692 = vst [vmem:[#allocation4 + $0xc8] sm:$0xff] %v684
    %v693 = vld [vmem:[#allocation2] sm:$0xe0]
    %v694 = vld [vmem:[#allocation2 + $0x8] sm:$0xe0]
    %v695 = vld [vmem:[#allocation2 + $0x10] sm:$0xff]
    %v696 = vld [vmem:[#allocation2 + $0x18] sm:$0xff]
    %v697 = vld [vmem:[#allocation2 + $0x20] sm:$0x1f]
    %v698 = vld [vmem:[#allocation2 + $0x28] sm:$0x1f]
    %vm705 = vcmask 1042432
    %v706 = vrot.slane %v693, 5
    %v707 = vrot.slane %v695, 5
    %v708 = vsel %vm705, %v706, %v707
    %v709 = vrot.slane %v694, 5
    %v710 = vrot.slane %v696, 5
    %v711 = vsel %vm705, %v709, %v710
    %v712 = vrot.slane %v697, 5
    %v713 = vsel %vm705, %v707, %v712
    %v714 = vrot.slane %v698, 5
    %v715 = vsel %vm705, %v710, %v714
    %720 = vst [vmem:[#allocation4 + $0x20] sm:$0xff] %v708
    %721 = vst [vmem:[#allocation4 + $0x28] sm:$0xff] %v711
    %722 = vst [vmem:[#allocation4 + $0xd0] sm:$0xff] %v713
    %723 = vst [vmem:[#allocation4 + $0xd8] sm:$0xff] %v715
    %v724 = vld [vmem:[#allocation2] sm:$0xc0]
    %v725 = vld [vmem:[#allocation2 + $0x8] sm:$0xc0]
    %v726 = vld [vmem:[#allocation2 + $0x10] sm:$0xff]
    %v727 = vld [vmem:[#allocation2 + $0x18] sm:$0xff]
    %v728 = vld [vmem:[#allocation2 + $0x20] sm:$0x3f]
    %v729 = vld [vmem:[#allocation2 + $0x28] sm:$0x3f]
    %vm736 = vcmask 1041408
    %v737 = vrot.slane %v724, 6
    %v738 = vrot.slane %v726, 6
    %v739 = vsel %vm736, %v737, %v738
    %v740 = vrot.slane %v725, 6
    %v741 = vrot.slane %v727, 6
    %v742 = vsel %vm736, %v740, %v741
    %v743 = vrot.slane %v728, 6
    %v744 = vsel %vm736, %v738, %v743
    %v745 = vrot.slane %v729, 6
    %v746 = vsel %vm736, %v741, %v745
    %751 = vst [vmem:[#allocation4 + $0x30] sm:$0xff] %v739
    %752 = vst [vmem:[#allocation4 + $0x38] sm:$0xff] %v742
    %753 = vst [vmem:[#allocation4 + $0xe0] sm:$0xff] %v744
    %754 = vst [vmem:[#allocation4 + $0xe8] sm:$0xff] %v746
    %v755 = vld [vmem:[#allocation2] sm:$0x80]
    %v756 = vld [vmem:[#allocation2 + $0x8] sm:$0x80]
    %v757 = vld [vmem:[#allocation2 + $0x10] sm:$0xff]
    %v758 = vld [vmem:[#allocation2 + $0x18] sm:$0xff]
    %v759 = vld [vmem:[#allocation2 + $0x20] sm:$0x7f]
    %v760 = vld [vmem:[#allocation2 + $0x28] sm:$0x7f]
    %vm767 = vcmask 1040384
    %v768 = vrot.slane %v755, 7
    %v769 = vrot.slane %v757, 7
    %v770 = vsel %vm767, %v768, %v769
    %v771 = vrot.slane %v756, 7
    %v772 = vrot.slane %v758, 7
    %v773 = vsel %vm767, %v771, %v772
    %v774 = vrot.slane %v759, 7
    %v775 = vsel %vm767, %v769, %v774
    %v776 = vrot.slane %v760, 7
    %v777 = vsel %vm767, %v772, %v776
    %782 = vst [vmem:[#allocation4 + $0x40] sm:$0xff] %v770
    %783 = vst [vmem:[#allocation4 + $0x48] sm:$0xff] %v773
    %784 = vst [vmem:[#allocation4 + $0xf0] sm:$0xff] %v775
    %785 = vst [vmem:[#allocation4 + $0xf8] sm:$0xff] %v777
    %v786 = vld [vmem:[#allocation2 + $0x10] sm:$0xff]
    %v787 = vld [vmem:[#allocation2 + $0x18] sm:$0xff]
    %v788 = vld [vmem:[#allocation2 + $0x20] sm:$0xff]
    %v789 = vld [vmem:[#allocation2 + $0x28] sm:$0xff]
    %790 = vst [vmem:[#allocation4 + $0x50] sm:$0xff] %v786
    %791 = vst [vmem:[#allocation4 + $0x58] sm:$0xff] %v787
    %792 = vst [vmem:[#allocation4 + $0x100] sm:$0xff] %v788
    %793 = vst [vmem:[#allocation4 + $0x108] sm:$0xff] %v789
    %v794 = vld [vmem:[#allocation2 + $0x10] sm:$0xfe]
    %v795 = vld [vmem:[#allocation2 + $0x18] sm:$0xfe]
    %v796 = vld [vmem:[#allocation2 + $0x20] sm:$0xff]
    %v797 = vld [vmem:[#allocation2 + $0x28] sm:$0xff]
    %v798 = vld [vmem:[#allocation2 + $0x30] sm:$0x1]
    %v799 = vld [vmem:[#allocation2 + $0x38] sm:$0x1]
    %vm806 = vcmask 1046528
    %v807 = vrot.slane %v794, 1
    %v808 = vrot.slane %v796, 1
    %v809 = vsel %vm806, %v807, %v808
    %v810 = vrot.slane %v795, 1
    %v811 = vrot.slane %v797, 1
    %v812 = vsel %vm806, %v810, %v811
    %v813 = vrot.slane %v798, 1
    %v814 = vsel %vm806, %v808, %v813
    %v815 = vrot.slane %v799, 1
    %v816 = vsel %vm806, %v811, %v815
    %821 = vst [vmem:[#allocation4 + $0x60] sm:$0xff] %v809
    %822 = vst [vmem:[#allocation4 + $0x68] sm:$0xff] %v812
    %823 = vst [vmem:[#allocation4 + $0x110] sm:$0xff] %v814
    %824 = vst [vmem:[#allocation4 + $0x118] sm:$0xff] %v816
    %v825 = vld [vmem:[#allocation2 + $0x10] sm:$0xfc]
    %v826 = vld [vmem:[#allocation2 + $0x18] sm:$0xfc]
    %v827 = vld [vmem:[#allocation2 + $0x20] sm:$0xff]
    %v828 = vld [vmem:[#allocation2 + $0x28] sm:$0xff]
    %v829 = vld [vmem:[#allocation2 + $0x30] sm:$0x3]
    %v830 = vld [vmem:[#allocation2 + $0x38] sm:$0x3]
    %vm837 = vcmask 1045504
    %v838 = vrot.slane %v825, 2
    %v839 = vrot.slane %v827, 2
    %v840 = vsel %vm837, %v838, %v839
    %v841 = vrot.slane %v826, 2
    %v842 = vrot.slane %v828, 2
    %v843 = vsel %vm837, %v841, %v842
    %v844 = vrot.slane %v829, 2
    %v845 = vsel %vm837, %v839, %v844
    %v846 = vrot.slane %v830, 2
    %v847 = vsel %vm837, %v842, %v846
    %852 = vst [vmem:[#allocation4 + $0x70] sm:$0xff] %v840
    %853 = vst [vmem:[#allocation4 + $0x78] sm:$0xff] %v843
    %854 = vst [vmem:[#allocation4 + $0x120] sm:$0xff] %v845
    %855 = vst [vmem:[#allocation4 + $0x128] sm:$0xff] %v847
    %v856 = vld [vmem:[#allocation2 + $0x10] sm:$0xf8]
    %v857 = vld [vmem:[#allocation2 + $0x18] sm:$0xf8]
    %v858 = vld [vmem:[#allocation2 + $0x20] sm:$0xff]
    %v859 = vld [vmem:[#allocation2 + $0x28] sm:$0xff]
    %v860 = vld [vmem:[#allocation2 + $0x30] sm:$0x7]
    %v861 = vld [vmem:[#allocation2 + $0x38] sm:$0x7]
    %v868 = vrot.slane %v856, 3
    %v869 = vrot.slane %v858, 3
    %v870 = vsel %vm643, %v868, %v869
    %v871 = vrot.slane %v857, 3
    %v872 = vrot.slane %v859, 3
    %v873 = vsel %vm643, %v871, %v872
    %v874 = vrot.slane %v860, 3
    %v875 = vsel %vm643, %v869, %v874
    %v876 = vrot.slane %v861, 3
    %v877 = vsel %vm643, %v872, %v876
    %882 = vst [vmem:[#allocation4 + $0x80] sm:$0xff] %v870
    %883 = vst [vmem:[#allocation4 + $0x88] sm:$0xff] %v873
    %884 = vst [vmem:[#allocation4 + $0x130] sm:$0xff] %v875
    %885 = vst [vmem:[#allocation4 + $0x138] sm:$0xff] %v877
    %v886 = vld [vmem:[#allocation2 + $0x10] sm:$0xf0]
    %v887 = vld [vmem:[#allocation2 + $0x18] sm:$0xf0]
    %v888 = vld [vmem:[#allocation2 + $0x20] sm:$0xff]
    %v889 = vld [vmem:[#allocation2 + $0x28] sm:$0xff]
    %v890 = vld [vmem:[#allocation2 + $0x30] sm:$0xf]
    %v891 = vld [vmem:[#allocation2 + $0x38] sm:$0xf]
    %v898 = vrot.slane %v886, 4
    %v899 = vrot.slane %v888, 4
    %v900 = vsel %vm674, %v898, %v899
    %v901 = vrot.slane %v887, 4
    %v902 = vrot.slane %v889, 4
    %v903 = vsel %vm674, %v901, %v902
    %v904 = vrot.slane %v890, 4
    %v905 = vsel %vm674, %v899, %v904
    %v906 = vrot.slane %v891, 4
    %v907 = vsel %vm674, %v902, %v906
    %912 = vst [vmem:[#allocation4 + $0x90] sm:$0xff] %v900
    %913 = vst [vmem:[#allocation4 + $0x98] sm:$0xff] %v903
    %914 = vst [vmem:[#allocation4 + $0x140] sm:$0xff] %v905
    %915 = vst [vmem:[#allocation4 + $0x148] sm:$0xff] %v907
    %v916 = vld [vmem:[#allocation2 + $0x10] sm:$0xe0]
    %v917 = vld [vmem:[#allocation2 + $0x18] sm:$0xe0]
    %v918 = vld [vmem:[#allocation2 + $0x20] sm:$0xff]
    %v919 = vld [vmem:[#allocation2 + $0x28] sm:$0xff]
    %v920 = vld [vmem:[#allocation2 + $0x30] sm:$0x1f]
    %v921 = vld [vmem:[#allocation2 + $0x38] sm:$0x1f]
    %v928 = vrot.slane %v916, 5
    %v929 = vrot.slane %v918, 5
    %v930 = vsel %vm705, %v928, %v929
    %v931 = vrot.slane %v917, 5
    %v932 = vrot.slane %v919, 5
    %v933 = vsel %vm705, %v931, %v932
    %v934 = vrot.slane %v920, 5
    %v935 = vsel %vm705, %v929, %v934
    %v936 = vrot.slane %v921, 5
    %v937 = vsel %vm705, %v932, %v936
    %942 = vst [vmem:[#allocation4 + $0xa0] sm:$0xff] %v930
    %943 = vst [vmem:[#allocation4 + $0xa8] sm:$0xff] %v933
    %944 = vst [vmem:[#allocation4 + $0x150] sm:$0xff] %v935
    %945 = vst [vmem:[#allocation4 + $0x158] sm:$0xff] %v937
    %s946 = smul.u32 4, 352
    %s947 = smul.u32 %s946, 2
    %s948 = sshll.u32 %s947, 4
    %949 = dma.done [#allocation6], %s948
    %v950 = vld [vmem:[#allocation4] sm:$0xff]
    %v951 = vld [vmem:[#allocation4 + $0x8] sm:$0xff]
    %v952 = vld [vmem:[#allocation4 + $0x10] sm:$0xff]
    %v953 = vld [vmem:[#allocation4 + $0x18] sm:$0xff]
    %v954 = vld [vmem:[#allocation4 + $0x20] sm:$0xff]
    %v955 = vld [vmem:[#allocation4 + $0x28] sm:$0xff]
    %v956 = vld [vmem:[#allocation4 + $0x30] sm:$0xff]
    %v957 = vld [vmem:[#allocation4 + $0x38] sm:$0xff]
    %v958 = vld [vmem:[#allocation4 + $0x40] sm:$0xff]
    %v959 = vld [vmem:[#allocation4 + $0x48] sm:$0xff]
    %v960 = vld [vmem:[#allocation4 + $0x50] sm:$0xff]
    %v961 = vld [vmem:[#allocation4 + $0x58] sm:$0xff]
    %v962 = vld [vmem:[#allocation4 + $0x60] sm:$0xff]
    %v963 = vld [vmem:[#allocation4 + $0x68] sm:$0xff]
    %v964 = vld [vmem:[#allocation4 + $0x70] sm:$0xff]
    %v965 = vld [vmem:[#allocation4 + $0x78] sm:$0xff]
    %v966 = vld [vmem:[#allocation4 + $0x80] sm:$0xff]
    %v967 = vld [vmem:[#allocation4 + $0x88] sm:$0xff]
    %v968 = vld [vmem:[#allocation4 + $0x90] sm:$0xff]
    %v969 = vld [vmem:[#allocation4 + $0x98] sm:$0xff]
    %v970 = vld [vmem:[#allocation4 + $0xa0] sm:$0xff]
    %v971 = vld [vmem:[#allocation4 + $0xa8] sm:$0xff]
    %v972 = vld [vmem:[#allocation4 + $0xb0] sm:$0xff]
    %v973 = vld [vmem:[#allocation4 + $0xb8] sm:$0xff]
    %v974 = vld [vmem:[#allocation4 + $0xc0] sm:$0xff]
    %v975 = vld [vmem:[#allocation4 + $0xc8] sm:$0xff]
    %v976 = vld [vmem:[#allocation4 + $0xd0] sm:$0xff]
    %v977 = vld [vmem:[#allocation4 + $0xd8] sm:$0xff]
    %v978 = vld [vmem:[#allocation4 + $0xe0] sm:$0xff]
    %v979 = vld [vmem:[#allocation4 + $0xe8] sm:$0xff]
    %v980 = vld [vmem:[#allocation4 + $0xf0] sm:$0xff]
    %v981 = vld [vmem:[#allocation4 + $0xf8] sm:$0xff]
    %v982 = vld [vmem:[#allocation4 + $0x100] sm:$0xff]
    %v983 = vld [vmem:[#allocation4 + $0x108] sm:$0xff]
    %v984 = vld [vmem:[#allocation4 + $0x110] sm:$0xff]
    %v985 = vld [vmem:[#allocation4 + $0x118] sm:$0xff]
    %v986 = vld [vmem:[#allocation4 + $0x120] sm:$0xff]
    %v987 = vld [vmem:[#allocation4 + $0x128] sm:$0xff]
    %v988 = vld [vmem:[#allocation4 + $0x130] sm:$0xff]
    %v989 = vld [vmem:[#allocation4 + $0x138] sm:$0xff]
    %v990 = vld [vmem:[#allocation4 + $0x140] sm:$0xff]
    %v991 = vld [vmem:[#allocation4 + $0x148] sm:$0xff]
    %v992 = vld [vmem:[#allocation4 + $0x150] sm:$0xff]
    %v993 = vld [vmem:[#allocation4 + $0x158] sm:$0xff]
    %v994 = vld [vmem:[#allocation5] sm:$0xff]
    %v995 = vld [vmem:[#allocation5 + $0x8] sm:$0xff]
    %v996 = vld [vmem:[#allocation5 + $0x10] sm:$0xff]
    %v997 = vld [vmem:[#allocation5 + $0x18] sm:$0xff]
    %v998 = vld [vmem:[#allocation5 + $0x20] sm:$0xff]
    %v999 = vld [vmem:[#allocation5 + $0x28] sm:$0xff]
    %v1000 = vld [vmem:[#allocation5 + $0x30] sm:$0xff]
    %v1001 = vld [vmem:[#allocation5 + $0x38] sm:$0xff]
    %v1002 = vld [vmem:[#allocation5 + $0x40] sm:$0xff]
    %v1003 = vld [vmem:[#allocation5 + $0x48] sm:$0xff]
    %v1004 = vld [vmem:[#allocation5 + $0x50] sm:$0xff]
    %v1005 = vld [vmem:[#allocation5 + $0x58] sm:$0xff]
    %v1006 = vld [vmem:[#allocation5 + $0x60] sm:$0xff]
    %v1007 = vld [vmem:[#allocation5 + $0x68] sm:$0xff]
    %v1008 = vld [vmem:[#allocation5 + $0x70] sm:$0xff]
    %v1009 = vld [vmem:[#allocation5 + $0x78] sm:$0xff]
    %v1010 = vld [vmem:[#allocation5 + $0x80] sm:$0xff]
    %v1011 = vld [vmem:[#allocation5 + $0x88] sm:$0xff]
    %v1012 = vld [vmem:[#allocation5 + $0x90] sm:$0xff]
    %v1013 = vld [vmem:[#allocation5 + $0x98] sm:$0xff]
    %v1014 = vld [vmem:[#allocation5 + $0xa0] sm:$0xff]
    %v1015 = vld [vmem:[#allocation5 + $0xa8] sm:$0xff]
    %v1016 = vld [vmem:[#allocation5 + $0xb0] sm:$0xff]
    %v1017 = vld [vmem:[#allocation5 + $0xb8] sm:$0xff]
    %v1018 = vld [vmem:[#allocation5 + $0xc0] sm:$0xff]
    %v1019 = vld [vmem:[#allocation5 + $0xc8] sm:$0xff]
    %v1020 = vld [vmem:[#allocation5 + $0xd0] sm:$0xff]
    %v1021 = vld [vmem:[#allocation5 + $0xd8] sm:$0xff]
    %v1022 = vld [vmem:[#allocation5 + $0xe0] sm:$0xff]
    %v1023 = vld [vmem:[#allocation5 + $0xe8] sm:$0xff]
    %v1024 = vld [vmem:[#allocation5 + $0xf0] sm:$0xff]
    %v1025 = vld [vmem:[#allocation5 + $0xf8] sm:$0xff]
    %v1026 = vld [vmem:[#allocation5 + $0x100] sm:$0xff]
    %v1027 = vld [vmem:[#allocation5 + $0x108] sm:$0xff]
    %v1028 = vld [vmem:[#allocation5 + $0x110] sm:$0xff]
    %v1029 = vld [vmem:[#allocation5 + $0x118] sm:$0xff]
    %v1030 = vld [vmem:[#allocation5 + $0x120] sm:$0xff]
    %v1031 = vld [vmem:[#allocation5 + $0x128] sm:$0xff]
    %v1032 = vld [vmem:[#allocation5 + $0x130] sm:$0xff]
    %v1033 = vld [vmem:[#allocation5 + $0x138] sm:$0xff]
    %v1034 = vld [vmem:[#allocation5 + $0x140] sm:$0xff]
    %v1035 = vld [vmem:[#allocation5 + $0x148] sm:$0xff]
    %v1036 = vld [vmem:[#allocation5 + $0x150] sm:$0xff]
    %v1037 = vld [vmem:[#allocation5 + $0x158] sm:$0xff]
    %v1038 = vld [vmem:[#allocation5 + $0x160] sm:$0xff]
    %v1039 = vld [vmem:[#allocation5 + $0x168] sm:$0xff]
    %v1040 = vld [vmem:[#allocation5 + $0x170] sm:$0xff]
    %v1041 = vld [vmem:[#allocation5 + $0x178] sm:$0xff]
    %v1042 = vld [vmem:[#allocation5 + $0x180] sm:$0xff]
    %v1043 = vld [vmem:[#allocation5 + $0x188] sm:$0xff]
    %v1044 = vld [vmem:[#allocation5 + $0x190] sm:$0xff]
    %v1045 = vld [vmem:[#allocation5 + $0x198] sm:$0xff]
    %v1046 = vld [vmem:[#allocation5 + $0x1a0] sm:$0xff]
    %v1047 = vld [vmem:[#allocation5 + $0x1a8] sm:$0xff]
    %v1048 = vld [vmem:[#allocation5 + $0x1b0] sm:$0xff]
    %v1049 = vld [vmem:[#allocation5 + $0x1b8] sm:$0xff]
    %v1050 = vld [vmem:[#allocation5 + $0x1c0] sm:$0xff]
    %v1051 = vld [vmem:[#allocation5 + $0x1c8] sm:$0xff]
    %v1052 = vld [vmem:[#allocation5 + $0x1d0] sm:$0xff]
    %v1053 = vld [vmem:[#allocation5 + $0x1d8] sm:$0xff]
    %v1054 = vld [vmem:[#allocation5 + $0x1e0] sm:$0xff]
    %v1055 = vld [vmem:[#allocation5 + $0x1e8] sm:$0xff]
    %v1056 = vld [vmem:[#allocation5 + $0x1f0] sm:$0xff]
    %v1057 = vld [vmem:[#allocation5 + $0x1f8] sm:$0xff]
    %v1058 = vld [vmem:[#allocation5 + $0x200] sm:$0xff]
    %v1059 = vld [vmem:[#allocation5 + $0x208] sm:$0xff]
    %v1060 = vld [vmem:[#allocation5 + $0x210] sm:$0xff]
    %v1061 = vld [vmem:[#allocation5 + $0x218] sm:$0xff]
    %v1062 = vld [vmem:[#allocation5 + $0x220] sm:$0xff]
    %v1063 = vld [vmem:[#allocation5 + $0x228] sm:$0xff]
    %v1064 = vld [vmem:[#allocation5 + $0x230] sm:$0xff]
    %v1065 = vld [vmem:[#allocation5 + $0x238] sm:$0xff]
    %v1066 = vld [vmem:[#allocation5 + $0x240] sm:$0xff]
    %v1067 = vld [vmem:[#allocation5 + $0x248] sm:$0xff]
    %v1068 = vld [vmem:[#allocation5 + $0x250] sm:$0xff]
    %v1069 = vld [vmem:[#allocation5 + $0x258] sm:$0xff]
    %v1070 = vld [vmem:[#allocation5 + $0x260] sm:$0xff]
    %v1071 = vld [vmem:[#allocation5 + $0x268] sm:$0xff]
    %v1072 = vld [vmem:[#allocation5 + $0x270] sm:$0xff]
    %v1073 = vld [vmem:[#allocation5 + $0x278] sm:$0xff]
    %v1074 = vld [vmem:[#allocation5 + $0x280] sm:$0xff]
    %v1075 = vld [vmem:[#allocation5 + $0x288] sm:$0xff]
    %v1076 = vld [vmem:[#allocation5 + $0x290] sm:$0xff]
    %v1077 = vld [vmem:[#allocation5 + $0x298] sm:$0xff]
    %v1078 = vld [vmem:[#allocation5 + $0x2a0] sm:$0xff]
    %v1079 = vld [vmem:[#allocation5 + $0x2a8] sm:$0xff]
    %v1080 = vld [vmem:[#allocation5 + $0x2b0] sm:$0xff]
    %v1081 = vld [vmem:[#allocation5 + $0x2b8] sm:$0xff]
    %v1082 = vld [vmem:[#allocation5 + $0x2c0] sm:$0xff]
    %v1083 = vld [vmem:[#allocation5 + $0x2c8] sm:$0xff]
    %v1084 = vld [vmem:[#allocation5 + $0x2d0] sm:$0xff]
    %v1085 = vld [vmem:[#allocation5 + $0x2d8] sm:$0xff]
    %v1086 = vld [vmem:[#allocation5 + $0x2e0] sm:$0xff]
    %v1087 = vld [vmem:[#allocation5 + $0x2e8] sm:$0xff]
    %v1088 = vld [vmem:[#allocation5 + $0x2f0] sm:$0xff]
    %v1089 = vld [vmem:[#allocation5 + $0x2f8] sm:$0xff]
    %v1090 = vld [vmem:[#allocation5 + $0x300] sm:$0xff]
    %v1091 = vld [vmem:[#allocation5 + $0x308] sm:$0xff]
    %v1092 = vld [vmem:[#allocation5 + $0x310] sm:$0xff]
    %v1093 = vld [vmem:[#allocation5 + $0x318] sm:$0xff]
    %v1094 = vld [vmem:[#allocation5 + $0x320] sm:$0xff]
    %v1095 = vld [vmem:[#allocation5 + $0x328] sm:$0xff]
    %v1096 = vld [vmem:[#allocation5 + $0x330] sm:$0xff]
    %v1097 = vld [vmem:[#allocation5 + $0x338] sm:$0xff]
    %v1098 = vld [vmem:[#allocation5 + $0x340] sm:$0xff]
    %v1099 = vld [vmem:[#allocation5 + $0x348] sm:$0xff]
    %v1100 = vld [vmem:[#allocation5 + $0x350] sm:$0xff]
    %v1101 = vld [vmem:[#allocation5 + $0x358] sm:$0xff]
    %v1102 = vld [vmem:[#allocation5 + $0x360] sm:$0xff]
    %v1103 = vld [vmem:[#allocation5 + $0x368] sm:$0xff]
    %v1104 = vld [vmem:[#allocation5 + $0x370] sm:$0xff]
    %v1105 = vld [vmem:[#allocation5 + $0x378] sm:$0xff]
    %v1106 = vld [vmem:[#allocation5 + $0x380] sm:$0xff]
    %v1107 = vld [vmem:[#allocation5 + $0x388] sm:$0xff]
    %v1108 = vld [vmem:[#allocation5 + $0x390] sm:$0xff]
    %v1109 = vld [vmem:[#allocation5 + $0x398] sm:$0xff]
    %v1110 = vld [vmem:[#allocation5 + $0x3a0] sm:$0xff]
    %v1111 = vld [vmem:[#allocation5 + $0x3a8] sm:$0xff]
    %v1112 = vld [vmem:[#allocation5 + $0x3b0] sm:$0xff]
    %v1113 = vld [vmem:[#allocation5 + $0x3b8] sm:$0xff]
    %v1114 = vld [vmem:[#allocation5 + $0x3c0] sm:$0xff]
    %v1115 = vld [vmem:[#allocation5 + $0x3c8] sm:$0xff]
    %v1116 = vld [vmem:[#allocation5 + $0x3d0] sm:$0xff]
    %v1117 = vld [vmem:[#allocation5 + $0x3d8] sm:$0xff]
    %v1118 = vld [vmem:[#allocation5 + $0x3e0] sm:$0xff]
    %v1119 = vld [vmem:[#allocation5 + $0x3e8] sm:$0xff]
    %v1120 = vld [vmem:[#allocation5 + $0x3f0] sm:$0xff]
    %v1121 = vld [vmem:[#allocation5 + $0x3f8] sm:$0xff]
    %v1122 = vld [vmem:[#allocation5 + $0x400] sm:$0xff]
    %v1123 = vld [vmem:[#allocation5 + $0x408] sm:$0xff]
    %v1124 = vld [vmem:[#allocation5 + $0x410] sm:$0xff]
    %v1125 = vld [vmem:[#allocation5 + $0x418] sm:$0xff]
    %v1126 = vld [vmem:[#allocation5 + $0x420] sm:$0xff]
    %v1127 = vld [vmem:[#allocation5 + $0x428] sm:$0xff]
    %v1128 = vld [vmem:[#allocation5 + $0x430] sm:$0xff]
    %v1129 = vld [vmem:[#allocation5 + $0x438] sm:$0xff]
    %v1130 = vld [vmem:[#allocation5 + $0x440] sm:$0xff]
    %v1131 = vld [vmem:[#allocation5 + $0x448] sm:$0xff]
    %v1132 = vld [vmem:[#allocation5 + $0x450] sm:$0xff]
    %v1133 = vld [vmem:[#allocation5 + $0x458] sm:$0xff]
    %v1134 = vld [vmem:[#allocation5 + $0x460] sm:$0xff]
    %v1135 = vld [vmem:[#allocation5 + $0x468] sm:$0xff]
    %v1136 = vld [vmem:[#allocation5 + $0x470] sm:$0xff]
    %v1137 = vld [vmem:[#allocation5 + $0x478] sm:$0xff]
    %v1138 = vld [vmem:[#allocation5 + $0x480] sm:$0xff]
    %v1139 = vld [vmem:[#allocation5 + $0x488] sm:$0xff]
    %v1140 = vld [vmem:[#allocation5 + $0x490] sm:$0xff]
    %v1141 = vld [vmem:[#allocation5 + $0x498] sm:$0xff]
    %v1142 = vld [vmem:[#allocation5 + $0x4a0] sm:$0xff]
    %v1143 = vld [vmem:[#allocation5 + $0x4a8] sm:$0xff]
    %v1144 = vld [vmem:[#allocation5 + $0x4b0] sm:$0xff]
    %v1145 = vld [vmem:[#allocation5 + $0x4b8] sm:$0xff]
    %v1146 = vld [vmem:[#allocation5 + $0x4c0] sm:$0xff]
    %v1147 = vld [vmem:[#allocation5 + $0x4c8] sm:$0xff]
    %v1148 = vld [vmem:[#allocation5 + $0x4d0] sm:$0xff]
    %v1149 = vld [vmem:[#allocation5 + $0x4d8] sm:$0xff]
    %v1150 = vld [vmem:[#allocation5 + $0x4e0] sm:$0xff]
    %v1151 = vld [vmem:[#allocation5 + $0x4e8] sm:$0xff]
    %v1152 = vld [vmem:[#allocation5 + $0x4f0] sm:$0xff]
    %v1153 = vld [vmem:[#allocation5 + $0x4f8] sm:$0xff]
    %v1154 = vld [vmem:[#allocation5 + $0x500] sm:$0xff]
    %v1155 = vld [vmem:[#allocation5 + $0x508] sm:$0xff]
    %v1156 = vld [vmem:[#allocation5 + $0x510] sm:$0xff]
    %v1157 = vld [vmem:[#allocation5 + $0x518] sm:$0xff]
    %v1158 = vld [vmem:[#allocation5 + $0x520] sm:$0xff]
    %v1159 = vld [vmem:[#allocation5 + $0x528] sm:$0xff]
    %v1160 = vld [vmem:[#allocation5 + $0x530] sm:$0xff]
    %v1161 = vld [vmem:[#allocation5 + $0x538] sm:$0xff]
    %v1162 = vld [vmem:[#allocation5 + $0x540] sm:$0xff]
    %v1163 = vld [vmem:[#allocation5 + $0x548] sm:$0xff]
    %v1164 = vld [vmem:[#allocation5 + $0x550] sm:$0xff]
    %v1165 = vld [vmem:[#allocation5 + $0x558] sm:$0xff]
    %v1166 = vld [vmem:[#allocation5 + $0x560] sm:$0xff]
    %v1167 = vld [vmem:[#allocation5 + $0x568] sm:$0xff]
    %v1168 = vld [vmem:[#allocation5 + $0x570] sm:$0xff]
    %v1169 = vld [vmem:[#allocation5 + $0x578] sm:$0xff]
    %v1170 = vld [vmem:[#allocation5 + $0x580] sm:$0xff]
    %v1171 = vld [vmem:[#allocation5 + $0x588] sm:$0xff]
    %v1172 = vld [vmem:[#allocation5 + $0x590] sm:$0xff]
    %v1173 = vld [vmem:[#allocation5 + $0x598] sm:$0xff]
    %v1174 = vld [vmem:[#allocation5 + $0x5a0] sm:$0xff]
    %v1175 = vld [vmem:[#allocation5 + $0x5a8] sm:$0xff]
    %v1176 = vld [vmem:[#allocation5 + $0x5b0] sm:$0xff]
    %v1177 = vld [vmem:[#allocation5 + $0x5b8] sm:$0xff]
    %v1178 = vld [vmem:[#allocation5 + $0x5c0] sm:$0xff]
    %v1179 = vld [vmem:[#allocation5 + $0x5c8] sm:$0xff]
    %v1180 = vld [vmem:[#allocation5 + $0x5d0] sm:$0xff]
    %v1181 = vld [vmem:[#allocation5 + $0x5d8] sm:$0xff]
    %v1182 = vld [vmem:[#allocation5 + $0x5e0] sm:$0xff]
    %v1183 = vld [vmem:[#allocation5 + $0x5e8] sm:$0xff]
    %v1184 = vld [vmem:[#allocation5 + $0x5f0] sm:$0xff]
    %v1185 = vld [vmem:[#allocation5 + $0x5f8] sm:$0xff]
    %v1186 = vld [vmem:[#allocation5 + $0x600] sm:$0xff]
    %v1187 = vld [vmem:[#allocation5 + $0x608] sm:$0xff]
    %v1188 = vld [vmem:[#allocation5 + $0x610] sm:$0xff]
    %v1189 = vld [vmem:[#allocation5 + $0x618] sm:$0xff]
    %v1190 = vld [vmem:[#allocation5 + $0x620] sm:$0xff]
    %v1191 = vld [vmem:[#allocation5 + $0x628] sm:$0xff]
    %v1192 = vld [vmem:[#allocation5 + $0x630] sm:$0xff]
    %v1193 = vld [vmem:[#allocation5 + $0x638] sm:$0xff]
    %v1194 = vld [vmem:[#allocation5 + $0x640] sm:$0xff]
    %v1195 = vld [vmem:[#allocation5 + $0x648] sm:$0xff]
    %v1196 = vld [vmem:[#allocation5 + $0x650] sm:$0xff]
    %v1197 = vld [vmem:[#allocation5 + $0x658] sm:$0xff]
    %v1198 = vld [vmem:[#allocation5 + $0x660] sm:$0xff]
    %v1199 = vld [vmem:[#allocation5 + $0x668] sm:$0xff]
    %v1200 = vld [vmem:[#allocation5 + $0x670] sm:$0xff]
    %v1201 = vld [vmem:[#allocation5 + $0x678] sm:$0xff]
    %v1202 = vld [vmem:[#allocation5 + $0x680] sm:$0xff]
    %v1203 = vld [vmem:[#allocation5 + $0x688] sm:$0xff]
    %v1204 = vld [vmem:[#allocation5 + $0x690] sm:$0xff]
    %v1205 = vld [vmem:[#allocation5 + $0x698] sm:$0xff]
    %v1206 = vld [vmem:[#allocation5 + $0x6a0] sm:$0xff]
    %v1207 = vld [vmem:[#allocation5 + $0x6a8] sm:$0xff]
    %v1208 = vld [vmem:[#allocation5 + $0x6b0] sm:$0xff]
    %v1209 = vld [vmem:[#allocation5 + $0x6b8] sm:$0xff]
    %v1210 = vld [vmem:[#allocation5 + $0x6c0] sm:$0xff]
    %v1211 = vld [vmem:[#allocation5 + $0x6c8] sm:$0xff]
    %v1212 = vld [vmem:[#allocation5 + $0x6d0] sm:$0xff]
    %v1213 = vld [vmem:[#allocation5 + $0x6d8] sm:$0xff]
    %v1214 = vld [vmem:[#allocation5 + $0x6e0] sm:$0xff]
    %v1215 = vld [vmem:[#allocation5 + $0x6e8] sm:$0xff]
    %v1216 = vld [vmem:[#allocation5 + $0x6f0] sm:$0xff]
    %v1217 = vld [vmem:[#allocation5 + $0x6f8] sm:$0xff]
    %v1218 = vld [vmem:[#allocation5 + $0x700] sm:$0xff]
    %v1219 = vld [vmem:[#allocation5 + $0x708] sm:$0xff]
    %v1220 = vld [vmem:[#allocation5 + $0x710] sm:$0xff]
    %v1221 = vld [vmem:[#allocation5 + $0x718] sm:$0xff]
    %v1222 = vld [vmem:[#allocation5 + $0x720] sm:$0xff]
    %v1223 = vld [vmem:[#allocation5 + $0x728] sm:$0xff]
    %v1224 = vld [vmem:[#allocation5 + $0x730] sm:$0xff]
    %v1225 = vld [vmem:[#allocation5 + $0x738] sm:$0xff]
    %v1226 = vld [vmem:[#allocation5 + $0x740] sm:$0xff]
    %v1227 = vld [vmem:[#allocation5 + $0x748] sm:$0xff]
    %v1228 = vld [vmem:[#allocation5 + $0x750] sm:$0xff]
    %v1229 = vld [vmem:[#allocation5 + $0x758] sm:$0xff]
    %v1230 = vld [vmem:[#allocation5 + $0x760] sm:$0xff]
    %v1231 = vld [vmem:[#allocation5 + $0x768] sm:$0xff]
    %v1232 = vld [vmem:[#allocation5 + $0x770] sm:$0xff]
    %v1233 = vld [vmem:[#allocation5 + $0x778] sm:$0xff]
    %v1234 = vld [vmem:[#allocation5 + $0x780] sm:$0xff]
    %v1235 = vld [vmem:[#allocation5 + $0x788] sm:$0xff]
    %v1236 = vld [vmem:[#allocation5 + $0x790] sm:$0xff]
    %v1237 = vld [vmem:[#allocation5 + $0x798] sm:$0xff]
    %v1238 = vld [vmem:[#allocation5 + $0x7a0] sm:$0xff]
    %v1239 = vld [vmem:[#allocation5 + $0x7a8] sm:$0xff]
    %v1240 = vld [vmem:[#allocation5 + $0x7b0] sm:$0xff]
    %v1241 = vld [vmem:[#allocation5 + $0x7b8] sm:$0xff]
    %v1242 = vld [vmem:[#allocation5 + $0x7c0] sm:$0xff]
    %v1243 = vld [vmem:[#allocation5 + $0x7c8] sm:$0xff]
    %v1244 = vld [vmem:[#allocation5 + $0x7d0] sm:$0xff]
    %v1245 = vld [vmem:[#allocation5 + $0x7d8] sm:$0xff]
    %v1246 = vld [vmem:[#allocation5 + $0x7e0] sm:$0xff]
    %v1247 = vld [vmem:[#allocation5 + $0x7e8] sm:$0xff]
    %v1248 = vld [vmem:[#allocation5 + $0x7f0] sm:$0xff]
    %v1249 = vld [vmem:[#allocation5 + $0x7f8] sm:$0xff]
    %v1250 = vld [vmem:[#allocation5 + $0x800] sm:$0xff]
    %v1251 = vld [vmem:[#allocation5 + $0x808] sm:$0xff]
    %v1252 = vld [vmem:[#allocation5 + $0x810] sm:$0xff]
    %v1253 = vld [vmem:[#allocation5 + $0x818] sm:$0xff]
    %v1254 = vld [vmem:[#allocation5 + $0x820] sm:$0xff]
    %v1255 = vld [vmem:[#allocation5 + $0x828] sm:$0xff]
    %v1256 = vld [vmem:[#allocation5 + $0x830] sm:$0xff]
    %v1257 = vld [vmem:[#allocation5 + $0x838] sm:$0xff]
    %v1258 = vld [vmem:[#allocation5 + $0x840] sm:$0xff]
    %v1259 = vld [vmem:[#allocation5 + $0x848] sm:$0xff]
    %v1260 = vld [vmem:[#allocation5 + $0x850] sm:$0xff]
    %v1261 = vld [vmem:[#allocation5 + $0x858] sm:$0xff]
    %v1262 = vld [vmem:[#allocation5 + $0x860] sm:$0xff]
    %v1263 = vld [vmem:[#allocation5 + $0x868] sm:$0xff]
    %v1264 = vld [vmem:[#allocation5 + $0x870] sm:$0xff]
    %v1265 = vld [vmem:[#allocation5 + $0x878] sm:$0xff]
    %v1266 = vld [vmem:[#allocation5 + $0x880] sm:$0xff]
    %v1267 = vld [vmem:[#allocation5 + $0x888] sm:$0xff]
    %v1268 = vld [vmem:[#allocation5 + $0x890] sm:$0xff]
    %v1269 = vld [vmem:[#allocation5 + $0x898] sm:$0xff]
    %v1270 = vld [vmem:[#allocation5 + $0x8a0] sm:$0xff]
    %v1271 = vld [vmem:[#allocation5 + $0x8a8] sm:$0xff]
    %v1272 = vld [vmem:[#allocation5 + $0x8b0] sm:$0xff]
    %v1273 = vld [vmem:[#allocation5 + $0x8b8] sm:$0xff]
    %v1274 = vld [vmem:[#allocation5 + $0x8c0] sm:$0xff]
    %v1275 = vld [vmem:[#allocation5 + $0x8c8] sm:$0xff]
    %v1276 = vld [vmem:[#allocation5 + $0x8d0] sm:$0xff]
    %v1277 = vld [vmem:[#allocation5 + $0x8d8] sm:$0xff]
    %v1278 = vld [vmem:[#allocation5 + $0x8e0] sm:$0xff]
    %v1279 = vld [vmem:[#allocation5 + $0x8e8] sm:$0xff]
    %v1280 = vld [vmem:[#allocation5 + $0x8f0] sm:$0xff]
    %v1281 = vld [vmem:[#allocation5 + $0x8f8] sm:$0xff]
    %v1282 = vld [vmem:[#allocation5 + $0x900] sm:$0xff]
    %v1283 = vld [vmem:[#allocation5 + $0x908] sm:$0xff]
    %v1284 = vld [vmem:[#allocation5 + $0x910] sm:$0xff]
    %v1285 = vld [vmem:[#allocation5 + $0x918] sm:$0xff]
    %v1286 = vld [vmem:[#allocation5 + $0x920] sm:$0xff]
    %v1287 = vld [vmem:[#allocation5 + $0x928] sm:$0xff]
    %v1288 = vld [vmem:[#allocation5 + $0x930] sm:$0xff]
    %v1289 = vld [vmem:[#allocation5 + $0x938] sm:$0xff]
    %v1290 = vld [vmem:[#allocation5 + $0x940] sm:$0xff]
    %v1291 = vld [vmem:[#allocation5 + $0x948] sm:$0xff]
    %v1292 = vld [vmem:[#allocation5 + $0x950] sm:$0xff]
    %v1293 = vld [vmem:[#allocation5 + $0x958] sm:$0xff]
    %v1294 = vld [vmem:[#allocation5 + $0x960] sm:$0xff]
    %v1295 = vld [vmem:[#allocation5 + $0x968] sm:$0xff]
    %v1296 = vld [vmem:[#allocation5 + $0x970] sm:$0xff]
    %v1297 = vld [vmem:[#allocation5 + $0x978] sm:$0xff]
    %v1298 = vld [vmem:[#allocation5 + $0x980] sm:$0xff]
    %v1299 = vld [vmem:[#allocation5 + $0x988] sm:$0xff]
    %v1300 = vld [vmem:[#allocation5 + $0x990] sm:$0xff]
    %v1301 = vld [vmem:[#allocation5 + $0x998] sm:$0xff]
    %v1302 = vld [vmem:[#allocation5 + $0x9a0] sm:$0xff]
    %v1303 = vld [vmem:[#allocation5 + $0x9a8] sm:$0xff]
    %v1304 = vld [vmem:[#allocation5 + $0x9b0] sm:$0xff]
    %v1305 = vld [vmem:[#allocation5 + $0x9b8] sm:$0xff]
    %v1306 = vld [vmem:[#allocation5 + $0x9c0] sm:$0xff]
    %v1307 = vld [vmem:[#allocation5 + $0x9c8] sm:$0xff]
    %v1308 = vld [vmem:[#allocation5 + $0x9d0] sm:$0xff]
    %v1309 = vld [vmem:[#allocation5 + $0x9d8] sm:$0xff]
    %v1310 = vld [vmem:[#allocation5 + $0x9e0] sm:$0xff]
    %v1311 = vld [vmem:[#allocation5 + $0x9e8] sm:$0xff]
    %v1312 = vld [vmem:[#allocation5 + $0x9f0] sm:$0xff]
    %v1313 = vld [vmem:[#allocation5 + $0x9f8] sm:$0xff]
    %v1314 = vld [vmem:[#allocation5 + $0xa00] sm:$0xff]
    %v1315 = vld [vmem:[#allocation5 + $0xa08] sm:$0xff]
    %v1316 = vld [vmem:[#allocation5 + $0xa10] sm:$0xff]
    %v1317 = vld [vmem:[#allocation5 + $0xa18] sm:$0xff]
    %v1318 = vld [vmem:[#allocation5 + $0xa20] sm:$0xff]
    %v1319 = vld [vmem:[#allocation5 + $0xa28] sm:$0xff]
    %v1320 = vld [vmem:[#allocation5 + $0xa30] sm:$0xff]
    %v1321 = vld [vmem:[#allocation5 + $0xa38] sm:$0xff]
    %v1322 = vld [vmem:[#allocation5 + $0xa40] sm:$0xff]
    %v1323 = vld [vmem:[#allocation5 + $0xa48] sm:$0xff]
    %v1324 = vld [vmem:[#allocation5 + $0xa50] sm:$0xff]
    %v1325 = vld [vmem:[#allocation5 + $0xa58] sm:$0xff]
    %v1326 = vld [vmem:[#allocation5 + $0xa60] sm:$0xff]
    %v1327 = vld [vmem:[#allocation5 + $0xa68] sm:$0xff]
    %v1328 = vld [vmem:[#allocation5 + $0xa70] sm:$0xff]
    %v1329 = vld [vmem:[#allocation5 + $0xa78] sm:$0xff]
    %v1330 = vld [vmem:[#allocation5 + $0xa80] sm:$0xff]
    %v1331 = vld [vmem:[#allocation5 + $0xa88] sm:$0xff]
    %v1332 = vld [vmem:[#allocation5 + $0xa90] sm:$0xff]
    %v1333 = vld [vmem:[#allocation5 + $0xa98] sm:$0xff]
    %v1334 = vld [vmem:[#allocation5 + $0xaa0] sm:$0xff]
    %v1335 = vld [vmem:[#allocation5 + $0xaa8] sm:$0xff]
    %v1336 = vld [vmem:[#allocation5 + $0xab0] sm:$0xff]
    %v1337 = vld [vmem:[#allocation5 + $0xab8] sm:$0xff]
    %v1338 = vld [vmem:[#allocation5 + $0xac0] sm:$0xff]
    %v1339 = vld [vmem:[#allocation5 + $0xac8] sm:$0xff]
    %v1340 = vld [vmem:[#allocation5 + $0xad0] sm:$0xff]
    %v1341 = vld [vmem:[#allocation5 + $0xad8] sm:$0xff]
    %v1342 = vld [vmem:[#allocation5 + $0xae0] sm:$0xff]
    %v1343 = vld [vmem:[#allocation5 + $0xae8] sm:$0xff]
    %v1344 = vld [vmem:[#allocation5 + $0xaf0] sm:$0xff]
    %v1345 = vld [vmem:[#allocation5 + $0xaf8] sm:$0xff]
    %v1346 = vld [vmem:[#allocation14] sm:$0x3]
    %v1348 = vlaneseq
    %v1349 = vshrl.u32 %v1348, 7
    %v1350 = vsub.s32 0, %v1349
    %v1351 = vrot.slane %v1346, %v1350
    %v1352 = vlaneseq
    %v1353 = vshrl.u32 %v1352, 7
    %v1354 = vsub.s32 1, %v1353
    %v1355 = vrot.slane %v1346, %v1354
    %1358 = vmatprep.subr.bf16.mxu0 %v995
    %1359 = vmatpush1.bf16.msra.mxu0 %v994
    %1360 = vmatprep.subr.bf16.mxu0 %v997
    %1361 = vmatpush1.bf16.msra.mxu0 %v996
    %1362 = vmatprep.subr.bf16.mxu0 %v999
    %1363 = vmatpush1.bf16.msra.mxu0 %v998
    %1364 = vmatprep.subr.bf16.mxu0 %v1001
    %1365 = vmatpush1.bf16.msra.mxu0 %v1000
    %1366 = vmatprep.subr.bf16.mxu0 %v1003
    %1367 = vmatpush1.bf16.msra.mxu0 %v1002
    %1368 = vmatprep.subr.bf16.mxu0 %v1005
    %1369 = vmatpush1.bf16.msra.mxu0 %v1004
    %1370 = vmatprep.subr.bf16.mxu0 %v1007
    %1371 = vmatpush1.bf16.msra.mxu0 %v1006
    %1372 = vmatprep.subr.bf16.mxu0 %v1009
    %1373 = vmatpush1.bf16.msra.mxu0 %v1008
    %1374 = vmatprep.subr.bf16.mxu0 %v1011
    %1375 = vmatpush1.bf16.msra.mxu0 %v1010
    %1376 = vmatprep.subr.bf16.mxu0 %v1013
    %1377 = vmatpush1.bf16.msra.mxu0 %v1012
    %1378 = vmatprep.subr.bf16.mxu0 %v1015
    %1379 = vmatpush1.bf16.msra.mxu0 %v1014
    %1380 = vmatprep.subr.bf16.mxu0 %v1017
    %1381 = vmatpush1.bf16.msra.mxu0 %v1016
    %1382 = vmatprep.subr.bf16.mxu0 %v1019
    %1383 = vmatpush1.bf16.msra.mxu0 %v1018
    %1384 = vmatprep.subr.bf16.mxu0 %v1021
    %1385 = vmatpush1.bf16.msra.mxu0 %v1020
    %1386 = vmatprep.subr.bf16.mxu0 %v1023
    %1387 = vmatpush1.bf16.msra.mxu0 %v1022
    %1388 = vmatprep.subr.bf16.mxu0 %v1025
    %1389 = vmatpush1.bf16.msra.mxu0 %v1024
    %1390 = vmatprep.mubr.bf16.mxu0 %v951
    %1391 = vmatmul.mubr.bf16.gmra.mrb[0].mxu0 %v950
    %v1392 = vpop.f32.mrb[0].mxu0
    %v1393 = vadd.f32 %v1351, %v1392
    %v1394 = vpop.f32.mrb[0].mxu0
    %v1395 = vadd.f32 %v1355, %v1394
    %v1396 = vpop.f32.mrb[0].mxu0
    %v1397 = vadd.f32 %v1351, %v1396
    %v1398 = vpop.f32.mrb[0].mxu0
    %v1399 = vadd.f32 %v1355, %v1398
    %1400 = vmatprep.mubr.bf16.mxu0 %v973
    %1401 = vmatmul.mubr.bf16.gmra.mrb[0].mxu0 %v972
    %v1402 = vpop.f32.mrb[0].mxu0
    %v1403 = vadd.f32 %v1351, %v1402
    %v1404 = vpop.f32.mrb[0].mxu0
    %v1405 = vadd.f32 %v1355, %v1404
    %v1406 = vpop.f32.mrb[0].mxu0
    %v1407 = vadd.f32 %v1351, %v1406
    %v1408 = vpop.f32.mrb[0].mxu0
    %v1409 = vadd.f32 %v1355, %v1408
    %1410 = vdwg.mxu0
    %1411 = vmatprep.subr.bf16.mxu0 %v1027
    %1412 = vmatpush1.bf16.msra.mxu0 %v1026
    %1413 = vmatprep.subr.bf16.mxu0 %v1029
    %1414 = vmatpush1.bf16.msra.mxu0 %v1028
    %1415 = vmatprep.subr.bf16.mxu0 %v1031
    %1416 = vmatpush1.bf16.msra.mxu0 %v1030
    %1417 = vmatprep.subr.bf16.mxu0 %v1033
    %1418 = vmatpush1.bf16.msra.mxu0 %v1032
    %1419 = vmatprep.subr.bf16.mxu0 %v1035
    %1420 = vmatpush1.bf16.msra.mxu0 %v1034
    %1421 = vmatprep.subr.bf16.mxu0 %v1037
    %1422 = vmatpush1.bf16.msra.mxu0 %v1036
    %1423 = vmatprep.subr.bf16.mxu0 %v1039
    %1424 = vmatpush1.bf16.msra.mxu0 %v1038
    %1425 = vmatprep.subr.bf16.mxu0 %v1041
    %1426 = vmatpush1.bf16.msra.mxu0 %v1040
    %1427 = vmatprep.subr.bf16.mxu0 %v1043
    %1428 = vmatpush1.bf16.msra.mxu0 %v1042
    %1429 = vmatprep.subr.bf16.mxu0 %v1045
    %1430 = vmatpush1.bf16.msra.mxu0 %v1044
    %1431 = vmatprep.subr.bf16.mxu0 %v1047
    %1432 = vmatpush1.bf16.msra.mxu0 %v1046
    %1433 = vmatprep.subr.bf16.mxu0 %v1049
    %1434 = vmatpush1.bf16.msra.mxu0 %v1048
    %1435 = vmatprep.subr.bf16.mxu0 %v1051
    %1436 = vmatpush1.bf16.msra.mxu0 %v1050
    %1437 = vmatprep.subr.bf16.mxu0 %v1053
    %1438 = vmatpush1.bf16.msra.mxu0 %v1052
    %1439 = vmatprep.subr.bf16.mxu0 %v1055
    %1440 = vmatpush1.bf16.msra.mxu0 %v1054
    %1441 = vmatprep.subr.bf16.mxu0 %v1057
    %1442 = vmatpush1.bf16.msra.mxu0 %v1056
    %1443 = vmatprep.mubr.bf16.mxu0 %v953
    %1444 = vmatmul.mubr.bf16.gmra.mrb[0].mxu0 %v952
    %v1445 = vpop.f32.mrb[0].mxu0
    %v1446 = vadd.f32 %v1393, %v1445
    %v1447 = vpop.f32.mrb[0].mxu0
    %v1448 = vadd.f32 %v1395, %v1447
    %v1449 = vpop.f32.mrb[0].mxu0
    %v1450 = vadd.f32 %v1397, %v1449
    %v1451 = vpop.f32.mrb[0].mxu0
    %v1452 = vadd.f32 %v1399, %v1451
    %1453 = vmatprep.mubr.bf16.mxu0 %v975
    %1454 = vmatmul.mubr.bf16.gmra.mrb[0].mxu0 %v974
    %v1455 = vpop.f32.mrb[0].mxu0
    %v1456 = vadd.f32 %v1403, %v1455
    %v1457 = vpop.f32.mrb[0].mxu0
    %v1458 = vadd.f32 %v1405, %v1457
    %v1459 = vpop.f32.mrb[0].mxu0
    %v1460 = vadd.f32 %v1407, %v1459
    %v1461 = vpop.f32.mrb[0].mxu0
    %v1462 = vadd.f32 %v1409, %v1461
    %1463 = vdwg.mxu0
    %1464 = vmatprep.subr.bf16.mxu0 %v1059
    %1465 = vmatpush1.bf16.msra.mxu0 %v1058
    %1466 = vmatprep.subr.bf16.mxu0 %v1061
    %1467 = vmatpush1.bf16.msra.mxu0 %v1060
    %1468 = vmatprep.subr.bf16.mxu0 %v1063
    %1469 = vmatpush1.bf16.msra.mxu0 %v1062
    %1470 = vmatprep.subr.bf16.mxu0 %v1065
    %1471 = vmatpush1.bf16.msra.mxu0 %v1064
    %1472 = vmatprep.subr.bf16.mxu0 %v1067
    %1473 = vmatpush1.bf16.msra.mxu0 %v1066
    %1474 = vmatprep.subr.bf16.mxu0 %v1069
    %1475 = vmatpush1.bf16.msra.mxu0 %v1068
    %1476 = vmatprep.subr.bf16.mxu0 %v1071
    %1477 = vmatpush1.bf16.msra.mxu0 %v1070
    %1478 = vmatprep.subr.bf16.mxu0 %v1073
    %1479 = vmatpush1.bf16.msra.mxu0 %v1072
    %1480 = vmatprep.subr.bf16.mxu0 %v1075
    %1481 = vmatpush1.bf16.msra.mxu0 %v1074
    %1482 = vmatprep.subr.bf16.mxu0 %v1077
    %1483 = vmatpush1.bf16.msra.mxu0 %v1076
    %1484 = vmatprep.subr.bf16.mxu0 %v1079
    %1485 = vmatpush1.bf16.msra.mxu0 %v1078
    %1486 = vmatprep.subr.bf16.mxu0 %v1081
    %1487 = vmatpush1.bf16.msra.mxu0 %v1080
    %1488 = vmatprep.subr.bf16.mxu0 %v1083
    %1489 = vmatpush1.bf16.msra.mxu0 %v1082
    %1490 = vmatprep.subr.bf16.mxu0 %v1085
    %1491 = vmatpush1.bf16.msra.mxu0 %v1084
    %1492 = vmatprep.subr.bf16.mxu0 %v1087
    %1493 = vmatpush1.bf16.msra.mxu0 %v1086
    %1494 = vmatprep.subr.bf16.mxu0 %v1089
    %1495 = vmatpush1.bf16.msra.mxu0 %v1088
    %1496 = vmatprep.mubr.bf16.mxu0 %v955
    %1497 = vmatmul.mubr.bf16.gmra.mrb[0].mxu0 %v954
    %v1498 = vpop.f32.mrb[0].mxu0
    %v1499 = vadd.f32 %v1446, %v1498
    %v1500 = vpop.f32.mrb[0].mxu0
    %v1501 = vadd.f32 %v1448, %v1500
    %v1502 = vpop.f32.mrb[0].mxu0
    %v1503 = vadd.f32 %v1450, %v1502
    %v1504 = vpop.f32.mrb[0].mxu0
    %v1505 = vadd.f32 %v1452, %v1504
    %1506 = vmatprep.mubr.bf16.mxu0 %v977
    %1507 = vmatmul.mubr.bf16.gmra.mrb[0].mxu0 %v976
    %v1508 = vpop.f32.mrb[0].mxu0
    %v1509 = vadd.f32 %v1456, %v1508
    %v1510 = vpop.f32.mrb[0].mxu0
    %v1511 = vadd.f32 %v1458, %v1510
    %v1512 = vpop.f32.mrb[0].mxu0
    %v1513 = vadd.f32 %v1460, %v1512
    %v1514 = vpop.f32.mrb[0].mxu0
    %v1515 = vadd.f32 %v1462, %v1514
    %1516 = vdwg.mxu0
    %1517 = vmatprep.subr.bf16.mxu0 %v1091
    %1518 = vmatpush1.bf16.msra.mxu0 %v1090
    %1519 = vmatprep.subr.bf16.mxu0 %v1093
    %1520 = vmatpush1.bf16.msra.mxu0 %v1092
    %1521 = vmatprep.subr.bf16.mxu0 %v1095
    %1522 = vmatpush1.bf16.msra.mxu0 %v1094
    %1523 = vmatprep.subr.bf16.mxu0 %v1097
    %1524 = vmatpush1.bf16.msra.mxu0 %v1096
    %1525 = vmatprep.subr.bf16.mxu0 %v1099
    %1526 = vmatpush1.bf16.msra.mxu0 %v1098
    %1527 = vmatprep.subr.bf16.mxu0 %v1101
    %1528 = vmatpush1.bf16.msra.mxu0 %v1100
    %1529 = vmatprep.subr.bf16.mxu0 %v1103
    %1530 = vmatpush1.bf16.msra.mxu0 %v1102
    %1531 = vmatprep.subr.bf16.mxu0 %v1105
    %1532 = vmatpush1.bf16.msra.mxu0 %v1104
    %1533 = vmatprep.subr.bf16.mxu0 %v1107
    %1534 = vmatpush1.bf16.msra.mxu0 %v1106
    %1535 = vmatprep.subr.bf16.mxu0 %v1109
    %1536 = vmatpush1.bf16.msra.mxu0 %v1108
    %1537 = vmatprep.subr.bf16.mxu0 %v1111
    %1538 = vmatpush1.bf16.msra.mxu0 %v1110
    %1539 = vmatprep.subr.bf16.mxu0 %v1113
    %1540 = vmatpush1.bf16.msra.mxu0 %v1112
    %1541 = vmatprep.subr.bf16.mxu0 %v1115
    %1542 = vmatpush1.bf16.msra.mxu0 %v1114
    %1543 = vmatprep.subr.bf16.mxu0 %v1117
    %1544 = vmatpush1.bf16.msra.mxu0 %v1116
    %1545 = vmatprep.subr.bf16.mxu0 %v1119
    %1546 = vmatpush1.bf16.msra.mxu0 %v1118
    %1547 = vmatprep.subr.bf16.mxu0 %v1121
    %1548 = vmatpush1.bf16.msra.mxu0 %v1120
    %1549 = vmatprep.mubr.bf16.mxu0 %v957
    %1550 = vmatmul.mubr.bf16.gmra.mrb[0].mxu0 %v956
    %v1551 = vpop.f32.mrb[0].mxu0
    %v1552 = vadd.f32 %v1499, %v1551
    %v1553 = vpop.f32.mrb[0].mxu0
    %v1554 = vadd.f32 %v1501, %v1553
    %v1555 = vpop.f32.mrb[0].mxu0
    %v1556 = vadd.f32 %v1503, %v1555
    %v1557 = vpop.f32.mrb[0].mxu0
    %v1558 = vadd.f32 %v1505, %v1557
    %1559 = vmatprep.mubr.bf16.mxu0 %v979
    %1560 = vmatmul.mubr.bf16.gmra.mrb[0].mxu0 %v978
    %v1561 = vpop.f32.mrb[0].mxu0
    %v1562 = vadd.f32 %v1509, %v1561
    %v1563 = vpop.f32.mrb[0].mxu0
    %v1564 = vadd.f32 %v1511, %v1563
    %v1565 = vpop.f32.mrb[0].mxu0
    %v1566 = vadd.f32 %v1513, %v1565
    %v1567 = vpop.f32.mrb[0].mxu0
    %v1568 = vadd.f32 %v1515, %v1567
    %1569 = vdwg.mxu0
    %1570 = vmatprep.subr.bf16.mxu0 %v1123
    %1571 = vmatpush1.bf16.msra.mxu0 %v1122
    %1572 = vmatprep.subr.bf16.mxu0 %v1125
    %1573 = vmatpush1.bf16.msra.mxu0 %v1124
    %1574 = vmatprep.subr.bf16.mxu0 %v1127
    %1575 = vmatpush1.bf16.msra.mxu0 %v1126
    %1576 = vmatprep.subr.bf16.mxu0 %v1129
    %1577 = vmatpush1.bf16.msra.mxu0 %v1128
    %1578 = vmatprep.subr.bf16.mxu0 %v1131
    %1579 = vmatpush1.bf16.msra.mxu0 %v1130
    %1580 = vmatprep.subr.bf16.mxu0 %v1133
    %1581 = vmatpush1.bf16.msra.mxu0 %v1132
    %1582 = vmatprep.subr.bf16.mxu0 %v1135
    %1583 = vmatpush1.bf16.msra.mxu0 %v1134
    %1584 = vmatprep.subr.bf16.mxu0 %v1137
    %1585 = vmatpush1.bf16.msra.mxu0 %v1136
    %1586 = vmatprep.subr.bf16.mxu0 %v1139
    %1587 = vmatpush1.bf16.msra.mxu0 %v1138
    %1588 = vmatprep.subr.bf16.mxu0 %v1141
    %1589 = vmatpush1.bf16.msra.mxu0 %v1140
    %1590 = vmatprep.subr.bf16.mxu0 %v1143
    %1591 = vmatpush1.bf16.msra.mxu0 %v1142
    %1592 = vmatprep.subr.bf16.mxu0 %v1145
    %1593 = vmatpush1.bf16.msra.mxu0 %v1144
    %1594 = vmatprep.subr.bf16.mxu0 %v1147
    %1595 = vmatpush1.bf16.msra.mxu0 %v1146
    %1596 = vmatprep.subr.bf16.mxu0 %v1149
    %1597 = vmatpush1.bf16.msra.mxu0 %v1148
    %1598 = vmatprep.subr.bf16.mxu0 %v1151
    %1599 = vmatpush1.bf16.msra.mxu0 %v1150
    %1600 = vmatprep.subr.bf16.mxu0 %v1153
    %1601 = vmatpush1.bf16.msra.mxu0 %v1152
    %1602 = vmatprep.mubr.bf16.mxu0 %v959
    %1603 = vmatmul.mubr.bf16.gmra.mrb[0].mxu0 %v958
    %v1604 = vpop.f32.mrb[0].mxu0
    %v1605 = vadd.f32 %v1552, %v1604
    %v1606 = vpop.f32.mrb[0].mxu0
    %v1607 = vadd.f32 %v1554, %v1606
    %v1608 = vpop.f32.mrb[0].mxu0
    %v1609 = vadd.f32 %v1556, %v1608
    %v1610 = vpop.f32.mrb[0].mxu0
    %v1611 = vadd.f32 %v1558, %v1610
    %1612 = vmatprep.mubr.bf16.mxu0 %v981
    %1613 = vmatmul.mubr.bf16.gmra.mrb[0].mxu0 %v980
    %v1614 = vpop.f32.mrb[0].mxu0
    %v1615 = vadd.f32 %v1562, %v1614
    %v1616 = vpop.f32.mrb[0].mxu0
    %v1617 = vadd.f32 %v1564, %v1616
    %v1618 = vpop.f32.mrb[0].mxu0
    %v1619 = vadd.f32 %v1566, %v1618
    %v1620 = vpop.f32.mrb[0].mxu0
    %v1621 = vadd.f32 %v1568, %v1620
    %1622 = vdwg.mxu0
    %1623 = vmatprep.subr.bf16.mxu0 %v1155
    %1624 = vmatpush1.bf16.msra.mxu0 %v1154
    %1625 = vmatprep.subr.bf16.mxu0 %v1157
    %1626 = vmatpush1.bf16.msra.mxu0 %v1156
    %1627 = vmatprep.subr.bf16.mxu0 %v1159
    %1628 = vmatpush1.bf16.msra.mxu0 %v1158
    %1629 = vmatprep.subr.bf16.mxu0 %v1161
    %1630 = vmatpush1.bf16.msra.mxu0 %v1160
    %1631 = vmatprep.subr.bf16.mxu0 %v1163
    %1632 = vmatpush1.bf16.msra.mxu0 %v1162
    %1633 = vmatprep.subr.bf16.mxu0 %v1165
    %1634 = vmatpush1.bf16.msra.mxu0 %v1164
    %1635 = vmatprep.subr.bf16.mxu0 %v1167
    %1636 = vmatpush1.bf16.msra.mxu0 %v1166
    %1637 = vmatprep.subr.bf16.mxu0 %v1169
    %1638 = vmatpush1.bf16.msra.mxu0 %v1168
    %1639 = vmatprep.subr.bf16.mxu0 %v1171
    %1640 = vmatpush1.bf16.msra.mxu0 %v1170
    %1641 = vmatprep.subr.bf16.mxu0 %v1173
    %1642 = vmatpush1.bf16.msra.mxu0 %v1172
    %1643 = vmatprep.subr.bf16.mxu0 %v1175
    %1644 = vmatpush1.bf16.msra.mxu0 %v1174
    %1645 = vmatprep.subr.bf16.mxu0 %v1177
    %1646 = vmatpush1.bf16.msra.mxu0 %v1176
    %1647 = vmatprep.subr.bf16.mxu0 %v1179
    %1648 = vmatpush1.bf16.msra.mxu0 %v1178
    %1649 = vmatprep.subr.bf16.mxu0 %v1181
    %1650 = vmatpush1.bf16.msra.mxu0 %v1180
    %1651 = vmatprep.subr.bf16.mxu0 %v1183
    %1652 = vmatpush1.bf16.msra.mxu0 %v1182
    %1653 = vmatprep.subr.bf16.mxu0 %v1185
    %1654 = vmatpush1.bf16.msra.mxu0 %v1184
    %1655 = vmatprep.mubr.bf16.mxu0 %v961
    %1656 = vmatmul.mubr.bf16.gmra.mrb[0].mxu0 %v960
    %v1657 = vpop.f32.mrb[0].mxu0
    %v1658 = vadd.f32 %v1605, %v1657
    %v1659 = vpop.f32.mrb[0].mxu0
    %v1660 = vadd.f32 %v1607, %v1659
    %v1661 = vpop.f32.mrb[0].mxu0
    %v1662 = vadd.f32 %v1609, %v1661
    %v1663 = vpop.f32.mrb[0].mxu0
    %v1664 = vadd.f32 %v1611, %v1663
    %1665 = vmatprep.mubr.bf16.mxu0 %v983
    %1666 = vmatmul.mubr.bf16.gmra.mrb[0].mxu0 %v982
    %v1667 = vpop.f32.mrb[0].mxu0
    %v1668 = vadd.f32 %v1615, %v1667
    %v1669 = vpop.f32.mrb[0].mxu0
    %v1670 = vadd.f32 %v1617, %v1669
    %v1671 = vpop.f32.mrb[0].mxu0
    %v1672 = vadd.f32 %v1619, %v1671
    %v1673 = vpop.f32.mrb[0].mxu0
    %v1674 = vadd.f32 %v1621, %v1673
    %1675 = vdwg.mxu0
    %1676 = vmatprep.subr.bf16.mxu0 %v1187
    %1677 = vmatpush1.bf16.msra.mxu0 %v1186
    %1678 = vmatprep.subr.bf16.mxu0 %v1189
    %1679 = vmatpush1.bf16.msra.mxu0 %v1188
    %1680 = vmatprep.subr.bf16.mxu0 %v1191
    %1681 = vmatpush1.bf16.msra.mxu0 %v1190
    %1682 = vmatprep.subr.bf16.mxu0 %v1193
    %1683 = vmatpush1.bf16.msra.mxu0 %v1192
    %1684 = vmatprep.subr.bf16.mxu0 %v1195
    %1685 = vmatpush1.bf16.msra.mxu0 %v1194
    %1686 = vmatprep.subr.bf16.mxu0 %v1197
    %1687 = vmatpush1.bf16.msra.mxu0 %v1196
    %1688 = vmatprep.subr.bf16.mxu0 %v1199
    %1689 = vmatpush1.bf16.msra.mxu0 %v1198
    %1690 = vmatprep.subr.bf16.mxu0 %v1201
    %1691 = vmatpush1.bf16.msra.mxu0 %v1200
    %1692 = vmatprep.subr.bf16.mxu0 %v1203
    %1693 = vmatpush1.bf16.msra.mxu0 %v1202
    %1694 = vmatprep.subr.bf16.mxu0 %v1205
    %1695 = vmatpush1.bf16.msra.mxu0 %v1204
    %1696 = vmatprep.subr.bf16.mxu0 %v1207
    %1697 = vmatpush1.bf16.msra.mxu0 %v1206
    %1698 = vmatprep.subr.bf16.mxu0 %v1209
    %1699 = vmatpush1.bf16.msra.mxu0 %v1208
    %1700 = vmatprep.subr.bf16.mxu0 %v1211
    %1701 = vmatpush1.bf16.msra.mxu0 %v1210
    %1702 = vmatprep.subr.bf16.mxu0 %v1213
    %1703 = vmatpush1.bf16.msra.mxu0 %v1212
    %1704 = vmatprep.subr.bf16.mxu0 %v1215
    %1705 = vmatpush1.bf16.msra.mxu0 %v1214
    %1706 = vmatprep.subr.bf16.mxu0 %v1217
    %1707 = vmatpush1.bf16.msra.mxu0 %v1216
    %1708 = vmatprep.mubr.bf16.mxu0 %v963
    %1709 = vmatmul.mubr.bf16.gmra.mrb[0].mxu0 %v962
    %v1710 = vpop.f32.mrb[0].mxu0
    %v1711 = vadd.f32 %v1658, %v1710
    %v1712 = vpop.f32.mrb[0].mxu0
    %v1713 = vadd.f32 %v1660, %v1712
    %v1714 = vpop.f32.mrb[0].mxu0
    %v1715 = vadd.f32 %v1662, %v1714
    %v1716 = vpop.f32.mrb[0].mxu0
    %v1717 = vadd.f32 %v1664, %v1716
    %1718 = vmatprep.mubr.bf16.mxu0 %v985
    %1719 = vmatmul.mubr.bf16.gmra.mrb[0].mxu0 %v984
    %v1720 = vpop.f32.mrb[0].mxu0
    %v1721 = vadd.f32 %v1668, %v1720
    %v1722 = vpop.f32.mrb[0].mxu0
    %v1723 = vadd.f32 %v1670, %v1722
    %v1724 = vpop.f32.mrb[0].mxu0
    %v1725 = vadd.f32 %v1672, %v1724
    %v1726 = vpop.f32.mrb[0].mxu0
    %v1727 = vadd.f32 %v1674, %v1726
    %1728 = vdwg.mxu0
    %1729 = vmatprep.subr.bf16.mxu0 %v1219
    %1730 = vmatpush1.bf16.msra.mxu0 %v1218
    %1731 = vmatprep.subr.bf16.mxu0 %v1221
    %1732 = vmatpush1.bf16.msra.mxu0 %v1220
    %1733 = vmatprep.subr.bf16.mxu0 %v1223
    %1734 = vmatpush1.bf16.msra.mxu0 %v1222
    %1735 = vmatprep.subr.bf16.mxu0 %v1225
    %1736 = vmatpush1.bf16.msra.mxu0 %v1224
    %1737 = vmatprep.subr.bf16.mxu0 %v1227
    %1738 = vmatpush1.bf16.msra.mxu0 %v1226
    %1739 = vmatprep.subr.bf16.mxu0 %v1229
    %1740 = vmatpush1.bf16.msra.mxu0 %v1228
    %1741 = vmatprep.subr.bf16.mxu0 %v1231
    %1742 = vmatpush1.bf16.msra.mxu0 %v1230
    %1743 = vmatprep.subr.bf16.mxu0 %v1233
    %1744 = vmatpush1.bf16.msra.mxu0 %v1232
    %1745 = vmatprep.subr.bf16.mxu0 %v1235
    %1746 = vmatpush1.bf16.msra.mxu0 %v1234
    %1747 = vmatprep.subr.bf16.mxu0 %v1237
    %1748 = vmatpush1.bf16.msra.mxu0 %v1236
    %1749 = vmatprep.subr.bf16.mxu0 %v1239
    %1750 = vmatpush1.bf16.msra.mxu0 %v1238
    %1751 = vmatprep.subr.bf16.mxu0 %v1241
    %1752 = vmatpush1.bf16.msra.mxu0 %v1240
    %1753 = vmatprep.subr.bf16.mxu0 %v1243
    %1754 = vmatpush1.bf16.msra.mxu0 %v1242
    %1755 = vmatprep.subr.bf16.mxu0 %v1245
    %1756 = vmatpush1.bf16.msra.mxu0 %v1244
    %1757 = vmatprep.subr.bf16.mxu0 %v1247
    %1758 = vmatpush1.bf16.msra.mxu0 %v1246
    %1759 = vmatprep.subr.bf16.mxu0 %v1249
    %1760 = vmatpush1.bf16.msra.mxu0 %v1248
    %1761 = vmatprep.mubr.bf16.mxu0 %v965
    %1762 = vmatmul.mubr.bf16.gmra.mrb[0].mxu0 %v964
    %v1763 = vpop.f32.mrb[0].mxu0
    %v1764 = vadd.f32 %v1711, %v1763
    %v1765 = vpop.f32.mrb[0].mxu0
    %v1766 = vadd.f32 %v1713, %v1765
    %v1767 = vpop.f32.mrb[0].mxu0
    %v1768 = vadd.f32 %v1715, %v1767
    %v1769 = vpop.f32.mrb[0].mxu0
    %v1770 = vadd.f32 %v1717, %v1769
    %1771 = vmatprep.mubr.bf16.mxu0 %v987
    %1772 = vmatmul.mubr.bf16.gmra.mrb[0].mxu0 %v986
    %v1773 = vpop.f32.mrb[0].mxu0
    %v1774 = vadd.f32 %v1721, %v1773
    %v1775 = vpop.f32.mrb[0].mxu0
    %v1776 = vadd.f32 %v1723, %v1775
    %v1777 = vpop.f32.mrb[0].mxu0
    %v1778 = vadd.f32 %v1725, %v1777
    %v1779 = vpop.f32.mrb[0].mxu0
    %v1780 = vadd.f32 %v1727, %v1779
    %1781 = vdwg.mxu0
    %1782 = vmatprep.subr.bf16.mxu0 %v1251
    %1783 = vmatpush1.bf16.msra.mxu0 %v1250
    %1784 = vmatprep.subr.bf16.mxu0 %v1253
    %1785 = vmatpush1.bf16.msra.mxu0 %v1252
    %1786 = vmatprep.subr.bf16.mxu0 %v1255
    %1787 = vmatpush1.bf16.msra.mxu0 %v1254
    %1788 = vmatprep.subr.bf16.mxu0 %v1257
    %1789 = vmatpush1.bf16.msra.mxu0 %v1256
    %1790 = vmatprep.subr.bf16.mxu0 %v1259
    %1791 = vmatpush1.bf16.msra.mxu0 %v1258
    %1792 = vmatprep.subr.bf16.mxu0 %v1261
    %1793 = vmatpush1.bf16.msra.mxu0 %v1260
    %1794 = vmatprep.subr.bf16.mxu0 %v1263
    %1795 = vmatpush1.bf16.msra.mxu0 %v1262
    %1796 = vmatprep.subr.bf16.mxu0 %v1265
    %1797 = vmatpush1.bf16.msra.mxu0 %v1264
    %1798 = vmatprep.subr.bf16.mxu0 %v1267
    %1799 = vmatpush1.bf16.msra.mxu0 %v1266
    %1800 = vmatprep.subr.bf16.mxu0 %v1269
    %1801 = vmatpush1.bf16.msra.mxu0 %v1268
    %1802 = vmatprep.subr.bf16.mxu0 %v1271
    %1803 = vmatpush1.bf16.msra.mxu0 %v1270
    %1804 = vmatprep.subr.bf16.mxu0 %v1273
    %1805 = vmatpush1.bf16.msra.mxu0 %v1272
    %1806 = vmatprep.subr.bf16.mxu0 %v1275
    %1807 = vmatpush1.bf16.msra.mxu0 %v1274
    %1808 = vmatprep.subr.bf16.mxu0 %v1277
    %1809 = vmatpush1.bf16.msra.mxu0 %v1276
    %1810 = vmatprep.subr.bf16.mxu0 %v1279
    %1811 = vmatpush1.bf16.msra.mxu0 %v1278
    %1812 = vmatprep.subr.bf16.mxu0 %v1281
    %1813 = vmatpush1.bf16.msra.mxu0 %v1280
    %1814 = vmatprep.mubr.bf16.mxu0 %v967
    %1815 = vmatmul.mubr.bf16.gmra.mrb[0].mxu0 %v966
    %v1816 = vpop.f32.mrb[0].mxu0
    %v1817 = vadd.f32 %v1764, %v1816
    %v1818 = vpop.f32.mrb[0].mxu0
    %v1819 = vadd.f32 %v1766, %v1818
    %v1820 = vpop.f32.mrb[0].mxu0
    %v1821 = vadd.f32 %v1768, %v1820
    %v1822 = vpop.f32.mrb[0].mxu0
    %v1823 = vadd.f32 %v1770, %v1822
    %1824 = vmatprep.mubr.bf16.mxu0 %v989
    %1825 = vmatmul.mubr.bf16.gmra.mrb[0].mxu0 %v988
    %v1826 = vpop.f32.mrb[0].mxu0
    %v1827 = vadd.f32 %v1774, %v1826
    %v1828 = vpop.f32.mrb[0].mxu0
    %v1829 = vadd.f32 %v1776, %v1828
    %v1830 = vpop.f32.mrb[0].mxu0
    %v1831 = vadd.f32 %v1778, %v1830
    %v1832 = vpop.f32.mrb[0].mxu0
    %v1833 = vadd.f32 %v1780, %v1832
    %1834 = vdwg.mxu0
    %1835 = vmatprep.subr.bf16.mxu0 %v1283
    %1836 = vmatpush1.bf16.msra.mxu0 %v1282
    %1837 = vmatprep.subr.bf16.mxu0 %v1285
    %1838 = vmatpush1.bf16.msra.mxu0 %v1284
    %1839 = vmatprep.subr.bf16.mxu0 %v1287
    %1840 = vmatpush1.bf16.msra.mxu0 %v1286
    %1841 = vmatprep.subr.bf16.mxu0 %v1289
    %1842 = vmatpush1.bf16.msra.mxu0 %v1288
    %1843 = vmatprep.subr.bf16.mxu0 %v1291
    %1844 = vmatpush1.bf16.msra.mxu0 %v1290
    %1845 = vmatprep.subr.bf16.mxu0 %v1293
    %1846 = vmatpush1.bf16.msra.mxu0 %v1292
    %1847 = vmatprep.subr.bf16.mxu0 %v1295
    %1848 = vmatpush1.bf16.msra.mxu0 %v1294
    %1849 = vmatprep.subr.bf16.mxu0 %v1297
    %1850 = vmatpush1.bf16.msra.mxu0 %v1296
    %1851 = vmatprep.subr.bf16.mxu0 %v1299
    %1852 = vmatpush1.bf16.msra.mxu0 %v1298
    %1853 = vmatprep.subr.bf16.mxu0 %v1301
    %1854 = vmatpush1.bf16.msra.mxu0 %v1300
    %1855 = vmatprep.subr.bf16.mxu0 %v1303
    %1856 = vmatpush1.bf16.msra.mxu0 %v1302
    %1857 = vmatprep.subr.bf16.mxu0 %v1305
    %1858 = vmatpush1.bf16.msra.mxu0 %v1304
    %1859 = vmatprep.subr.bf16.mxu0 %v1307
    %1860 = vmatpush1.bf16.msra.mxu0 %v1306
    %1861 = vmatprep.subr.bf16.mxu0 %v1309
    %1862 = vmatpush1.bf16.msra.mxu0 %v1308
    %1863 = vmatprep.subr.bf16.mxu0 %v1311
    %1864 = vmatpush1.bf16.msra.mxu0 %v1310
    %1865 = vmatprep.subr.bf16.mxu0 %v1313
    %1866 = vmatpush1.bf16.msra.mxu0 %v1312
    %1867 = vmatprep.mubr.bf16.mxu0 %v969
    %1868 = vmatmul.mubr.bf16.gmra.mrb[0].mxu0 %v968
    %v1869 = vpop.f32.mrb[0].mxu0
    %v1870 = vadd.f32 %v1817, %v1869
    %v1871 = vpop.f32.mrb[0].mxu0
    %v1872 = vadd.f32 %v1819, %v1871
    %v1873 = vpop.f32.mrb[0].mxu0
    %v1874 = vadd.f32 %v1821, %v1873
    %v1875 = vpop.f32.mrb[0].mxu0
    %v1876 = vadd.f32 %v1823, %v1875
    %1877 = vmatprep.mubr.bf16.mxu0 %v991
    %1878 = vmatmul.mubr.bf16.gmra.mrb[0].mxu0 %v990
    %v1879 = vpop.f32.mrb[0].mxu0
    %v1880 = vadd.f32 %v1827, %v1879
    %v1881 = vpop.f32.mrb[0].mxu0
    %v1882 = vadd.f32 %v1829, %v1881
    %v1883 = vpop.f32.mrb[0].mxu0
    %v1884 = vadd.f32 %v1831, %v1883
    %v1885 = vpop.f32.mrb[0].mxu0
    %v1886 = vadd.f32 %v1833, %v1885
    %1887 = vdwg.mxu0
    %1888 = vmatprep.subr.bf16.mxu0 %v1315
    %1889 = vmatpush1.bf16.msra.mxu0 %v1314
    %1890 = vmatprep.subr.bf16.mxu0 %v1317
    %1891 = vmatpush1.bf16.msra.mxu0 %v1316
    %1892 = vmatprep.subr.bf16.mxu0 %v1319
    %1893 = vmatpush1.bf16.msra.mxu0 %v1318
    %1894 = vmatprep.subr.bf16.mxu0 %v1321
    %1895 = vmatpush1.bf16.msra.mxu0 %v1320
    %1896 = vmatprep.subr.bf16.mxu0 %v1323
    %1897 = vmatpush1.bf16.msra.mxu0 %v1322
    %1898 = vmatprep.subr.bf16.mxu0 %v1325
    %1899 = vmatpush1.bf16.msra.mxu0 %v1324
    %1900 = vmatprep.subr.bf16.mxu0 %v1327
    %1901 = vmatpush1.bf16.msra.mxu0 %v1326
    %1902 = vmatprep.subr.bf16.mxu0 %v1329
    %1903 = vmatpush1.bf16.msra.mxu0 %v1328
    %1904 = vmatprep.subr.bf16.mxu0 %v1331
    %1905 = vmatpush1.bf16.msra.mxu0 %v1330
    %1906 = vmatprep.subr.bf16.mxu0 %v1333
    %1907 = vmatpush1.bf16.msra.mxu0 %v1332
    %1908 = vmatprep.subr.bf16.mxu0 %v1335
    %1909 = vmatpush1.bf16.msra.mxu0 %v1334
    %1910 = vmatprep.subr.bf16.mxu0 %v1337
    %1911 = vmatpush1.bf16.msra.mxu0 %v1336
    %1912 = vmatprep.subr.bf16.mxu0 %v1339
    %1913 = vmatpush1.bf16.msra.mxu0 %v1338
    %1914 = vmatprep.subr.bf16.mxu0 %v1341
    %1915 = vmatpush1.bf16.msra.mxu0 %v1340
    %1916 = vmatprep.subr.bf16.mxu0 %v1343
    %1917 = vmatpush1.bf16.msra.mxu0 %v1342
    %1918 = vmatprep.subr.bf16.mxu0 %v1345
    %1919 = vmatpush1.bf16.msra.mxu0 %v1344
    %1920 = vmatprep.mubr.bf16.mxu0 %v971
    %1921 = vmatmul.mubr.bf16.gmra.mrb[0].mxu0 %v970
    %v1922 = vpop.f32.mrb[0].mxu0
    %v1923 = vadd.f32 %v1870, %v1922
    %v1924 = vpop.f32.mrb[0].mxu0
    %v1925 = vadd.f32 %v1872, %v1924
    %v1926 = vpop.f32.mrb[0].mxu0
    %v1927 = vadd.f32 %v1874, %v1926
    %v1928 = vpop.f32.mrb[0].mxu0
    %v1929 = vadd.f32 %v1876, %v1928
    %1930 = vmatprep.mubr.bf16.mxu0 %v993
    %1931 = vmatmul.mubr.bf16.gmra.mrb[0].mxu0 %v992
    %v1932 = vpop.f32.mrb[0].mxu0
    %v1933 = vadd.f32 %v1880, %v1932
    %v1934 = vpop.f32.mrb[0].mxu0
    %v1935 = vadd.f32 %v1882, %v1934
    %v1936 = vpop.f32.mrb[0].mxu0
    %v1937 = vadd.f32 %v1884, %v1936
    %v1938 = vpop.f32.mrb[0].mxu0
    %v1939 = vadd.f32 %v1886, %v1938
    %1940 = vdwg.mxu0
    %v1941 = vmax.f32 %v1923, 0.0
    %v1942 = vmax.f32 %v1925, 0.0
    %v1943 = vmax.f32 %v1927, 0.0
    %v1944 = vmax.f32 %v1929, 0.0
    %v1945 = vmax.f32 %v1933, 0.0
    %v1946 = vmax.f32 %v1935, 0.0
    %v1947 = vmax.f32 %v1937, 0.0
    %v1948 = vmax.f32 %v1939, 0.0
    %v1949 = vpack.c.bf16 %v1943, %v1941
    %v1950 = vpack.c.bf16 %v1944, %v1942
    %v1951 = vpack.c.bf16 %v1947, %v1945
    %v1952 = vpack.c.bf16 %v1948, %v1946
    %1953 = vst [vmem:[#allocation2 + $0x10] sm:$0xff] %v1949
    %1954 = vst [vmem:[#allocation2 + $0x18] sm:$0xff] %v1950
    %1955 = vst [vmem:[#allocation2 + $0x20] sm:$0xff] %v1951
    %1956 = vst [vmem:[#allocation2 + $0x28] sm:$0xff] %v1952
    %s1958 = sshll.u32 1, 14
    %s1959 = sxor.u32 4294967295, %s1958
    %s1961 = sadd.s32 2, %s169
    %s1963 = sshll.u32 7, 26
    %s1964 = sxor.u32 4294967295, %s1963
    %s1965 = sand.u32 0, %s1964
    %s1966 = sshll.u32 %s1961, 26
    %s1967 = sor.u32 %s1965, %s1966
    %s1968 = sshll.u32 [#allocation5], 4
    %s1969 = int_to_ptr.vmem [resolvable:$true] %s1968
    %1972 = sst [smem:[#allocation28]] 256
    %s1973 = scalar_lea.smem [#allocation28], 1
    %1974 = sst [smem:[%s1973]] 256
    %s1975 = scalar_lea.smem [#allocation28], 2
    %1976 = sst [smem:[%s1975]] 2
    %s1977 = scalar_lea.smem [#allocation28], 3
    %1978 = sst [smem:[%s1977]] 64
    %s1979 = scalar_lea.smem [#allocation28], 4
    %1980 = sst [smem:[%s1979]] 128
    %s1981 = scalar_lea.smem [#allocation28], 5
    %1982 = sst [smem:[%s1981]] 2
    %s1983 = scalar_lea.smem [#allocation28], 6
    %1984 = sst [smem:[%s1983]] 128
    %s1985 = scalar_lea.smem [#allocation28], 7
    %1986 = sst [smem:[%s1985]] 64
    %s1987 = scalar_lea.smem [#allocation28], 8
    %1988 = sst [smem:[%s1987]] 4
    %1990 = dma.general %s7, 20480, %s1969, [#allocation6], [#allocation27], [#allocation28], %s1967, 0
    %v1991 = vld [vmem:[#allocation2] sm:$0xf0]
    %v1992 = vld [vmem:[#allocation2 + $0x8] sm:$0xf0]
    %v1993 = vld [vmem:[#allocation2 + $0x10] sm:$0xff]
    %v1994 = vld [vmem:[#allocation2 + $0x18] sm:$0xff]
    %v1995 = vld [vmem:[#allocation2 + $0x20] sm:$0xf]
    %v1996 = vld [vmem:[#allocation2 + $0x28] sm:$0xf]
    %v2003 = vrot.slane %v1991, 4
    %v2004 = vrot.slane %v1993, 4
    %v2005 = vsel %vm674, %v2003, %v2004
    %v2006 = vrot.slane %v1992, 4
    %v2007 = vrot.slane %v1994, 4
    %v2008 = vsel %vm674, %v2006, %v2007
    %v2009 = vrot.slane %v1995, 4
    %v2010 = vsel %vm674, %v2004, %v2009
    %v2011 = vrot.slane %v1996, 4
    %v2012 = vsel %vm674, %v2007, %v2011
    %2017 = vst [vmem:[#allocation4] sm:$0xff] %v2005
    %2018 = vst [vmem:[#allocation4 + $0x8] sm:$0xff] %v2008
    %2019 = vst [vmem:[#allocation4 + $0xb0] sm:$0xff] %v2010
    %2020 = vst [vmem:[#allocation4 + $0xb8] sm:$0xff] %v2012
    %v2021 = vld [vmem:[#allocation2] sm:$0xe0]
    %v2022 = vld [vmem:[#allocation2 + $0x8] sm:$0xe0]
    %v2023 = vld [vmem:[#allocation2 + $0x10] sm:$0xff]
    %v2024 = vld [vmem:[#allocation2 + $0x18] sm:$0xff]
    %v2025 = vld [vmem:[#allocation2 + $0x20] sm:$0x1f]
    %v2026 = vld [vmem:[#allocation2 + $0x28] sm:$0x1f]
    %v2033 = vrot.slane %v2021, 5
    %v2034 = vrot.slane %v2023, 5
    %v2035 = vsel %vm705, %v2033, %v2034
    %v2036 = vrot.slane %v2022, 5
    %v2037 = vrot.slane %v2024, 5
    %v2038 = vsel %vm705, %v2036, %v2037
    %v2039 = vrot.slane %v2025, 5
    %v2040 = vsel %vm705, %v2034, %v2039
    %v2041 = vrot.slane %v2026, 5
    %v2042 = vsel %vm705, %v2037, %v2041
    %2047 = vst [vmem:[#allocation4 + $0x10] sm:$0xff] %v2035
    %2048 = vst [vmem:[#allocation4 + $0x18] sm:$0xff] %v2038
    %2049 = vst [vmem:[#allocation4 + $0xc0] sm:$0xff] %v2040
    %2050 = vst [vmem:[#allocation4 + $0xc8] sm:$0xff] %v2042
    %v2051 = vld [vmem:[#allocation2] sm:$0xc0]
    %v2052 = vld [vmem:[#allocation2 + $0x8] sm:$0xc0]
    %v2053 = vld [vmem:[#allocation2 + $0x10] sm:$0xff]
    %v2054 = vld [vmem:[#allocation2 + $0x18] sm:$0xff]
    %v2055 = vld [vmem:[#allocation2 + $0x20] sm:$0x3f]
    %v2056 = vld [vmem:[#allocation2 + $0x28] sm:$0x3f]
    %v2063 = vrot.slane %v2051, 6
    %v2064 = vrot.slane %v2053, 6
    %v2065 = vsel %vm736, %v2063, %v2064
    %v2066 = vrot.slane %v2052, 6
    %v2067 = vrot.slane %v2054, 6
    %v2068 = vsel %vm736, %v2066, %v2067
    %v2069 = vrot.slane %v2055, 6
    %v2070 = vsel %vm736, %v2064, %v2069
    %v2071 = vrot.slane %v2056, 6
    %v2072 = vsel %vm736, %v2067, %v2071
    %2077 = vst [vmem:[#allocation4 + $0x20] sm:$0xff] %v2065
    %2078 = vst [vmem:[#allocation4 + $0x28] sm:$0xff] %v2068
    %2079 = vst [vmem:[#allocation4 + $0xd0] sm:$0xff] %v2070
    %2080 = vst [vmem:[#allocation4 + $0xd8] sm:$0xff] %v2072
    %v2081 = vld [vmem:[#allocation2] sm:$0x80]
    %v2082 = vld [vmem:[#allocation2 + $0x8] sm:$0x80]
    %v2083 = vld [vmem:[#allocation2 + $0x10] sm:$0xff]
    %v2084 = vld [vmem:[#allocation2 + $0x18] sm:$0xff]
    %v2085 = vld [vmem:[#allocation2 + $0x20] sm:$0x7f]
    %v2086 = vld [vmem:[#allocation2 + $0x28] sm:$0x7f]
    %v2093 = vrot.slane %v2081, 7
    %v2094 = vrot.slane %v2083, 7
    %v2095 = vsel %vm767, %v2093, %v2094
    %v2096 = vrot.slane %v2082, 7
    %v2097 = vrot.slane %v2084, 7
    %v2098 = vsel %vm767, %v2096, %v2097
    %v2099 = vrot.slane %v2085, 7
    %v2100 = vsel %vm767, %v2094, %v2099
    %v2101 = vrot.slane %v2086, 7
    %v2102 = vsel %vm767, %v2097, %v2101
    %2107 = vst [vmem:[#allocation4 + $0x30] sm:$0xff] %v2095
    %2108 = vst [vmem:[#allocation4 + $0x38] sm:$0xff] %v2098
    %2109 = vst [vmem:[#allocation4 + $0xe0] sm:$0xff] %v2100
    %2110 = vst [vmem:[#allocation4 + $0xe8] sm:$0xff] %v2102
    %v2111 = vld [vmem:[#allocation2 + $0x10] sm:$0xff]
    %v2112 = vld [vmem:[#allocation2 + $0x18] sm:$0xff]
    %v2113 = vld [vmem:[#allocation2 + $0x20] sm:$0xff]
    %v2114 = vld [vmem:[#allocation2 + $0x28] sm:$0xff]
    %2115 = vst [vmem:[#allocation4 + $0x40] sm:$0xff] %v2111
    %2116 = vst [vmem:[#allocation4 + $0x48] sm:$0xff] %v2112
    %2117 = vst [vmem:[#allocation4 + $0xf0] sm:$0xff] %v2113
    %2118 = vst [vmem:[#allocation4 + $0xf8] sm:$0xff] %v2114
    %v2119 = vld [vmem:[#allocation2 + $0x10] sm:$0xfe]
    %v2120 = vld [vmem:[#allocation2 + $0x18] sm:$0xfe]
    %v2121 = vld [vmem:[#allocation2 + $0x20] sm:$0xff]
    %v2122 = vld [vmem:[#allocation2 + $0x28] sm:$0xff]
    %v2123 = vld [vmem:[#allocation2 + $0x30] sm:$0x1]
    %v2124 = vld [vmem:[#allocation2 + $0x38] sm:$0x1]
    %v2131 = vrot.slane %v2119, 1
    %v2132 = vrot.slane %v2121, 1
    %v2133 = vsel %vm806, %v2131, %v2132
    %v2134 = vrot.slane %v2120, 1
    %v2135 = vrot.slane %v2122, 1
    %v2136 = vsel %vm806, %v2134, %v2135
    %v2137 = vrot.slane %v2123, 1
    %v2138 = vsel %vm806, %v2132, %v2137
    %v2139 = vrot.slane %v2124, 1
    %v2140 = vsel %vm806, %v2135, %v2139
    %2145 = vst [vmem:[#allocation4 + $0x50] sm:$0xff] %v2133
    %2146 = vst [vmem:[#allocation4 + $0x58] sm:$0xff] %v2136
    %2147 = vst [vmem:[#allocation4 + $0x100] sm:$0xff] %v2138
    %2148 = vst [vmem:[#allocation4 + $0x108] sm:$0xff] %v2140
    %v2149 = vld [vmem:[#allocation2 + $0x10] sm:$0xfc]
    %v2150 = vld [vmem:[#allocation2 + $0x18] sm:$0xfc]
    %v2151 = vld [vmem:[#allocation2 + $0x20] sm:$0xff]
    %v2152 = vld [vmem:[#allocation2 + $0x28] sm:$0xff]
    %v2153 = vld [vmem:[#allocation2 + $0x30] sm:$0x3]
    %v2154 = vld [vmem:[#allocation2 + $0x38] sm:$0x3]
    %v2161 = vrot.slane %v2149, 2
    %v2162 = vrot.slane %v2151, 2
    %v2163 = vsel %vm837, %v2161, %v2162
    %v2164 = vrot.slane %v2150, 2
    %v2165 = vrot.slane %v2152, 2
    %v2166 = vsel %vm837, %v2164, %v2165
    %v2167 = vrot.slane %v2153, 2
    %v2168 = vsel %vm837, %v2162, %v2167
    %v2169 = vrot.slane %v2154, 2
    %v2170 = vsel %vm837, %v2165, %v2169
    %2175 = vst [vmem:[#allocation4 + $0x60] sm:$0xff] %v2163
    %2176 = vst [vmem:[#allocation4 + $0x68] sm:$0xff] %v2166
    %2177 = vst [vmem:[#allocation4 + $0x110] sm:$0xff] %v2168
    %2178 = vst [vmem:[#allocation4 + $0x118] sm:$0xff] %v2170
    %v2179 = vld [vmem:[#allocation2 + $0x10] sm:$0xf8]
    %v2180 = vld [vmem:[#allocation2 + $0x18] sm:$0xf8]
    %v2181 = vld [vmem:[#allocation2 + $0x20] sm:$0xff]
    %v2182 = vld [vmem:[#allocation2 + $0x28] sm:$0xff]
    %v2183 = vld [vmem:[#allocation2 + $0x30] sm:$0x7]
    %v2184 = vld [vmem:[#allocation2 + $0x38] sm:$0x7]
    %v2191 = vrot.slane %v2179, 3
    %v2192 = vrot.slane %v2181, 3
    %v2193 = vsel %vm643, %v2191, %v2192
    %v2194 = vrot.slane %v2180, 3
    %v2195 = vrot.slane %v2182, 3
    %v2196 = vsel %vm643, %v2194, %v2195
    %v2197 = vrot.slane %v2183, 3
    %v2198 = vsel %vm643, %v2192, %v2197
    %v2199 = vrot.slane %v2184, 3
    %v2200 = vsel %vm643, %v2195, %v2199
    %2205 = vst [vmem:[#allocation4 + $0x70] sm:$0xff] %v2193
    %2206 = vst [vmem:[#allocation4 + $0x78] sm:$0xff] %v2196
    %2207 = vst [vmem:[#allocation4 + $0x120] sm:$0xff] %v2198
    %2208 = vst [vmem:[#allocation4 + $0x128] sm:$0xff] %v2200
    %v2209 = vld [vmem:[#allocation2 + $0x10] sm:$0xf0]
    %v2210 = vld [vmem:[#allocation2 + $0x18] sm:$0xf0]
    %v2211 = vld [vmem:[#allocation2 + $0x20] sm:$0xff]
    %v2212 = vld [vmem:[#allocation2 + $0x28] sm:$0xff]
    %v2213 = vld [vmem:[#allocation2 + $0x30] sm:$0xf]
    %v2214 = vld [vmem:[#allocation2 + $0x38] sm:$0xf]
    %v2221 = vrot.slane %v2209, 4
    %v2222 = vrot.slane %v2211, 4
    %v2223 = vsel %vm674, %v2221, %v2222
    %v2224 = vrot.slane %v2210, 4
    %v2225 = vrot.slane %v2212, 4
    %v2226 = vsel %vm674, %v2224, %v2225
    %v2227 = vrot.slane %v2213, 4
    %v2228 = vsel %vm674, %v2222, %v2227
    %v2229 = vrot.slane %v2214, 4
    %v2230 = vsel %vm674, %v2225, %v2229
    %2235 = vst [vmem:[#allocation4 + $0x80] sm:$0xff] %v2223
    %2236 = vst [vmem:[#allocation4 + $0x88] sm:$0xff] %v2226
    %2237 = vst [vmem:[#allocation4 + $0x130] sm:$0xff] %v2228
    %2238 = vst [vmem:[#allocation4 + $0x138] sm:$0xff] %v2230
    %s2239 = smul.u32 4, 288
    %s2240 = smul.u32 %s2239, 2
    %s2241 = sshll.u32 %s2240, 4
    %2242 = dma.done %s596, %s2241
    %v2243 = vld [vmem:[#allocation4] sm:$0xff]
    %v2244 = vld [vmem:[#allocation4 + $0x8] sm:$0xff]
    %v2245 = vld [vmem:[#allocation4 + $0x10] sm:$0xff]
    %v2246 = vld [vmem:[#allocation4 + $0x18] sm:$0xff]
    %v2247 = vld [vmem:[#allocation4 + $0x20] sm:$0xff]
    %v2248 = vld [vmem:[#allocation4 + $0x28] sm:$0xff]
    %v2249 = vld [vmem:[#allocation4 + $0x30] sm:$0xff]
    %v2250 = vld [vmem:[#allocation4 + $0x38] sm:$0xff]
    %v2251 = vld [vmem:[#allocation4 + $0x40] sm:$0xff]
    %v2252 = vld [vmem:[#allocation4 + $0x48] sm:$0xff]
    %v2253 = vld [vmem:[#allocation4 + $0x50] sm:$0xff]
    %v2254 = vld [vmem:[#allocation4 + $0x58] sm:$0xff]
    %v2255 = vld [vmem:[#allocation4 + $0x60] sm:$0xff]
    %v2256 = vld [vmem:[#allocation4 + $0x68] sm:$0xff]
    %v2257 = vld [vmem:[#allocation4 + $0x70] sm:$0xff]
    %v2258 = vld [vmem:[#allocation4 + $0x78] sm:$0xff]
    %v2259 = vld [vmem:[#allocation4 + $0x80] sm:$0xff]
    %v2260 = vld [vmem:[#allocation4 + $0x88] sm:$0xff]
    %v2261 = vld [vmem:[#allocation4 + $0xb0] sm:$0xff]
    %v2262 = vld [vmem:[#allocation4 + $0xb8] sm:$0xff]
    %v2263 = vld [vmem:[#allocation4 + $0xc0] sm:$0xff]
    %v2264 = vld [vmem:[#allocation4 + $0xc8] sm:$0xff]
    %v2265 = vld [vmem:[#allocation4 + $0xd0] sm:$0xff]
    %v2266 = vld [vmem:[#allocation4 + $0xd8] sm:$0xff]
    %v2267 = vld [vmem:[#allocation4 + $0xe0] sm:$0xff]
    %v2268 = vld [vmem:[#allocation4 + $0xe8] sm:$0xff]
    %v2269 = vld [vmem:[#allocation4 + $0xf0] sm:$0xff]
    %v2270 = vld [vmem:[#allocation4 + $0xf8] sm:$0xff]
    %v2271 = vld [vmem:[#allocation4 + $0x100] sm:$0xff]
    %v2272 = vld [vmem:[#allocation4 + $0x108] sm:$0xff]
    %v2273 = vld [vmem:[#allocation4 + $0x110] sm:$0xff]
    %v2274 = vld [vmem:[#allocation4 + $0x118] sm:$0xff]
    %v2275 = vld [vmem:[#allocation4 + $0x120] sm:$0xff]
    %v2276 = vld [vmem:[#allocation4 + $0x128] sm:$0xff]
    %v2277 = vld [vmem:[#allocation4 + $0x130] sm:$0xff]
    %v2278 = vld [vmem:[#allocation4 + $0x138] sm:$0xff]
    %v2279 = vld [vmem:[#allocation5 + $0xb00] sm:$0xff]
    %v2280 = vld [vmem:[#allocation5 + $0xb08] sm:$0xff]
    %v2281 = vld [vmem:[#allocation5 + $0xb10] sm:$0xff]
    %v2282 = vld [vmem:[#allocation5 + $0xb18] sm:$0xff]
    %v2283 = vld [vmem:[#allocation5 + $0xb20] sm:$0xff]
    %v2284 = vld [vmem:[#allocation5 + $0xb28] sm:$0xff]
    %v2285 = vld [vmem:[#allocation5 + $0xb30] sm:$0xff]
    %v2286 = vld [vmem:[#allocation5 + $0xb38] sm:$0xff]
    %v2287 = vld [vmem:[#allocation5 + $0xb40] sm:$0xff]
    %v2288 = vld [vmem:[#allocation5 + $0xb48] sm:$0xff]
    %v2289 = vld [vmem:[#allocation5 + $0xb50] sm:$0xff]
    %v2290 = vld [vmem:[#allocation5 + $0xb58] sm:$0xff]
    %v2291 = vld [vmem:[#allocation5 + $0xb60] sm:$0xff]
    %v2292 = vld [vmem:[#allocation5 + $0xb68] sm:$0xff]
    %v2293 = vld [vmem:[#allocation5 + $0xb70] sm:$0xff]
    %v2294 = vld [vmem:[#allocation5 + $0xb78] sm:$0xff]
    %v2295 = vld [vmem:[#allocation5 + $0xb80] sm:$0xff]
    %v2296 = vld [vmem:[#allocation5 + $0xb88] sm:$0xff]
    %v2297 = vld [vmem:[#allocation5 + $0xb90] sm:$0xff]
    %v2298 = vld [vmem:[#allocation5 + $0xb98] sm:$0xff]
    %v2299 = vld [vmem:[#allocation5 + $0xba0] sm:$0xff]
    %v2300 = vld [vmem:[#allocation5 + $0xba8] sm:$0xff]
    %v2301 = vld [vmem:[#allocation5 + $0xbb0] sm:$0xff]
    %v2302 = vld [vmem:[#allocation5 + $0xbb8] sm:$0xff]
    %v2303 = vld [vmem:[#allocation5 + $0xbc0] sm:$0xff]
    %v2304 = vld [vmem:[#allocation5 + $0xbc8] sm:$0xff]
    %v2305 = vld [vmem:[#allocation5 + $0xbd0] sm:$0xff]
    %v2306 = vld [vmem:[#allocation5 + $0xbd8] sm:$0xff]
    %v2307 = vld [vmem:[#allocation5 + $0xbe0] sm:$0xff]
    %v2308 = vld [vmem:[#allocation5 + $0xbe8] sm:$0xff]
    %v2309 = vld [vmem:[#allocation5 + $0xbf0] sm:$0xff]
    %v2310 = vld [vmem:[#allocation5 + $0xbf8] sm:$0xff]
    %v2311 = vld [vmem:[#allocation5 + $0xc00] sm:$0xff]
    %v2312 = vld [vmem:[#allocation5 + $0xc08] sm:$0xff]
    %v2313 = vld [vmem:[#allocation5 + $0xc10] sm:$0xff]
    %v2314 = vld [vmem:[#allocation5 + $0xc18] sm:$0xff]
    %v2315 = vld [vmem:[#allocation5 + $0xc20] sm:$0xff]
    %v2316 = vld [vmem:[#allocation5 + $0xc28] sm:$0xff]
    %v2317 = vld [vmem:[#allocation5 + $0xc30] sm:$0xff]
    %v2318 = vld [vmem:[#allocation5 + $0xc38] sm:$0xff]
    %v2319 = vld [vmem:[#allocation5 + $0xc40] sm:$0xff]
    %v2320 = vld [vmem:[#allocation5 + $0xc48] sm:$0xff]
    %v2321 = vld [vmem:[#allocation5 + $0xc50] sm:$0xff]
    %v2322 = vld [vmem:[#allocation5 + $0xc58] sm:$0xff]
    %v2323 = vld [vmem:[#allocation5 + $0xc60] sm:$0xff]
    %v2324 = vld [vmem:[#allocation5 + $0xc68] sm:$0xff]
    %v2325 = vld [vmem:[#allocation5 + $0xc70] sm:$0xff]
    %v2326 = vld [vmem:[#allocation5 + $0xc78] sm:$0xff]
    %v2327 = vld [vmem:[#allocation5 + $0xc80] sm:$0xff]
    %v2328 = vld [vmem:[#allocation5 + $0xc88] sm:$0xff]
    %v2329 = vld [vmem:[#allocation5 + $0xc90] sm:$0xff]
    %v2330 = vld [vmem:[#allocation5 + $0xc98] sm:$0xff]
    %v2331 = vld [vmem:[#allocation5 + $0xca0] sm:$0xff]
    %v2332 = vld [vmem:[#allocation5 + $0xca8] sm:$0xff]
    %v2333 = vld [vmem:[#allocation5 + $0xcb0] sm:$0xff]
    %v2334 = vld [vmem:[#allocation5 + $0xcb8] sm:$0xff]
    %v2335 = vld [vmem:[#allocation5 + $0xcc0] sm:$0xff]
    %v2336 = vld [vmem:[#allocation5 + $0xcc8] sm:$0xff]
    %v2337 = vld [vmem:[#allocation5 + $0xcd0] sm:$0xff]
    %v2338 = vld [vmem:[#allocation5 + $0xcd8] sm:$0xff]
    %v2339 = vld [vmem:[#allocation5 + $0xce0] sm:$0xff]
    %v2340 = vld [vmem:[#allocation5 + $0xce8] sm:$0xff]
    %v2341 = vld [vmem:[#allocation5 + $0xcf0] sm:$0xff]
    %v2342 = vld [vmem:[#allocation5 + $0xcf8] sm:$0xff]
    %v2343 = vld [vmem:[#allocation5 + $0xd00] sm:$0xff]
    %v2344 = vld [vmem:[#allocation5 + $0xd08] sm:$0xff]
    %v2345 = vld [vmem:[#allocation5 + $0xd10] sm:$0xff]
    %v2346 = vld [vmem:[#allocation5 + $0xd18] sm:$0xff]
    %v2347 = vld [vmem:[#allocation5 + $0xd20] sm:$0xff]
    %v2348 = vld [vmem:[#allocation5 + $0xd28] sm:$0xff]
    %v2349 = vld [vmem:[#allocation5 + $0xd30] sm:$0xff]
    %v2350 = vld [vmem:[#allocation5 + $0xd38] sm:$0xff]
    %v2351 = vld [vmem:[#allocation5 + $0xd40] sm:$0xff]
    %v2352 = vld [vmem:[#allocation5 + $0xd48] sm:$0xff]
    %v2353 = vld [vmem:[#allocation5 + $0xd50] sm:$0xff]
    %v2354 = vld [vmem:[#allocation5 + $0xd58] sm:$0xff]
    %v2355 = vld [vmem:[#allocation5 + $0xd60] sm:$0xff]
    %v2356 = vld [vmem:[#allocation5 + $0xd68] sm:$0xff]
    %v2357 = vld [vmem:[#allocation5 + $0xd70] sm:$0xff]
    %v2358 = vld [vmem:[#allocation5 + $0xd78] sm:$0xff]
    %v2359 = vld [vmem:[#allocation5 + $0xd80] sm:$0xff]
    %v2360 = vld [vmem:[#allocation5 + $0xd88] sm:$0xff]
    %v2361 = vld [vmem:[#allocation5 + $0xd90] sm:$0xff]
    %v2362 = vld [vmem:[#allocation5 + $0xd98] sm:$0xff]
    %v2363 = vld [vmem:[#allocation5 + $0xda0] sm:$0xff]
    %v2364 = vld [vmem:[#allocation5 + $0xda8] sm:$0xff]
    %v2365 = vld [vmem:[#allocation5 + $0xdb0] sm:$0xff]
    %v2366 = vld [vmem:[#allocation5 + $0xdb8] sm:$0xff]
    %v2367 = vld [vmem:[#allocation5 + $0xdc0] sm:$0xff]
    %v2368 = vld [vmem:[#allocation5 + $0xdc8] sm:$0xff]
    %v2369 = vld [vmem:[#allocation5 + $0xdd0] sm:$0xff]
    %v2370 = vld [vmem:[#allocation5 + $0xdd8] sm:$0xff]
    %v2371 = vld [vmem:[#allocation5 + $0xde0] sm:$0xff]
    %v2372 = vld [vmem:[#allocation5 + $0xde8] sm:$0xff]
    %v2373 = vld [vmem:[#allocation5 + $0xdf0] sm:$0xff]
    %v2374 = vld [vmem:[#allocation5 + $0xdf8] sm:$0xff]
    %v2375 = vld [vmem:[#allocation5 + $0xe00] sm:$0xff]
    %v2376 = vld [vmem:[#allocation5 + $0xe08] sm:$0xff]
    %v2377 = vld [vmem:[#allocation5 + $0xe10] sm:$0xff]
    %v2378 = vld [vmem:[#allocation5 + $0xe18] sm:$0xff]
    %v2379 = vld [vmem:[#allocation5 + $0xe20] sm:$0xff]
    %v2380 = vld [vmem:[#allocation5 + $0xe28] sm:$0xff]
    %v2381 = vld [vmem:[#allocation5 + $0xe30] sm:$0xff]
    %v2382 = vld [vmem:[#allocation5 + $0xe38] sm:$0xff]
    %v2383 = vld [vmem:[#allocation5 + $0xe40] sm:$0xff]
    %v2384 = vld [vmem:[#allocation5 + $0xe48] sm:$0xff]
    %v2385 = vld [vmem:[#allocation5 + $0xe50] sm:$0xff]
    %v2386 = vld [vmem:[#allocation5 + $0xe58] sm:$0xff]
    %v2387 = vld [vmem:[#allocation5 + $0xe60] sm:$0xff]
    %v2388 = vld [vmem:[#allocation5 + $0xe68] sm:$0xff]
    %v2389 = vld [vmem:[#allocation5 + $0xe70] sm:$0xff]
    %v2390 = vld [vmem:[#allocation5 + $0xe78] sm:$0xff]
    %v2391 = vld [vmem:[#allocation5 + $0xe80] sm:$0xff]
    %v2392 = vld [vmem:[#allocation5 + $0xe88] sm:$0xff]
    %v2393 = vld [vmem:[#allocation5 + $0xe90] sm:$0xff]
    %v2394 = vld [vmem:[#allocation5 + $0xe98] sm:$0xff]
    %v2395 = vld [vmem:[#allocation5 + $0xea0] sm:$0xff]
    %v2396 = vld [vmem:[#allocation5 + $0xea8] sm:$0xff]
    %v2397 = vld [vmem:[#allocation5 + $0xeb0] sm:$0xff]
    %v2398 = vld [vmem:[#allocation5 + $0xeb8] sm:$0xff]
    %v2399 = vld [vmem:[#allocation5 + $0xec0] sm:$0xff]
    %v2400 = vld [vmem:[#allocation5 + $0xec8] sm:$0xff]
    %v2401 = vld [vmem:[#allocation5 + $0xed0] sm:$0xff]
    %v2402 = vld [vmem:[#allocation5 + $0xed8] sm:$0xff]
    %v2403 = vld [vmem:[#allocation5 + $0xee0] sm:$0xff]
    %v2404 = vld [vmem:[#allocation5 + $0xee8] sm:$0xff]
    %v2405 = vld [vmem:[#allocation5 + $0xef0] sm:$0xff]
    %v2406 = vld [vmem:[#allocation5 + $0xef8] sm:$0xff]
    %v2407 = vld [vmem:[#allocation5 + $0xf00] sm:$0xff]
    %v2408 = vld [vmem:[#allocation5 + $0xf08] sm:$0xff]
    %v2409 = vld [vmem:[#allocation5 + $0xf10] sm:$0xff]
    %v2410 = vld [vmem:[#allocation5 + $0xf18] sm:$0xff]
    %v2411 = vld [vmem:[#allocation5 + $0xf20] sm:$0xff]
    %v2412 = vld [vmem:[#allocation5 + $0xf28] sm:$0xff]
    %v2413 = vld [vmem:[#allocation5 + $0xf30] sm:$0xff]
    %v2414 = vld [vmem:[#allocation5 + $0xf38] sm:$0xff]
    %v2415 = vld [vmem:[#allocation5 + $0xf40] sm:$0xff]
    %v2416 = vld [vmem:[#allocation5 + $0xf48] sm:$0xff]
    %v2417 = vld [vmem:[#allocation5 + $0xf50] sm:$0xff]
    %v2418 = vld [vmem:[#allocation5 + $0xf58] sm:$0xff]
    %v2419 = vld [vmem:[#allocation5 + $0xf60] sm:$0xff]
    %v2420 = vld [vmem:[#allocation5 + $0xf68] sm:$0xff]
    %v2421 = vld [vmem:[#allocation5 + $0xf70] sm:$0xff]
    %v2422 = vld [vmem:[#allocation5 + $0xf78] sm:$0xff]
    %v2423 = vld [vmem:[#allocation5 + $0xf80] sm:$0xff]
    %v2424 = vld [vmem:[#allocation5 + $0xf88] sm:$0xff]
    %v2425 = vld [vmem:[#allocation5 + $0xf90] sm:$0xff]
    %v2426 = vld [vmem:[#allocation5 + $0xf98] sm:$0xff]
    %v2427 = vld [vmem:[#allocation5 + $0xfa0] sm:$0xff]
    %v2428 = vld [vmem:[#allocation5 + $0xfa8] sm:$0xff]
    %v2429 = vld [vmem:[#allocation5 + $0xfb0] sm:$0xff]
    %v2430 = vld [vmem:[#allocation5 + $0xfb8] sm:$0xff]
    %v2431 = vld [vmem:[#allocation5 + $0xfc0] sm:$0xff]
    %v2432 = vld [vmem:[#allocation5 + $0xfc8] sm:$0xff]
    %v2433 = vld [vmem:[#allocation5 + $0xfd0] sm:$0xff]
    %v2434 = vld [vmem:[#allocation5 + $0xfd8] sm:$0xff]
    %v2435 = vld [vmem:[#allocation5 + $0xfe0] sm:$0xff]
    %v2436 = vld [vmem:[#allocation5 + $0xfe8] sm:$0xff]
    %v2437 = vld [vmem:[#allocation5 + $0xff0] sm:$0xff]
    %v2438 = vld [vmem:[#allocation5 + $0xff8] sm:$0xff]
    %v2439 = vld [vmem:[#allocation5 + $0x1000] sm:$0xff]
    %v2440 = vld [vmem:[#allocation5 + $0x1008] sm:$0xff]
    %v2441 = vld [vmem:[#allocation5 + $0x1010] sm:$0xff]
    %v2442 = vld [vmem:[#allocation5 + $0x1018] sm:$0xff]
    %v2443 = vld [vmem:[#allocation5 + $0x1020] sm:$0xff]
    %v2444 = vld [vmem:[#allocation5 + $0x1028] sm:$0xff]
    %v2445 = vld [vmem:[#allocation5 + $0x1030] sm:$0xff]
    %v2446 = vld [vmem:[#allocation5 + $0x1038] sm:$0xff]
    %v2447 = vld [vmem:[#allocation5 + $0x1040] sm:$0xff]
    %v2448 = vld [vmem:[#allocation5 + $0x1048] sm:$0xff]
    %v2449 = vld [vmem:[#allocation5 + $0x1050] sm:$0xff]
    %v2450 = vld [vmem:[#allocation5 + $0x1058] sm:$0xff]
    %v2451 = vld [vmem:[#allocation5 + $0x1060] sm:$0xff]
    %v2452 = vld [vmem:[#allocation5 + $0x1068] sm:$0xff]
    %v2453 = vld [vmem:[#allocation5 + $0x1070] sm:$0xff]
    %v2454 = vld [vmem:[#allocation5 + $0x1078] sm:$0xff]
    %v2455 = vld [vmem:[#allocation5 + $0x1080] sm:$0xff]
    %v2456 = vld [vmem:[#allocation5 + $0x1088] sm:$0xff]
    %v2457 = vld [vmem:[#allocation5 + $0x1090] sm:$0xff]
    %v2458 = vld [vmem:[#allocation5 + $0x1098] sm:$0xff]
    %v2459 = vld [vmem:[#allocation5 + $0x10a0] sm:$0xff]
    %v2460 = vld [vmem:[#allocation5 + $0x10a8] sm:$0xff]
    %v2461 = vld [vmem:[#allocation5 + $0x10b0] sm:$0xff]
    %v2462 = vld [vmem:[#allocation5 + $0x10b8] sm:$0xff]
    %v2463 = vld [vmem:[#allocation5 + $0x10c0] sm:$0xff]
    %v2464 = vld [vmem:[#allocation5 + $0x10c8] sm:$0xff]
    %v2465 = vld [vmem:[#allocation5 + $0x10d0] sm:$0xff]
    %v2466 = vld [vmem:[#allocation5 + $0x10d8] sm:$0xff]
    %v2467 = vld [vmem:[#allocation5 + $0x10e0] sm:$0xff]
    %v2468 = vld [vmem:[#allocation5 + $0x10e8] sm:$0xff]
    %v2469 = vld [vmem:[#allocation5 + $0x10f0] sm:$0xff]
    %v2470 = vld [vmem:[#allocation5 + $0x10f8] sm:$0xff]
    %v2471 = vld [vmem:[#allocation5 + $0x1100] sm:$0xff]
    %v2472 = vld [vmem:[#allocation5 + $0x1108] sm:$0xff]
    %v2473 = vld [vmem:[#allocation5 + $0x1110] sm:$0xff]
    %v2474 = vld [vmem:[#allocation5 + $0x1118] sm:$0xff]
    %v2475 = vld [vmem:[#allocation5 + $0x1120] sm:$0xff]
    %v2476 = vld [vmem:[#allocation5 + $0x1128] sm:$0xff]
    %v2477 = vld [vmem:[#allocation5 + $0x1130] sm:$0xff]
    %v2478 = vld [vmem:[#allocation5 + $0x1138] sm:$0xff]
    %v2479 = vld [vmem:[#allocation5 + $0x1140] sm:$0xff]
    %v2480 = vld [vmem:[#allocation5 + $0x1148] sm:$0xff]
    %v2481 = vld [vmem:[#allocation5 + $0x1150] sm:$0xff]
    %v2482 = vld [vmem:[#allocation5 + $0x1158] sm:$0xff]
    %v2483 = vld [vmem:[#allocation5 + $0x1160] sm:$0xff]
    %v2484 = vld [vmem:[#allocation5 + $0x1168] sm:$0xff]
    %v2485 = vld [vmem:[#allocation5 + $0x1170] sm:$0xff]
    %v2486 = vld [vmem:[#allocation5 + $0x1178] sm:$0xff]
    %v2487 = vld [vmem:[#allocation5 + $0x1180] sm:$0xff]
    %v2488 = vld [vmem:[#allocation5 + $0x1188] sm:$0xff]
    %v2489 = vld [vmem:[#allocation5 + $0x1190] sm:$0xff]
    %v2490 = vld [vmem:[#allocation5 + $0x1198] sm:$0xff]
    %v2491 = vld [vmem:[#allocation5 + $0x11a0] sm:$0xff]
    %v2492 = vld [vmem:[#allocation5 + $0x11a8] sm:$0xff]
    %v2493 = vld [vmem:[#allocation5 + $0x11b0] sm:$0xff]
    %v2494 = vld [vmem:[#allocation5 + $0x11b8] sm:$0xff]
    %v2495 = vld [vmem:[#allocation5 + $0x11c0] sm:$0xff]
    %v2496 = vld [vmem:[#allocation5 + $0x11c8] sm:$0xff]
    %v2497 = vld [vmem:[#allocation5 + $0x11d0] sm:$0xff]
    %v2498 = vld [vmem:[#allocation5 + $0x11d8] sm:$0xff]
    %v2499 = vld [vmem:[#allocation5 + $0x11e0] sm:$0xff]
    %v2500 = vld [vmem:[#allocation5 + $0x11e8] sm:$0xff]
    %v2501 = vld [vmem:[#allocation5 + $0x11f0] sm:$0xff]
    %v2502 = vld [vmem:[#allocation5 + $0x11f8] sm:$0xff]
    %v2503 = vld [vmem:[#allocation5 + $0x1200] sm:$0xff]
    %v2504 = vld [vmem:[#allocation5 + $0x1208] sm:$0xff]
    %v2505 = vld [vmem:[#allocation5 + $0x1210] sm:$0xff]
    %v2506 = vld [vmem:[#allocation5 + $0x1218] sm:$0xff]
    %v2507 = vld [vmem:[#allocation5 + $0x1220] sm:$0xff]
    %v2508 = vld [vmem:[#allocation5 + $0x1228] sm:$0xff]
    %v2509 = vld [vmem:[#allocation5 + $0x1230] sm:$0xff]
    %v2510 = vld [vmem:[#allocation5 + $0x1238] sm:$0xff]
    %v2511 = vld [vmem:[#allocation5 + $0x1240] sm:$0xff]
    %v2512 = vld [vmem:[#allocation5 + $0x1248] sm:$0xff]
    %v2513 = vld [vmem:[#allocation5 + $0x1250] sm:$0xff]
    %v2514 = vld [vmem:[#allocation5 + $0x1258] sm:$0xff]
    %v2515 = vld [vmem:[#allocation5 + $0x1260] sm:$0xff]
    %v2516 = vld [vmem:[#allocation5 + $0x1268] sm:$0xff]
    %v2517 = vld [vmem:[#allocation5 + $0x1270] sm:$0xff]
    %v2518 = vld [vmem:[#allocation5 + $0x1278] sm:$0xff]
    %v2519 = vld [vmem:[#allocation5 + $0x1280] sm:$0xff]
    %v2520 = vld [vmem:[#allocation5 + $0x1288] sm:$0xff]
    %v2521 = vld [vmem:[#allocation5 + $0x1290] sm:$0xff]
    %v2522 = vld [vmem:[#allocation5 + $0x1298] sm:$0xff]
    %v2523 = vld [vmem:[#allocation5 + $0x12a0] sm:$0xff]
    %v2524 = vld [vmem:[#allocation5 + $0x12a8] sm:$0xff]
    %v2525 = vld [vmem:[#allocation5 + $0x12b0] sm:$0xff]
    %v2526 = vld [vmem:[#allocation5 + $0x12b8] sm:$0xff]
    %v2527 = vld [vmem:[#allocation5 + $0x12c0] sm:$0xff]
    %v2528 = vld [vmem:[#allocation5 + $0x12c8] sm:$0xff]
    %v2529 = vld [vmem:[#allocation5 + $0x12d0] sm:$0xff]
    %v2530 = vld [vmem:[#allocation5 + $0x12d8] sm:$0xff]
    %v2531 = vld [vmem:[#allocation5 + $0x12e0] sm:$0xff]
    %v2532 = vld [vmem:[#allocation5 + $0x12e8] sm:$0xff]
    %v2533 = vld [vmem:[#allocation5 + $0x12f0] sm:$0xff]
    %v2534 = vld [vmem:[#allocation5 + $0x12f8] sm:$0xff]
    %v2535 = vld [vmem:[#allocation5 + $0x1300] sm:$0xff]
    %v2536 = vld [vmem:[#allocation5 + $0x1308] sm:$0xff]
    %v2537 = vld [vmem:[#allocation5 + $0x1310] sm:$0xff]
    %v2538 = vld [vmem:[#allocation5 + $0x1318] sm:$0xff]
    %v2539 = vld [vmem:[#allocation5 + $0x1320] sm:$0xff]
    %v2540 = vld [vmem:[#allocation5 + $0x1328] sm:$0xff]
    %v2541 = vld [vmem:[#allocation5 + $0x1330] sm:$0xff]
    %v2542 = vld [vmem:[#allocation5 + $0x1338] sm:$0xff]
    %v2543 = vld [vmem:[#allocation5 + $0x1340] sm:$0xff]
    %v2544 = vld [vmem:[#allocation5 + $0x1348] sm:$0xff]
    %v2545 = vld [vmem:[#allocation5 + $0x1350] sm:$0xff]
    %v2546 = vld [vmem:[#allocation5 + $0x1358] sm:$0xff]
    %v2547 = vld [vmem:[#allocation5 + $0x1360] sm:$0xff]
    %v2548 = vld [vmem:[#allocation5 + $0x1368] sm:$0xff]
    %v2549 = vld [vmem:[#allocation5 + $0x1370] sm:$0xff]
    %v2550 = vld [vmem:[#allocation5 + $0x1378] sm:$0xff]
    %v2551 = vld [vmem:[#allocation5 + $0x1380] sm:$0xff]
    %v2552 = vld [vmem:[#allocation5 + $0x1388] sm:$0xff]
    %v2553 = vld [vmem:[#allocation5 + $0x1390] sm:$0xff]
    %v2554 = vld [vmem:[#allocation5 + $0x1398] sm:$0xff]
    %v2555 = vld [vmem:[#allocation5 + $0x13a0] sm:$0xff]
    %v2556 = vld [vmem:[#allocation5 + $0x13a8] sm:$0xff]
    %v2557 = vld [vmem:[#allocation5 + $0x13b0] sm:$0xff]
    %v2558 = vld [vmem:[#allocation5 + $0x13b8] sm:$0xff]
    %v2559 = vld [vmem:[#allocation5 + $0x13c0] sm:$0xff]
    %v2560 = vld [vmem:[#allocation5 + $0x13c8] sm:$0xff]
    %v2561 = vld [vmem:[#allocation5 + $0x13d0] sm:$0xff]
    %v2562 = vld [vmem:[#allocation5 + $0x13d8] sm:$0xff]
    %v2563 = vld [vmem:[#allocation5 + $0x13e0] sm:$0xff]
    %v2564 = vld [vmem:[#allocation5 + $0x13e8] sm:$0xff]
    %v2565 = vld [vmem:[#allocation5 + $0x13f0] sm:$0xff]
    %v2566 = vld [vmem:[#allocation5 + $0x13f8] sm:$0xff]
    %v2567 = vld [vmem:[#allocation15] sm:$0x3]
    %v2569 = vlaneseq
    %v2570 = vshrl.u32 %v2569, 7
    %v2571 = vsub.s32 0, %v2570
    %v2572 = vrot.slane %v2567, %v2571
    %v2573 = vlaneseq
    %v2574 = vshrl.u32 %v2573, 7
    %v2575 = vsub.s32 1, %v2574
    %v2576 = vrot.slane %v2567, %v2575
    %2579 = vmatprep.subr.bf16.mxu0 %v2280
    %2580 = vmatpush1.bf16.msra.mxu0 %v2279
    %2581 = vmatprep.subr.bf16.mxu0 %v2282
    %2582 = vmatpush1.bf16.msra.mxu0 %v2281
    %2583 = vmatprep.subr.bf16.mxu0 %v2284
    %2584 = vmatpush1.bf16.msra.mxu0 %v2283
    %2585 = vmatprep.subr.bf16.mxu0 %v2286
    %2586 = vmatpush1.bf16.msra.mxu0 %v2285
    %2587 = vmatprep.subr.bf16.mxu0 %v2288
    %2588 = vmatpush1.bf16.msra.mxu0 %v2287
    %2589 = vmatprep.subr.bf16.mxu0 %v2290
    %2590 = vmatpush1.bf16.msra.mxu0 %v2289
    %2591 = vmatprep.subr.bf16.mxu0 %v2292
    %2592 = vmatpush1.bf16.msra.mxu0 %v2291
    %2593 = vmatprep.subr.bf16.mxu0 %v2294
    %2594 = vmatpush1.bf16.msra.mxu0 %v2293
    %2595 = vmatprep.subr.bf16.mxu0 %v2296
    %2596 = vmatpush1.bf16.msra.mxu0 %v2295
    %2597 = vmatprep.subr.bf16.mxu0 %v2298
    %2598 = vmatpush1.bf16.msra.mxu0 %v2297
    %2599 = vmatprep.subr.bf16.mxu0 %v2300
    %2600 = vmatpush1.bf16.msra.mxu0 %v2299
    %2601 = vmatprep.subr.bf16.mxu0 %v2302
    %2602 = vmatpush1.bf16.msra.mxu0 %v2301
    %2603 = vmatprep.subr.bf16.mxu0 %v2304
    %2604 = vmatpush1.bf16.msra.mxu0 %v2303
    %2605 = vmatprep.subr.bf16.mxu0 %v2306
    %2606 = vmatpush1.bf16.msra.mxu0 %v2305
    %2607 = vmatprep.subr.bf16.mxu0 %v2308
    %2608 = vmatpush1.bf16.msra.mxu0 %v2307
    %2609 = vmatprep.subr.bf16.mxu0 %v2310
    %2610 = vmatpush1.bf16.msra.mxu0 %v2309
    %2611 = vmatprep.mubr.bf16.mxu0 %v2244
    %2612 = vmatmul.mubr.bf16.gmra.mrb[0].mxu0 %v2243
    %v2613 = vpop.f32.mrb[0].mxu0
    %v2614 = vadd.f32 %v2572, %v2613
    %v2615 = vpop.f32.mrb[0].mxu0
    %v2616 = vadd.f32 %v2576, %v2615
    %v2617 = vpop.f32.mrb[0].mxu0
    %v2618 = vadd.f32 %v2572, %v2617
    %v2619 = vpop.f32.mrb[0].mxu0
    %v2620 = vadd.f32 %v2576, %v2619
    %2621 = vmatprep.mubr.bf16.mxu0 %v2262
    %2622 = vmatmul.mubr.bf16.gmra.mrb[0].mxu0 %v2261
    %v2623 = vpop.f32.mrb[0].mxu0
    %v2624 = vadd.f32 %v2572, %v2623
    %v2625 = vpop.f32.mrb[0].mxu0
    %v2626 = vadd.f32 %v2576, %v2625
    %v2627 = vpop.f32.mrb[0].mxu0
    %v2628 = vadd.f32 %v2572, %v2627
    %v2629 = vpop.f32.mrb[0].mxu0
    %v2630 = vadd.f32 %v2576, %v2629
    %2631 = vdwg.mxu0
    %2632 = vmatprep.subr.bf16.mxu0 %v2312
    %2633 = vmatpush1.bf16.msra.mxu0 %v2311
    %2634 = vmatprep.subr.bf16.mxu0 %v2314
    %2635 = vmatpush1.bf16.msra.mxu0 %v2313
    %2636 = vmatprep.subr.bf16.mxu0 %v2316
    %2637 = vmatpush1.bf16.msra.mxu0 %v2315
    %2638 = vmatprep.subr.bf16.mxu0 %v2318
    %2639 = vmatpush1.bf16.msra.mxu0 %v2317
    %2640 = vmatprep.subr.bf16.mxu0 %v2320
    %2641 = vmatpush1.bf16.msra.mxu0 %v2319
    %2642 = vmatprep.subr.bf16.mxu0 %v2322
    %2643 = vmatpush1.bf16.msra.mxu0 %v2321
    %2644 = vmatprep.subr.bf16.mxu0 %v2324
    %2645 = vmatpush1.bf16.msra.mxu0 %v2323
    %2646 = vmatprep.subr.bf16.mxu0 %v2326
    %2647 = vmatpush1.bf16.msra.mxu0 %v2325
    %2648 = vmatprep.subr.bf16.mxu0 %v2328
    %2649 = vmatpush1.bf16.msra.mxu0 %v2327
    %2650 = vmatprep.subr.bf16.mxu0 %v2330
    %2651 = vmatpush1.bf16.msra.mxu0 %v2329
    %2652 = vmatprep.subr.bf16.mxu0 %v2332
    %2653 = vmatpush1.bf16.msra.mxu0 %v2331
    %2654 = vmatprep.subr.bf16.mxu0 %v2334
    %2655 = vmatpush1.bf16.msra.mxu0 %v2333
    %2656 = vmatprep.subr.bf16.mxu0 %v2336
    %2657 = vmatpush1.bf16.msra.mxu0 %v2335
    %2658 = vmatprep.subr.bf16.mxu0 %v2338
    %2659 = vmatpush1.bf16.msra.mxu0 %v2337
    %2660 = vmatprep.subr.bf16.mxu0 %v2340
    %2661 = vmatpush1.bf16.msra.mxu0 %v2339
    %2662 = vmatprep.subr.bf16.mxu0 %v2342
    %2663 = vmatpush1.bf16.msra.mxu0 %v2341
    %2664 = vmatprep.mubr.bf16.mxu0 %v2246
    %2665 = vmatmul.mubr.bf16.gmra.mrb[0].mxu0 %v2245
    %v2666 = vpop.f32.mrb[0].mxu0
    %v2667 = vadd.f32 %v2614, %v2666
    %v2668 = vpop.f32.mrb[0].mxu0
    %v2669 = vadd.f32 %v2616, %v2668
    %v2670 = vpop.f32.mrb[0].mxu0
    %v2671 = vadd.f32 %v2618, %v2670
    %v2672 = vpop.f32.mrb[0].mxu0
    %v2673 = vadd.f32 %v2620, %v2672
    %2674 = vmatprep.mubr.bf16.mxu0 %v2264
    %2675 = vmatmul.mubr.bf16.gmra.mrb[0].mxu0 %v2263
    %v2676 = vpop.f32.mrb[0].mxu0
    %v2677 = vadd.f32 %v2624, %v2676
    %v2678 = vpop.f32.mrb[0].mxu0
    %v2679 = vadd.f32 %v2626, %v2678
    %v2680 = vpop.f32.mrb[0].mxu0
    %v2681 = vadd.f32 %v2628, %v2680
    %v2682 = vpop.f32.mrb[0].mxu0
    %v2683 = vadd.f32 %v2630, %v2682
    %2684 = vdwg.mxu0
    %2685 = vmatprep.subr.bf16.mxu0 %v2344
    %2686 = vmatpush1.bf16.msra.mxu0 %v2343
    %2687 = vmatprep.subr.bf16.mxu0 %v2346
    %2688 = vmatpush1.bf16.msra.mxu0 %v2345
    %2689 = vmatprep.subr.bf16.mxu0 %v2348
    %2690 = vmatpush1.bf16.msra.mxu0 %v2347
    %2691 = vmatprep.subr.bf16.mxu0 %v2350
    %2692 = vmatpush1.bf16.msra.mxu0 %v2349
    %2693 = vmatprep.subr.bf16.mxu0 %v2352
    %2694 = vmatpush1.bf16.msra.mxu0 %v2351
    %2695 = vmatprep.subr.bf16.mxu0 %v2354
    %2696 = vmatpush1.bf16.msra.mxu0 %v2353
    %2697 = vmatprep.subr.bf16.mxu0 %v2356
    %2698 = vmatpush1.bf16.msra.mxu0 %v2355
    %2699 = vmatprep.subr.bf16.mxu0 %v2358
    %2700 = vmatpush1.bf16.msra.mxu0 %v2357
    %2701 = vmatprep.subr.bf16.mxu0 %v2360
    %2702 = vmatpush1.bf16.msra.mxu0 %v2359
    %2703 = vmatprep.subr.bf16.mxu0 %v2362
    %2704 = vmatpush1.bf16.msra.mxu0 %v2361
    %2705 = vmatprep.subr.bf16.mxu0 %v2364
    %2706 = vmatpush1.bf16.msra.mxu0 %v2363
    %2707 = vmatprep.subr.bf16.mxu0 %v2366
    %2708 = vmatpush1.bf16.msra.mxu0 %v2365
    %2709 = vmatprep.subr.bf16.mxu0 %v2368
    %2710 = vmatpush1.bf16.msra.mxu0 %v2367
    %2711 = vmatprep.subr.bf16.mxu0 %v2370
    %2712 = vmatpush1.bf16.msra.mxu0 %v2369
    %2713 = vmatprep.subr.bf16.mxu0 %v2372
    %2714 = vmatpush1.bf16.msra.mxu0 %v2371
    %2715 = vmatprep.subr.bf16.mxu0 %v2374
    %2716 = vmatpush1.bf16.msra.mxu0 %v2373
    %2717 = vmatprep.mubr.bf16.mxu0 %v2248
    %2718 = vmatmul.mubr.bf16.gmra.mrb[0].mxu0 %v2247
    %v2719 = vpop.f32.mrb[0].mxu0
    %v2720 = vadd.f32 %v2667, %v2719
    %v2721 = vpop.f32.mrb[0].mxu0
    %v2722 = vadd.f32 %v2669, %v2721
    %v2723 = vpop.f32.mrb[0].mxu0
    %v2724 = vadd.f32 %v2671, %v2723
    %v2725 = vpop.f32.mrb[0].mxu0
    %v2726 = vadd.f32 %v2673, %v2725
    %2727 = vmatprep.mubr.bf16.mxu0 %v2266
    %2728 = vmatmul.mubr.bf16.gmra.mrb[0].mxu0 %v2265
    %v2729 = vpop.f32.mrb[0].mxu0
    %v2730 = vadd.f32 %v2677, %v2729
    %v2731 = vpop.f32.mrb[0].mxu0
    %v2732 = vadd.f32 %v2679, %v2731
    %v2733 = vpop.f32.mrb[0].mxu0
    %v2734 = vadd.f32 %v2681, %v2733
    %v2735 = vpop.f32.mrb[0].mxu0
    %v2736 = vadd.f32 %v2683, %v2735
    %2737 = vdwg.mxu0
    %2738 = vmatprep.subr.bf16.mxu0 %v2376
    %2739 = vmatpush1.bf16.msra.mxu0 %v2375
    %2740 = vmatprep.subr.bf16.mxu0 %v2378
    %2741 = vmatpush1.bf16.msra.mxu0 %v2377
    %2742 = vmatprep.subr.bf16.mxu0 %v2380
    %2743 = vmatpush1.bf16.msra.mxu0 %v2379
    %2744 = vmatprep.subr.bf16.mxu0 %v2382
    %2745 = vmatpush1.bf16.msra.mxu0 %v2381
    %2746 = vmatprep.subr.bf16.mxu0 %v2384
    %2747 = vmatpush1.bf16.msra.mxu0 %v2383
    %2748 = vmatprep.subr.bf16.mxu0 %v2386
    %2749 = vmatpush1.bf16.msra.mxu0 %v2385
    %2750 = vmatprep.subr.bf16.mxu0 %v2388
    %2751 = vmatpush1.bf16.msra.mxu0 %v2387
    %2752 = vmatprep.subr.bf16.mxu0 %v2390
    %2753 = vmatpush1.bf16.msra.mxu0 %v2389
    %2754 = vmatprep.subr.bf16.mxu0 %v2392
    %2755 = vmatpush1.bf16.msra.mxu0 %v2391
    %2756 = vmatprep.subr.bf16.mxu0 %v2394
    %2757 = vmatpush1.bf16.msra.mxu0 %v2393
    %2758 = vmatprep.subr.bf16.mxu0 %v2396
    %2759 = vmatpush1.bf16.msra.mxu0 %v2395
    %2760 = vmatprep.subr.bf16.mxu0 %v2398
    %2761 = vmatpush1.bf16.msra.mxu0 %v2397
    %2762 = vmatprep.subr.bf16.mxu0 %v2400
    %2763 = vmatpush1.bf16.msra.mxu0 %v2399
    %2764 = vmatprep.subr.bf16.mxu0 %v2402
    %2765 = vmatpush1.bf16.msra.mxu0 %v2401
    %2766 = vmatprep.subr.bf16.mxu0 %v2404
    %2767 = vmatpush1.bf16.msra.mxu0 %v2403
    %2768 = vmatprep.subr.bf16.mxu0 %v2406
    %2769 = vmatpush1.bf16.msra.mxu0 %v2405
    %2770 = vmatprep.mubr.bf16.mxu0 %v2250
    %2771 = vmatmul.mubr.bf16.gmra.mrb[0].mxu0 %v2249
    %v2772 = vpop.f32.mrb[0].mxu0
    %v2773 = vadd.f32 %v2720, %v2772
    %v2774 = vpop.f32.mrb[0].mxu0
    %v2775 = vadd.f32 %v2722, %v2774
    %v2776 = vpop.f32.mrb[0].mxu0
    %v2777 = vadd.f32 %v2724, %v2776
    %v2778 = vpop.f32.mrb[0].mxu0
    %v2779 = vadd.f32 %v2726, %v2778
    %2780 = vmatprep.mubr.bf16.mxu0 %v2268
    %2781 = vmatmul.mubr.bf16.gmra.mrb[0].mxu0 %v2267
    %v2782 = vpop.f32.mrb[0].mxu0
    %v2783 = vadd.f32 %v2730, %v2782
    %v2784 = vpop.f32.mrb[0].mxu0
    %v2785 = vadd.f32 %v2732, %v2784
    %v2786 = vpop.f32.mrb[0].mxu0
    %v2787 = vadd.f32 %v2734, %v2786
    %v2788 = vpop.f32.mrb[0].mxu0
    %v2789 = vadd.f32 %v2736, %v2788
    %2790 = vdwg.mxu0
    %2791 = vmatprep.subr.bf16.mxu0 %v2408
    %2792 = vmatpush1.bf16.msra.mxu0 %v2407
    %2793 = vmatprep.subr.bf16.mxu0 %v2410
    %2794 = vmatpush1.bf16.msra.mxu0 %v2409
    %2795 = vmatprep.subr.bf16.mxu0 %v2412
    %2796 = vmatpush1.bf16.msra.mxu0 %v2411
    %2797 = vmatprep.subr.bf16.mxu0 %v2414
    %2798 = vmatpush1.bf16.msra.mxu0 %v2413
    %2799 = vmatprep.subr.bf16.mxu0 %v2416
    %2800 = vmatpush1.bf16.msra.mxu0 %v2415
    %2801 = vmatprep.subr.bf16.mxu0 %v2418
    %2802 = vmatpush1.bf16.msra.mxu0 %v2417
    %2803 = vmatprep.subr.bf16.mxu0 %v2420
    %2804 = vmatpush1.bf16.msra.mxu0 %v2419
    %2805 = vmatprep.subr.bf16.mxu0 %v2422
    %2806 = vmatpush1.bf16.msra.mxu0 %v2421
    %2807 = vmatprep.subr.bf16.mxu0 %v2424
    %2808 = vmatpush1.bf16.msra.mxu0 %v2423
    %2809 = vmatprep.subr.bf16.mxu0 %v2426
    %2810 = vmatpush1.bf16.msra.mxu0 %v2425
    %2811 = vmatprep.subr.bf16.mxu0 %v2428
    %2812 = vmatpush1.bf16.msra.mxu0 %v2427
    %2813 = vmatprep.subr.bf16.mxu0 %v2430
    %2814 = vmatpush1.bf16.msra.mxu0 %v2429
    %2815 = vmatprep.subr.bf16.mxu0 %v2432
    %2816 = vmatpush1.bf16.msra.mxu0 %v2431
    %2817 = vmatprep.subr.bf16.mxu0 %v2434
    %2818 = vmatpush1.bf16.msra.mxu0 %v2433
    %2819 = vmatprep.subr.bf16.mxu0 %v2436
    %2820 = vmatpush1.bf16.msra.mxu0 %v2435
    %2821 = vmatprep.subr.bf16.mxu0 %v2438
    %2822 = vmatpush1.bf16.msra.mxu0 %v2437
    %2823 = vmatprep.mubr.bf16.mxu0 %v2252
    %2824 = vmatmul.mubr.bf16.gmra.mrb[0].mxu0 %v2251
    %v2825 = vpop.f32.mrb[0].mxu0
    %v2826 = vadd.f32 %v2773, %v2825
    %v2827 = vpop.f32.mrb[0].mxu0
    %v2828 = vadd.f32 %v2775, %v2827
    %v2829 = vpop.f32.mrb[0].mxu0
    %v2830 = vadd.f32 %v2777, %v2829
    %v2831 = vpop.f32.mrb[0].mxu0
    %v2832 = vadd.f32 %v2779, %v2831
    %2833 = vmatprep.mubr.bf16.mxu0 %v2270
    %2834 = vmatmul.mubr.bf16.gmra.mrb[0].mxu0 %v2269
    %v2835 = vpop.f32.mrb[0].mxu0
    %v2836 = vadd.f32 %v2783, %v2835
    %v2837 = vpop.f32.mrb[0].mxu0
    %v2838 = vadd.f32 %v2785, %v2837
    %v2839 = vpop.f32.mrb[0].mxu0
    %v2840 = vadd.f32 %v2787, %v2839
    %v2841 = vpop.f32.mrb[0].mxu0
    %v2842 = vadd.f32 %v2789, %v2841
    %2843 = vdwg.mxu0
    %2844 = vmatprep.subr.bf16.mxu0 %v2440
    %2845 = vmatpush1.bf16.msra.mxu0 %v2439
    %2846 = vmatprep.subr.bf16.mxu0 %v2442
    %2847 = vmatpush1.bf16.msra.mxu0 %v2441
    %2848 = vmatprep.subr.bf16.mxu0 %v2444
    %2849 = vmatpush1.bf16.msra.mxu0 %v2443
    %2850 = vmatprep.subr.bf16.mxu0 %v2446
    %2851 = vmatpush1.bf16.msra.mxu0 %v2445
    %2852 = vmatprep.subr.bf16.mxu0 %v2448
    %2853 = vmatpush1.bf16.msra.mxu0 %v2447
    %2854 = vmatprep.subr.bf16.mxu0 %v2450
    %2855 = vmatpush1.bf16.msra.mxu0 %v2449
    %2856 = vmatprep.subr.bf16.mxu0 %v2452
    %2857 = vmatpush1.bf16.msra.mxu0 %v2451
    %2858 = vmatprep.subr.bf16.mxu0 %v2454
    %2859 = vmatpush1.bf16.msra.mxu0 %v2453
    %2860 = vmatprep.subr.bf16.mxu0 %v2456
    %2861 = vmatpush1.bf16.msra.mxu0 %v2455
    %2862 = vmatprep.subr.bf16.mxu0 %v2458
    %2863 = vmatpush1.bf16.msra.mxu0 %v2457
    %2864 = vmatprep.subr.bf16.mxu0 %v2460
    %2865 = vmatpush1.bf16.msra.mxu0 %v2459
    %2866 = vmatprep.subr.bf16.mxu0 %v2462
    %2867 = vmatpush1.bf16.msra.mxu0 %v2461
    %2868 = vmatprep.subr.bf16.mxu0 %v2464
    %2869 = vmatpush1.bf16.msra.mxu0 %v2463
    %2870 = vmatprep.subr.bf16.mxu0 %v2466
    %2871 = vmatpush1.bf16.msra.mxu0 %v2465
    %2872 = vmatprep.subr.bf16.mxu0 %v2468
    %2873 = vmatpush1.bf16.msra.mxu0 %v2467
    %2874 = vmatprep.subr.bf16.mxu0 %v2470
    %2875 = vmatpush1.bf16.msra.mxu0 %v2469
    %2876 = vmatprep.mubr.bf16.mxu0 %v2254
    %2877 = vmatmul.mubr.bf16.gmra.mrb[0].mxu0 %v2253
    %v2878 = vpop.f32.mrb[0].mxu0
    %v2879 = vadd.f32 %v2826, %v2878
    %v2880 = vpop.f32.mrb[0].mxu0
    %v2881 = vadd.f32 %v2828, %v2880
    %v2882 = vpop.f32.mrb[0].mxu0
    %v2883 = vadd.f32 %v2830, %v2882
    %v2884 = vpop.f32.mrb[0].mxu0
    %v2885 = vadd.f32 %v2832, %v2884
    %2886 = vmatprep.mubr.bf16.mxu0 %v2272
    %2887 = vmatmul.mubr.bf16.gmra.mrb[0].mxu0 %v2271
    %v2888 = vpop.f32.mrb[0].mxu0
    %v2889 = vadd.f32 %v2836, %v2888
    %v2890 = vpop.f32.mrb[0].mxu0
    %v2891 = vadd.f32 %v2838, %v2890
    %v2892 = vpop.f32.mrb[0].mxu0
    %v2893 = vadd.f32 %v2840, %v2892
    %v2894 = vpop.f32.mrb[0].mxu0
    %v2895 = vadd.f32 %v2842, %v2894
    %2896 = vdwg.mxu0
    %2897 = vmatprep.subr.bf16.mxu0 %v2472
    %2898 = vmatpush1.bf16.msra.mxu0 %v2471
    %2899 = vmatprep.subr.bf16.mxu0 %v2474
    %2900 = vmatpush1.bf16.msra.mxu0 %v2473
    %2901 = vmatprep.subr.bf16.mxu0 %v2476
    %2902 = vmatpush1.bf16.msra.mxu0 %v2475
    %2903 = vmatprep.subr.bf16.mxu0 %v2478
    %2904 = vmatpush1.bf16.msra.mxu0 %v2477
    %2905 = vmatprep.subr.bf16.mxu0 %v2480
    %2906 = vmatpush1.bf16.msra.mxu0 %v2479
    %2907 = vmatprep.subr.bf16.mxu0 %v2482
    %2908 = vmatpush1.bf16.msra.mxu0 %v2481
    %2909 = vmatprep.subr.bf16.mxu0 %v2484
    %2910 = vmatpush1.bf16.msra.mxu0 %v2483
    %2911 = vmatprep.subr.bf16.mxu0 %v2486
    %2912 = vmatpush1.bf16.msra.mxu0 %v2485
    %2913 = vmatprep.subr.bf16.mxu0 %v2488
    %2914 = vmatpush1.bf16.msra.mxu0 %v2487
    %2915 = vmatprep.subr.bf16.mxu0 %v2490
    %2916 = vmatpush1.bf16.msra.mxu0 %v2489
    %2917 = vmatprep.subr.bf16.mxu0 %v2492
    %2918 = vmatpush1.bf16.msra.mxu0 %v2491
    %2919 = vmatprep.subr.bf16.mxu0 %v2494
    %2920 = vmatpush1.bf16.msra.mxu0 %v2493
    %2921 = vmatprep.subr.bf16.mxu0 %v2496
    %2922 = vmatpush1.bf16.msra.mxu0 %v2495
    %2923 = vmatprep.subr.bf16.mxu0 %v2498
    %2924 = vmatpush1.bf16.msra.mxu0 %v2497
    %2925 = vmatprep.subr.bf16.mxu0 %v2500
    %2926 = vmatpush1.bf16.msra.mxu0 %v2499
    %2927 = vmatprep.subr.bf16.mxu0 %v2502
    %2928 = vmatpush1.bf16.msra.mxu0 %v2501
    %2929 = vmatprep.mubr.bf16.mxu0 %v2256
    %2930 = vmatmul.mubr.bf16.gmra.mrb[0].mxu0 %v2255
    %v2931 = vpop.f32.mrb[0].mxu0
    %v2932 = vadd.f32 %v2879, %v2931
    %v2933 = vpop.f32.mrb[0].mxu0
    %v2934 = vadd.f32 %v2881, %v2933
    %v2935 = vpop.f32.mrb[0].mxu0
    %v2936 = vadd.f32 %v2883, %v2935
    %v2937 = vpop.f32.mrb[0].mxu0
    %v2938 = vadd.f32 %v2885, %v2937
    %2939 = vmatprep.mubr.bf16.mxu0 %v2274
    %2940 = vmatmul.mubr.bf16.gmra.mrb[0].mxu0 %v2273
    %v2941 = vpop.f32.mrb[0].mxu0
    %v2942 = vadd.f32 %v2889, %v2941
    %v2943 = vpop.f32.mrb[0].mxu0
    %v2944 = vadd.f32 %v2891, %v2943
    %v2945 = vpop.f32.mrb[0].mxu0
    %v2946 = vadd.f32 %v2893, %v2945
    %v2947 = vpop.f32.mrb[0].mxu0
    %v2948 = vadd.f32 %v2895, %v2947
    %2949 = vdwg.mxu0
    %2950 = vmatprep.subr.bf16.mxu0 %v2504
    %2951 = vmatpush1.bf16.msra.mxu0 %v2503
    %2952 = vmatprep.subr.bf16.mxu0 %v2506
    %2953 = vmatpush1.bf16.msra.mxu0 %v2505
    %2954 = vmatprep.subr.bf16.mxu0 %v2508
    %2955 = vmatpush1.bf16.msra.mxu0 %v2507
    %2956 = vmatprep.subr.bf16.mxu0 %v2510
    %2957 = vmatpush1.bf16.msra.mxu0 %v2509
    %2958 = vmatprep.subr.bf16.mxu0 %v2512
    %2959 = vmatpush1.bf16.msra.mxu0 %v2511
    %2960 = vmatprep.subr.bf16.mxu0 %v2514
    %2961 = vmatpush1.bf16.msra.mxu0 %v2513
    %2962 = vmatprep.subr.bf16.mxu0 %v2516
    %2963 = vmatpush1.bf16.msra.mxu0 %v2515
    %2964 = vmatprep.subr.bf16.mxu0 %v2518
    %2965 = vmatpush1.bf16.msra.mxu0 %v2517
    %2966 = vmatprep.subr.bf16.mxu0 %v2520
    %2967 = vmatpush1.bf16.msra.mxu0 %v2519
    %2968 = vmatprep.subr.bf16.mxu0 %v2522
    %2969 = vmatpush1.bf16.msra.mxu0 %v2521
    %2970 = vmatprep.subr.bf16.mxu0 %v2524
    %2971 = vmatpush1.bf16.msra.mxu0 %v2523
    %2972 = vmatprep.subr.bf16.mxu0 %v2526
    %2973 = vmatpush1.bf16.msra.mxu0 %v2525
    %2974 = vmatprep.subr.bf16.mxu0 %v2528
    %2975 = vmatpush1.bf16.msra.mxu0 %v2527
    %2976 = vmatprep.subr.bf16.mxu0 %v2530
    %2977 = vmatpush1.bf16.msra.mxu0 %v2529
    %2978 = vmatprep.subr.bf16.mxu0 %v2532
    %2979 = vmatpush1.bf16.msra.mxu0 %v2531
    %2980 = vmatprep.subr.bf16.mxu0 %v2534
    %2981 = vmatpush1.bf16.msra.mxu0 %v2533
    %2982 = vmatprep.mubr.bf16.mxu0 %v2258
    %2983 = vmatmul.mubr.bf16.gmra.mrb[0].mxu0 %v2257
    %v2984 = vpop.f32.mrb[0].mxu0
    %v2985 = vadd.f32 %v2932, %v2984
    %v2986 = vpop.f32.mrb[0].mxu0
    %v2987 = vadd.f32 %v2934, %v2986
    %v2988 = vpop.f32.mrb[0].mxu0
    %v2989 = vadd.f32 %v2936, %v2988
    %v2990 = vpop.f32.mrb[0].mxu0
    %v2991 = vadd.f32 %v2938, %v2990
    %2992 = vmatprep.mubr.bf16.mxu0 %v2276
    %2993 = vmatmul.mubr.bf16.gmra.mrb[0].mxu0 %v2275
    %v2994 = vpop.f32.mrb[0].mxu0
    %v2995 = vadd.f32 %v2942, %v2994
    %v2996 = vpop.f32.mrb[0].mxu0
    %v2997 = vadd.f32 %v2944, %v2996
    %v2998 = vpop.f32.mrb[0].mxu0
    %v2999 = vadd.f32 %v2946, %v2998
    %v3000 = vpop.f32.mrb[0].mxu0
    %v3001 = vadd.f32 %v2948, %v3000
    %3002 = vdwg.mxu0
    %3003 = vmatprep.subr.bf16.mxu0 %v2536
    %3004 = vmatpush1.bf16.msra.mxu0 %v2535
    %3005 = vmatprep.subr.bf16.mxu0 %v2538
    %3006 = vmatpush1.bf16.msra.mxu0 %v2537
    %3007 = vmatprep.subr.bf16.mxu0 %v2540
    %3008 = vmatpush1.bf16.msra.mxu0 %v2539
    %3009 = vmatprep.subr.bf16.mxu0 %v2542
    %3010 = vmatpush1.bf16.msra.mxu0 %v2541
    %3011 = vmatprep.subr.bf16.mxu0 %v2544
    %3012 = vmatpush1.bf16.msra.mxu0 %v2543
    %3013 = vmatprep.subr.bf16.mxu0 %v2546
    %3014 = vmatpush1.bf16.msra.mxu0 %v2545
    %3015 = vmatprep.subr.bf16.mxu0 %v2548
    %3016 = vmatpush1.bf16.msra.mxu0 %v2547
    %3017 = vmatprep.subr.bf16.mxu0 %v2550
    %3018 = vmatpush1.bf16.msra.mxu0 %v2549
    %3019 = vmatprep.subr.bf16.mxu0 %v2552
    %3020 = vmatpush1.bf16.msra.mxu0 %v2551
    %3021 = vmatprep.subr.bf16.mxu0 %v2554
    %3022 = vmatpush1.bf16.msra.mxu0 %v2553
    %3023 = vmatprep.subr.bf16.mxu0 %v2556
    %3024 = vmatpush1.bf16.msra.mxu0 %v2555
    %3025 = vmatprep.subr.bf16.mxu0 %v2558
    %3026 = vmatpush1.bf16.msra.mxu0 %v2557
    %3027 = vmatprep.subr.bf16.mxu0 %v2560
    %3028 = vmatpush1.bf16.msra.mxu0 %v2559
    %3029 = vmatprep.subr.bf16.mxu0 %v2562
    %3030 = vmatpush1.bf16.msra.mxu0 %v2561
    %3031 = vmatprep.subr.bf16.mxu0 %v2564
    %3032 = vmatpush1.bf16.msra.mxu0 %v2563
    %3033 = vmatprep.subr.bf16.mxu0 %v2566
    %3034 = vmatpush1.bf16.msra.mxu0 %v2565
    %3035 = vmatprep.mubr.bf16.mxu0 %v2260
    %3036 = vmatmul.mubr.bf16.gmra.mrb[0].mxu0 %v2259
    %v3037 = vpop.f32.mrb[0].mxu0
    %v3038 = vadd.f32 %v2985, %v3037
    %v3039 = vpop.f32.mrb[0].mxu0
    %v3040 = vadd.f32 %v2987, %v3039
    %v3041 = vpop.f32.mrb[0].mxu0
    %v3042 = vadd.f32 %v2989, %v3041
    %v3043 = vpop.f32.mrb[0].mxu0
    %v3044 = vadd.f32 %v2991, %v3043
    %3045 = vmatprep.mubr.bf16.mxu0 %v2278
    %3046 = vmatmul.mubr.bf16.gmra.mrb[0].mxu0 %v2277
    %v3047 = vpop.f32.mrb[0].mxu0
    %v3048 = vadd.f32 %v2995, %v3047
    %v3049 = vpop.f32.mrb[0].mxu0
    %v3050 = vadd.f32 %v2997, %v3049
    %v3051 = vpop.f32.mrb[0].mxu0
    %v3052 = vadd.f32 %v2999, %v3051
    %v3053 = vpop.f32.mrb[0].mxu0
    %v3054 = vadd.f32 %v3001, %v3053
    %3055 = vdwg.mxu0
    %v3056 = vmax.f32 %v3038, 0.0
    %v3057 = vmax.f32 %v3040, 0.0
    %v3058 = vmax.f32 %v3042, 0.0
    %v3059 = vmax.f32 %v3044, 0.0
    %v3060 = vmax.f32 %v3048, 0.0
    %v3061 = vmax.f32 %v3050, 0.0
    %v3062 = vmax.f32 %v3052, 0.0
    %v3063 = vmax.f32 %v3054, 0.0
    %v3064 = vpack.c.bf16 %v3058, %v3056
    %v3065 = vpack.c.bf16 %v3059, %v3057
    %v3066 = vpack.c.bf16 %v3062, %v3060
    %v3067 = vpack.c.bf16 %v3063, %v3061
    %3068 = vst [vmem:[#allocation2 + $0x10] sm:$0xff] %v3064
    %3069 = vst [vmem:[#allocation2 + $0x18] sm:$0xff] %v3065
    %3070 = vst [vmem:[#allocation2 + $0x20] sm:$0xff] %v3066
    %3071 = vst [vmem:[#allocation2 + $0x28] sm:$0xff] %v3067
    %s3073 = sshll.u32 1, 14
    %s3074 = sxor.u32 4294967295, %s3073
    %s3076 = sadd.s32 2, %s169
    %s3078 = sshll.u32 7, 26
    %s3079 = sxor.u32 4294967295, %s3078
    %s3080 = sand.u32 0, %s3079
    %s3081 = sshll.u32 %s3076, 26
    %s3082 = sor.u32 %s3080, %s3081
    %s3083 = sshll.u32 %s595, 4
    %s3084 = int_to_ptr.vmem [resolvable:$true] %s3083
    %3087 = sst [smem:[#allocation30]] 256
    %s3088 = scalar_lea.smem [#allocation30], 1
    %3089 = sst [smem:[%s3088]] 256
    %s3090 = scalar_lea.smem [#allocation30], 2
    %3091 = sst [smem:[%s3090]] 2
    %s3092 = scalar_lea.smem [#allocation30], 3
    %3093 = sst [smem:[%s3092]] 64
    %s3094 = scalar_lea.smem [#allocation30], 4
    %3095 = sst [smem:[%s3094]] 128
    %s3096 = scalar_lea.smem [#allocation30], 5
    %3097 = sst [smem:[%s3096]] 2
    %s3098 = scalar_lea.smem [#allocation30], 6
    %3099 = sst [smem:[%s3098]] 128
    %s3100 = scalar_lea.smem [#allocation30], 7
    %3101 = sst [smem:[%s3100]] 64
    %s3102 = scalar_lea.smem [#allocation30], 8
    %3103 = sst [smem:[%s3102]] 4
    %3105 = dma.general %s8, 12288, %s3084, %s596, [#allocation29], [#allocation30], %s3082, 0
    %v3106 = vld [vmem:[#allocation2] sm:$0xc0]
    %v3107 = vld [vmem:[#allocation2 + $0x8] sm:$0xc0]
    %v3108 = vld [vmem:[#allocation2 + $0x10] sm:$0xff]
    %v3109 = vld [vmem:[#allocation2 + $0x18] sm:$0xff]
    %v3110 = vld [vmem:[#allocation2 + $0x20] sm:$0x3f]
    %v3111 = vld [vmem:[#allocation2 + $0x28] sm:$0x3f]
    %v3118 = vrot.slane %v3106, 6
    %v3119 = vrot.slane %v3108, 6
    %v3120 = vsel %vm736, %v3118, %v3119
    %v3121 = vrot.slane %v3107, 6
    %v3122 = vrot.slane %v3109, 6
    %v3123 = vsel %vm736, %v3121, %v3122
    %v3124 = vrot.slane %v3110, 6
    %v3125 = vsel %vm736, %v3119, %v3124
    %v3126 = vrot.slane %v3111, 6
    %v3127 = vsel %vm736, %v3122, %v3126
    %3132 = vst [vmem:[#allocation4] sm:$0xff] %v3120
    %3133 = vst [vmem:[#allocation4 + $0x8] sm:$0xff] %v3123
    %3134 = vst [vmem:[#allocation4 + $0xb0] sm:$0xff] %v3125
    %3135 = vst [vmem:[#allocation4 + $0xb8] sm:$0xff] %v3127
    %v3136 = vld [vmem:[#allocation2] sm:$0x80]
    %v3137 = vld [vmem:[#allocation2 + $0x8] sm:$0x80]
    %v3138 = vld [vmem:[#allocation2 + $0x10] sm:$0xff]
    %v3139 = vld [vmem:[#allocation2 + $0x18] sm:$0xff]
    %v3140 = vld [vmem:[#allocation2 + $0x20] sm:$0x7f]
    %v3141 = vld [vmem:[#allocation2 + $0x28] sm:$0x7f]
    %v3148 = vrot.slane %v3136, 7
    %v3149 = vrot.slane %v3138, 7
    %v3150 = vsel %vm767, %v3148, %v3149
    %v3151 = vrot.slane %v3137, 7
    %v3152 = vrot.slane %v3139, 7
    %v3153 = vsel %vm767, %v3151, %v3152
    %v3154 = vrot.slane %v3140, 7
    %v3155 = vsel %vm767, %v3149, %v3154
    %v3156 = vrot.slane %v3141, 7
    %v3157 = vsel %vm767, %v3152, %v3156
    %3162 = vst [vmem:[#allocation4 + $0x10] sm:$0xff] %v3150
    %3163 = vst [vmem:[#allocation4 + $0x18] sm:$0xff] %v3153
    %3164 = vst [vmem:[#allocation4 + $0xc0] sm:$0xff] %v3155
    %3165 = vst [vmem:[#allocation4 + $0xc8] sm:$0xff] %v3157
    %v3166 = vld [vmem:[#allocation2 + $0x10] sm:$0xff]
    %v3167 = vld [vmem:[#allocation2 + $0x18] sm:$0xff]
    %v3168 = vld [vmem:[#allocation2 + $0x20] sm:$0xff]
    %v3169 = vld [vmem:[#allocation2 + $0x28] sm:$0xff]
    %3170 = vst [vmem:[#allocation4 + $0x20] sm:$0xff] %v3166
    %3171 = vst [vmem:[#allocation4 + $0x28] sm:$0xff] %v3167
    %3172 = vst [vmem:[#allocation4 + $0xd0] sm:$0xff] %v3168
    %3173 = vst [vmem:[#allocation4 + $0xd8] sm:$0xff] %v3169
    %v3174 = vld [vmem:[#allocation2 + $0x10] sm:$0xfe]
    %v3175 = vld [vmem:[#allocation2 + $0x18] sm:$0xfe]
    %v3176 = vld [vmem:[#allocation2 + $0x20] sm:$0xff]
    %v3177 = vld [vmem:[#allocation2 + $0x28] sm:$0xff]
    %v3178 = vld [vmem:[#allocation2 + $0x30] sm:$0x1]
    %v3179 = vld [vmem:[#allocation2 + $0x38] sm:$0x1]
    %v3186 = vrot.slane %v3174, 1
    %v3187 = vrot.slane %v3176, 1
    %v3188 = vsel %vm806, %v3186, %v3187
    %v3189 = vrot.slane %v3175, 1
    %v3190 = vrot.slane %v3177, 1
    %v3191 = vsel %vm806, %v3189, %v3190
    %v3192 = vrot.slane %v3178, 1
    %v3193 = vsel %vm806, %v3187, %v3192
    %v3194 = vrot.slane %v3179, 1
    %v3195 = vsel %vm806, %v3190, %v3194
    %3200 = vst [vmem:[#allocation4 + $0x30] sm:$0xff] %v3188
    %3201 = vst [vmem:[#allocation4 + $0x38] sm:$0xff] %v3191
    %3202 = vst [vmem:[#allocation4 + $0xe0] sm:$0xff] %v3193
    %3203 = vst [vmem:[#allocation4 + $0xe8] sm:$0xff] %v3195
    %v3204 = vld [vmem:[#allocation2 + $0x10] sm:$0xfc]
    %v3205 = vld [vmem:[#allocation2 + $0x18] sm:$0xfc]
    %v3206 = vld [vmem:[#allocation2 + $0x20] sm:$0xff]
    %v3207 = vld [vmem:[#allocation2 + $0x28] sm:$0xff]
    %v3208 = vld [vmem:[#allocation2 + $0x30] sm:$0x3]
    %v3209 = vld [vmem:[#allocation2 + $0x38] sm:$0x3]
    %v3216 = vrot.slane %v3204, 2
    %v3217 = vrot.slane %v3206, 2
    %v3218 = vsel %vm837, %v3216, %v3217
    %v3219 = vrot.slane %v3205, 2
    %v3220 = vrot.slane %v3207, 2
    %v3221 = vsel %vm837, %v3219, %v3220
    %v3222 = vrot.slane %v3208, 2
    %v3223 = vsel %vm837, %v3217, %v3222
    %v3224 = vrot.slane %v3209, 2
    %v3225 = vsel %vm837, %v3220, %v3224
    %3230 = vst [vmem:[#allocation4 + $0x40] sm:$0xff] %v3218
    %3231 = vst [vmem:[#allocation4 + $0x48] sm:$0xff] %v3221
    %3232 = vst [vmem:[#allocation4 + $0xf0] sm:$0xff] %v3223
    %3233 = vst [vmem:[#allocation4 + $0xf8] sm:$0xff] %v3225
    %s3234 = smul.u32 4, 160
    %s3235 = smul.u32 %s3234, 2
    %s3236 = sshll.u32 %s3235, 4
    %3237 = dma.done [#allocation6], %s3236
    %v3238 = vld [vmem:[#allocation4] sm:$0xff]
    %v3239 = vld [vmem:[#allocation4 + $0x8] sm:$0xff]
    %v3240 = vld [vmem:[#allocation4 + $0x10] sm:$0xff]
    %v3241 = vld [vmem:[#allocation4 + $0x18] sm:$0xff]
    %v3242 = vld [vmem:[#allocation4 + $0x20] sm:$0xff]
    %v3243 = vld [vmem:[#allocation4 + $0x28] sm:$0xff]
    %v3244 = vld [vmem:[#allocation4 + $0x30] sm:$0xff]
    %v3245 = vld [vmem:[#allocation4 + $0x38] sm:$0xff]
    %v3246 = vld [vmem:[#allocation4 + $0x40] sm:$0xff]
    %v3247 = vld [vmem:[#allocation4 + $0x48] sm:$0xff]
    %v3248 = vld [vmem:[#allocation4 + $0xb0] sm:$0xff]
    %v3249 = vld [vmem:[#allocation4 + $0xb8] sm:$0xff]
    %v3250 = vld [vmem:[#allocation4 + $0xc0] sm:$0xff]
    %v3251 = vld [vmem:[#allocation4 + $0xc8] sm:$0xff]
    %v3252 = vld [vmem:[#allocation4 + $0xd0] sm:$0xff]
    %v3253 = vld [vmem:[#allocation4 + $0xd8] sm:$0xff]
    %v3254 = vld [vmem:[#allocation4 + $0xe0] sm:$0xff]
    %v3255 = vld [vmem:[#allocation4 + $0xe8] sm:$0xff]
    %v3256 = vld [vmem:[#allocation4 + $0xf0] sm:$0xff]
    %v3257 = vld [vmem:[#allocation4 + $0xf8] sm:$0xff]
    %v3258 = vld [vmem:[#allocation5] sm:$0xff]
    %v3259 = vld [vmem:[#allocation5 + $0x8] sm:$0xff]
    %v3260 = vld [vmem:[#allocation5 + $0x10] sm:$0xff]
    %v3261 = vld [vmem:[#allocation5 + $0x18] sm:$0xff]
    %v3262 = vld [vmem:[#allocation5 + $0x20] sm:$0xff]
    %v3263 = vld [vmem:[#allocation5 + $0x28] sm:$0xff]
    %v3264 = vld [vmem:[#allocation5 + $0x30] sm:$0xff]
    %v3265 = vld [vmem:[#allocation5 + $0x38] sm:$0xff]
    %v3266 = vld [vmem:[#allocation5 + $0x40] sm:$0xff]
    %v3267 = vld [vmem:[#allocation5 + $0x48] sm:$0xff]
    %v3268 = vld [vmem:[#allocation5 + $0x50] sm:$0xff]
    %v3269 = vld [vmem:[#allocation5 + $0x58] sm:$0xff]
    %v3270 = vld [vmem:[#allocation5 + $0x60] sm:$0xff]
    %v3271 = vld [vmem:[#allocation5 + $0x68] sm:$0xff]
    %v3272 = vld [vmem:[#allocation5 + $0x70] sm:$0xff]
    %v3273 = vld [vmem:[#allocation5 + $0x78] sm:$0xff]
    %v3274 = vld [vmem:[#allocation5 + $0x80] sm:$0xff]
    %v3275 = vld [vmem:[#allocation5 + $0x88] sm:$0xff]
    %v3276 = vld [vmem:[#allocation5 + $0x90] sm:$0xff]
    %v3277 = vld [vmem:[#allocation5 + $0x98] sm:$0xff]
    %v3278 = vld [vmem:[#allocation5 + $0xa0] sm:$0xff]
    %v3279 = vld [vmem:[#allocation5 + $0xa8] sm:$0xff]
    %v3280 = vld [vmem:[#allocation5 + $0xb0] sm:$0xff]
    %v3281 = vld [vmem:[#allocation5 + $0xb8] sm:$0xff]
    %v3282 = vld [vmem:[#allocation5 + $0xc0] sm:$0xff]
    %v3283 = vld [vmem:[#allocation5 + $0xc8] sm:$0xff]
    %v3284 = vld [vmem:[#allocation5 + $0xd0] sm:$0xff]
    %v3285 = vld [vmem:[#allocation5 + $0xd8] sm:$0xff]
    %v3286 = vld [vmem:[#allocation5 + $0xe0] sm:$0xff]
    %v3287 = vld [vmem:[#allocation5 + $0xe8] sm:$0xff]
    %v3288 = vld [vmem:[#allocation5 + $0xf0] sm:$0xff]
    %v3289 = vld [vmem:[#allocation5 + $0xf8] sm:$0xff]
    %v3290 = vld [vmem:[#allocation5 + $0x100] sm:$0xff]
    %v3291 = vld [vmem:[#allocation5 + $0x108] sm:$0xff]
    %v3292 = vld [vmem:[#allocation5 + $0x110] sm:$0xff]
    %v3293 = vld [vmem:[#allocation5 + $0x118] sm:$0xff]
    %v3294 = vld [vmem:[#allocation5 + $0x120] sm:$0xff]
    %v3295 = vld [vmem:[#allocation5 + $0x128] sm:$0xff]
    %v3296 = vld [vmem:[#allocation5 + $0x130] sm:$0xff]
    %v3297 = vld [vmem:[#allocation5 + $0x138] sm:$0xff]
    %v3298 = vld [vmem:[#allocation5 + $0x140] sm:$0xff]
    %v3299 = vld [vmem:[#allocation5 + $0x148] sm:$0xff]
    %v3300 = vld [vmem:[#allocation5 + $0x150] sm:$0xff]
    %v3301 = vld [vmem:[#allocation5 + $0x158] sm:$0xff]
    %v3302 = vld [vmem:[#allocation5 + $0x160] sm:$0xff]
    %v3303 = vld [vmem:[#allocation5 + $0x168] sm:$0xff]
    %v3304 = vld [vmem:[#allocation5 + $0x170] sm:$0xff]
    %v3305 = vld [vmem:[#allocation5 + $0x178] sm:$0xff]
    %v3306 = vld [vmem:[#allocation5 + $0x180] sm:$0xff]
    %v3307 = vld [vmem:[#allocation5 + $0x188] sm:$0xff]
    %v3308 = vld [vmem:[#allocation5 + $0x190] sm:$0xff]
    %v3309 = vld [vmem:[#allocation5 + $0x198] sm:$0xff]
    %v3310 = vld [vmem:[#allocation5 + $0x1a0] sm:$0xff]
    %v3311 = vld [vmem:[#allocation5 + $0x1a8] sm:$0xff]
    %v3312 = vld [vmem:[#allocation5 + $0x1b0] sm:$0xff]
    %v3313 = vld [vmem:[#allocation5 + $0x1b8] sm:$0xff]
    %v3314 = vld [vmem:[#allocation5 + $0x1c0] sm:$0xff]
    %v3315 = vld [vmem:[#allocation5 + $0x1c8] sm:$0xff]
    %v3316 = vld [vmem:[#allocation5 + $0x1d0] sm:$0xff]
    %v3317 = vld [vmem:[#allocation5 + $0x1d8] sm:$0xff]
    %v3318 = vld [vmem:[#allocation5 + $0x1e0] sm:$0xff]
    %v3319 = vld [vmem:[#allocation5 + $0x1e8] sm:$0xff]
    %v3320 = vld [vmem:[#allocation5 + $0x1f0] sm:$0xff]
    %v3321 = vld [vmem:[#allocation5 + $0x1f8] sm:$0xff]
    %v3322 = vld [vmem:[#allocation5 + $0x200] sm:$0xff]
    %v3323 = vld [vmem:[#allocation5 + $0x208] sm:$0xff]
    %v3324 = vld [vmem:[#allocation5 + $0x210] sm:$0xff]
    %v3325 = vld [vmem:[#allocation5 + $0x218] sm:$0xff]
    %v3326 = vld [vmem:[#allocation5 + $0x220] sm:$0xff]
    %v3327 = vld [vmem:[#allocation5 + $0x228] sm:$0xff]
    %v3328 = vld [vmem:[#allocation5 + $0x230] sm:$0xff]
    %v3329 = vld [vmem:[#allocation5 + $0x238] sm:$0xff]
    %v3330 = vld [vmem:[#allocation5 + $0x240] sm:$0xff]
    %v3331 = vld [vmem:[#allocation5 + $0x248] sm:$0xff]
    %v3332 = vld [vmem:[#allocation5 + $0x250] sm:$0xff]
    %v3333 = vld [vmem:[#allocation5 + $0x258] sm:$0xff]
    %v3334 = vld [vmem:[#allocation5 + $0x260] sm:$0xff]
    %v3335 = vld [vmem:[#allocation5 + $0x268] sm:$0xff]
    %v3336 = vld [vmem:[#allocation5 + $0x270] sm:$0xff]
    %v3337 = vld [vmem:[#allocation5 + $0x278] sm:$0xff]
    %v3338 = vld [vmem:[#allocation5 + $0x280] sm:$0xff]
    %v3339 = vld [vmem:[#allocation5 + $0x288] sm:$0xff]
    %v3340 = vld [vmem:[#allocation5 + $0x290] sm:$0xff]
    %v3341 = vld [vmem:[#allocation5 + $0x298] sm:$0xff]
    %v3342 = vld [vmem:[#allocation5 + $0x2a0] sm:$0xff]
    %v3343 = vld [vmem:[#allocation5 + $0x2a8] sm:$0xff]
    %v3344 = vld [vmem:[#allocation5 + $0x2b0] sm:$0xff]
    %v3345 = vld [vmem:[#allocation5 + $0x2b8] sm:$0xff]
    %v3346 = vld [vmem:[#allocation5 + $0x2c0] sm:$0xff]
    %v3347 = vld [vmem:[#allocation5 + $0x2c8] sm:$0xff]
    %v3348 = vld [vmem:[#allocation5 + $0x2d0] sm:$0xff]
    %v3349 = vld [vmem:[#allocation5 + $0x2d8] sm:$0xff]
    %v3350 = vld [vmem:[#allocation5 + $0x2e0] sm:$0xff]
    %v3351 = vld [vmem:[#allocation5 + $0x2e8] sm:$0xff]
    %v3352 = vld [vmem:[#allocation5 + $0x2f0] sm:$0xff]
    %v3353 = vld [vmem:[#allocation5 + $0x2f8] sm:$0xff]
    %v3354 = vld [vmem:[#allocation5 + $0x300] sm:$0xff]
    %v3355 = vld [vmem:[#allocation5 + $0x308] sm:$0xff]
    %v3356 = vld [vmem:[#allocation5 + $0x310] sm:$0xff]
    %v3357 = vld [vmem:[#allocation5 + $0x318] sm:$0xff]
    %v3358 = vld [vmem:[#allocation5 + $0x320] sm:$0xff]
    %v3359 = vld [vmem:[#allocation5 + $0x328] sm:$0xff]
    %v3360 = vld [vmem:[#allocation5 + $0x330] sm:$0xff]
    %v3361 = vld [vmem:[#allocation5 + $0x338] sm:$0xff]
    %v3362 = vld [vmem:[#allocation5 + $0x340] sm:$0xff]
    %v3363 = vld [vmem:[#allocation5 + $0x348] sm:$0xff]
    %v3364 = vld [vmem:[#allocation5 + $0x350] sm:$0xff]
    %v3365 = vld [vmem:[#allocation5 + $0x358] sm:$0xff]
    %v3366 = vld [vmem:[#allocation5 + $0x360] sm:$0xff]
    %v3367 = vld [vmem:[#allocation5 + $0x368] sm:$0xff]
    %v3368 = vld [vmem:[#allocation5 + $0x370] sm:$0xff]
    %v3369 = vld [vmem:[#allocation5 + $0x378] sm:$0xff]
    %v3370 = vld [vmem:[#allocation5 + $0x380] sm:$0xff]
    %v3371 = vld [vmem:[#allocation5 + $0x388] sm:$0xff]
    %v3372 = vld [vmem:[#allocation5 + $0x390] sm:$0xff]
    %v3373 = vld [vmem:[#allocation5 + $0x398] sm:$0xff]
    %v3374 = vld [vmem:[#allocation5 + $0x3a0] sm:$0xff]
    %v3375 = vld [vmem:[#allocation5 + $0x3a8] sm:$0xff]
    %v3376 = vld [vmem:[#allocation5 + $0x3b0] sm:$0xff]
    %v3377 = vld [vmem:[#allocation5 + $0x3b8] sm:$0xff]
    %v3378 = vld [vmem:[#allocation5 + $0x3c0] sm:$0xff]
    %v3379 = vld [vmem:[#allocation5 + $0x3c8] sm:$0xff]
    %v3380 = vld [vmem:[#allocation5 + $0x3d0] sm:$0xff]
    %v3381 = vld [vmem:[#allocation5 + $0x3d8] sm:$0xff]
    %v3382 = vld [vmem:[#allocation5 + $0x3e0] sm:$0xff]
    %v3383 = vld [vmem:[#allocation5 + $0x3e8] sm:$0xff]
    %v3384 = vld [vmem:[#allocation5 + $0x3f0] sm:$0xff]
    %v3385 = vld [vmem:[#allocation5 + $0x3f8] sm:$0xff]
    %v3386 = vld [vmem:[#allocation5 + $0x400] sm:$0xff]
    %v3387 = vld [vmem:[#allocation5 + $0x408] sm:$0xff]
    %v3388 = vld [vmem:[#allocation5 + $0x410] sm:$0xff]
    %v3389 = vld [vmem:[#allocation5 + $0x418] sm:$0xff]
    %v3390 = vld [vmem:[#allocation5 + $0x420] sm:$0xff]
    %v3391 = vld [vmem:[#allocation5 + $0x428] sm:$0xff]
    %v3392 = vld [vmem:[#allocation5 + $0x430] sm:$0xff]
    %v3393 = vld [vmem:[#allocation5 + $0x438] sm:$0xff]
    %v3394 = vld [vmem:[#allocation5 + $0x440] sm:$0xff]
    %v3395 = vld [vmem:[#allocation5 + $0x448] sm:$0xff]
    %v3396 = vld [vmem:[#allocation5 + $0x450] sm:$0xff]
    %v3397 = vld [vmem:[#allocation5 + $0x458] sm:$0xff]
    %v3398 = vld [vmem:[#allocation5 + $0x460] sm:$0xff]
    %v3399 = vld [vmem:[#allocation5 + $0x468] sm:$0xff]
    %v3400 = vld [vmem:[#allocation5 + $0x470] sm:$0xff]
    %v3401 = vld [vmem:[#allocation5 + $0x478] sm:$0xff]
    %v3402 = vld [vmem:[#allocation5 + $0x480] sm:$0xff]
    %v3403 = vld [vmem:[#allocation5 + $0x488] sm:$0xff]
    %v3404 = vld [vmem:[#allocation5 + $0x490] sm:$0xff]
    %v3405 = vld [vmem:[#allocation5 + $0x498] sm:$0xff]
    %v3406 = vld [vmem:[#allocation5 + $0x4a0] sm:$0xff]
    %v3407 = vld [vmem:[#allocation5 + $0x4a8] sm:$0xff]
    %v3408 = vld [vmem:[#allocation5 + $0x4b0] sm:$0xff]
    %v3409 = vld [vmem:[#allocation5 + $0x4b8] sm:$0xff]
    %v3410 = vld [vmem:[#allocation5 + $0x4c0] sm:$0xff]
    %v3411 = vld [vmem:[#allocation5 + $0x4c8] sm:$0xff]
    %v3412 = vld [vmem:[#allocation5 + $0x4d0] sm:$0xff]
    %v3413 = vld [vmem:[#allocation5 + $0x4d8] sm:$0xff]
    %v3414 = vld [vmem:[#allocation5 + $0x4e0] sm:$0xff]
    %v3415 = vld [vmem:[#allocation5 + $0x4e8] sm:$0xff]
    %v3416 = vld [vmem:[#allocation5 + $0x4f0] sm:$0xff]
    %v3417 = vld [vmem:[#allocation5 + $0x4f8] sm:$0xff]
    %v3418 = vld [vmem:[#allocation17] sm:$0x3]
    %v3420 = vlaneseq
    %v3421 = vshrl.u32 %v3420, 7
    %v3422 = vsub.s32 0, %v3421
    %v3423 = vrot.slane %v3418, %v3422
    %v3424 = vlaneseq
    %v3425 = vshrl.u32 %v3424, 7
    %v3426 = vsub.s32 1, %v3425
    %v3427 = vrot.slane %v3418, %v3426
    %3430 = vmatprep.subr.bf16.mxu0 %v3259
    %3431 = vmatpush1.bf16.msra.mxu0 %v3258
    %3432 = vmatprep.subr.bf16.mxu0 %v3261
    %3433 = vmatpush1.bf16.msra.mxu0 %v3260
    %3434 = vmatprep.subr.bf16.mxu0 %v3263
    %3435 = vmatpush1.bf16.msra.mxu0 %v3262
    %3436 = vmatprep.subr.bf16.mxu0 %v3265
    %3437 = vmatpush1.bf16.msra.mxu0 %v3264
    %3438 = vmatprep.subr.bf16.mxu0 %v3267
    %3439 = vmatpush1.bf16.msra.mxu0 %v3266
    %3440 = vmatprep.subr.bf16.mxu0 %v3269
    %3441 = vmatpush1.bf16.msra.mxu0 %v3268
    %3442 = vmatprep.subr.bf16.mxu0 %v3271
    %3443 = vmatpush1.bf16.msra.mxu0 %v3270
    %3444 = vmatprep.subr.bf16.mxu0 %v3273
    %3445 = vmatpush1.bf16.msra.mxu0 %v3272
    %3446 = vmatprep.subr.bf16.mxu0 %v3275
    %3447 = vmatpush1.bf16.msra.mxu0 %v3274
    %3448 = vmatprep.subr.bf16.mxu0 %v3277
    %3449 = vmatpush1.bf16.msra.mxu0 %v3276
    %3450 = vmatprep.subr.bf16.mxu0 %v3279
    %3451 = vmatpush1.bf16.msra.mxu0 %v3278
    %3452 = vmatprep.subr.bf16.mxu0 %v3281
    %3453 = vmatpush1.bf16.msra.mxu0 %v3280
    %3454 = vmatprep.subr.bf16.mxu0 %v3283
    %3455 = vmatpush1.bf16.msra.mxu0 %v3282
    %3456 = vmatprep.subr.bf16.mxu0 %v3285
    %3457 = vmatpush1.bf16.msra.mxu0 %v3284
    %3458 = vmatprep.subr.bf16.mxu0 %v3287
    %3459 = vmatpush1.bf16.msra.mxu0 %v3286
    %3460 = vmatprep.subr.bf16.mxu0 %v3289
    %3461 = vmatpush1.bf16.msra.mxu0 %v3288
    %3462 = vmatprep.mubr.bf16.mxu0 %v3239
    %3463 = vmatmul.mubr.bf16.gmra.mrb[0].mxu0 %v3238
    %v3464 = vpop.f32.mrb[0].mxu0
    %v3465 = vadd.f32 %v3423, %v3464
    %v3466 = vpop.f32.mrb[0].mxu0
    %v3467 = vadd.f32 %v3427, %v3466
    %v3468 = vpop.f32.mrb[0].mxu0
    %v3469 = vadd.f32 %v3423, %v3468
    %v3470 = vpop.f32.mrb[0].mxu0
    %v3471 = vadd.f32 %v3427, %v3470
    %3472 = vmatprep.mubr.bf16.mxu0 %v3249
    %3473 = vmatmul.mubr.bf16.gmra.mrb[0].mxu0 %v3248
    %v3474 = vpop.f32.mrb[0].mxu0
    %v3475 = vadd.f32 %v3423, %v3474
    %v3476 = vpop.f32.mrb[0].mxu0
    %v3477 = vadd.f32 %v3427, %v3476
    %v3478 = vpop.f32.mrb[0].mxu0
    %v3479 = vadd.f32 %v3423, %v3478
    %v3480 = vpop.f32.mrb[0].mxu0
    %v3481 = vadd.f32 %v3427, %v3480
    %3482 = vdwg.mxu0
    %3483 = vmatprep.subr.bf16.mxu0 %v3291
    %3484 = vmatpush1.bf16.msra.mxu0 %v3290
    %3485 = vmatprep.subr.bf16.mxu0 %v3293
    %3486 = vmatpush1.bf16.msra.mxu0 %v3292
    %3487 = vmatprep.subr.bf16.mxu0 %v3295
    %3488 = vmatpush1.bf16.msra.mxu0 %v3294
    %3489 = vmatprep.subr.bf16.mxu0 %v3297
    %3490 = vmatpush1.bf16.msra.mxu0 %v3296
    %3491 = vmatprep.subr.bf16.mxu0 %v3299
    %3492 = vmatpush1.bf16.msra.mxu0 %v3298
    %3493 = vmatprep.subr.bf16.mxu0 %v3301
    %3494 = vmatpush1.bf16.msra.mxu0 %v3300
    %3495 = vmatprep.subr.bf16.mxu0 %v3303
    %3496 = vmatpush1.bf16.msra.mxu0 %v3302
    %3497 = vmatprep.subr.bf16.mxu0 %v3305
    %3498 = vmatpush1.bf16.msra.mxu0 %v3304
    %3499 = vmatprep.subr.bf16.mxu0 %v3307
    %3500 = vmatpush1.bf16.msra.mxu0 %v3306
    %3501 = vmatprep.subr.bf16.mxu0 %v3309
    %3502 = vmatpush1.bf16.msra.mxu0 %v3308
    %3503 = vmatprep.subr.bf16.mxu0 %v3311
    %3504 = vmatpush1.bf16.msra.mxu0 %v3310
    %3505 = vmatprep.subr.bf16.mxu0 %v3313
    %3506 = vmatpush1.bf16.msra.mxu0 %v3312
    %3507 = vmatprep.subr.bf16.mxu0 %v3315
    %3508 = vmatpush1.bf16.msra.mxu0 %v3314
    %3509 = vmatprep.subr.bf16.mxu0 %v3317
    %3510 = vmatpush1.bf16.msra.mxu0 %v3316
    %3511 = vmatprep.subr.bf16.mxu0 %v3319
    %3512 = vmatpush1.bf16.msra.mxu0 %v3318
    %3513 = vmatprep.subr.bf16.mxu0 %v3321
    %3514 = vmatpush1.bf16.msra.mxu0 %v3320
    %3515 = vmatprep.mubr.bf16.mxu0 %v3241
    %3516 = vmatmul.mubr.bf16.gmra.mrb[0].mxu0 %v3240
    %v3517 = vpop.f32.mrb[0].mxu0
    %v3518 = vadd.f32 %v3465, %v3517
    %v3519 = vpop.f32.mrb[0].mxu0
    %v3520 = vadd.f32 %v3467, %v3519
    %v3521 = vpop.f32.mrb[0].mxu0
    %v3522 = vadd.f32 %v3469, %v3521
    %v3523 = vpop.f32.mrb[0].mxu0
    %v3524 = vadd.f32 %v3471, %v3523
    %3525 = vmatprep.mubr.bf16.mxu0 %v3251
    %3526 = vmatmul.mubr.bf16.gmra.mrb[0].mxu0 %v3250
    %v3527 = vpop.f32.mrb[0].mxu0
    %v3528 = vadd.f32 %v3475, %v3527
    %v3529 = vpop.f32.mrb[0].mxu0
    %v3530 = vadd.f32 %v3477, %v3529
    %v3531 = vpop.f32.mrb[0].mxu0
    %v3532 = vadd.f32 %v3479, %v3531
    %v3533 = vpop.f32.mrb[0].mxu0
    %v3534 = vadd.f32 %v3481, %v3533
    %3535 = vdwg.mxu0
    %3536 = vmatprep.subr.bf16.mxu0 %v3323
    %3537 = vmatpush1.bf16.msra.mxu0 %v3322
    %3538 = vmatprep.subr.bf16.mxu0 %v3325
    %3539 = vmatpush1.bf16.msra.mxu0 %v3324
    %3540 = vmatprep.subr.bf16.mxu0 %v3327
    %3541 = vmatpush1.bf16.msra.mxu0 %v3326
    %3542 = vmatprep.subr.bf16.mxu0 %v3329
    %3543 = vmatpush1.bf16.msra.mxu0 %v3328
    %3544 = vmatprep.subr.bf16.mxu0 %v3331
    %3545 = vmatpush1.bf16.msra.mxu0 %v3330
    %3546 = vmatprep.subr.bf16.mxu0 %v3333
    %3547 = vmatpush1.bf16.msra.mxu0 %v3332
    %3548 = vmatprep.subr.bf16.mxu0 %v3335
    %3549 = vmatpush1.bf16.msra.mxu0 %v3334
    %3550 = vmatprep.subr.bf16.mxu0 %v3337
    %3551 = vmatpush1.bf16.msra.mxu0 %v3336
    %3552 = vmatprep.subr.bf16.mxu0 %v3339
    %3553 = vmatpush1.bf16.msra.mxu0 %v3338
    %3554 = vmatprep.subr.bf16.mxu0 %v3341
    %3555 = vmatpush1.bf16.msra.mxu0 %v3340
    %3556 = vmatprep.subr.bf16.mxu0 %v3343
    %3557 = vmatpush1.bf16.msra.mxu0 %v3342
    %3558 = vmatprep.subr.bf16.mxu0 %v3345
    %3559 = vmatpush1.bf16.msra.mxu0 %v3344
    %3560 = vmatprep.subr.bf16.mxu0 %v3347
    %3561 = vmatpush1.bf16.msra.mxu0 %v3346
    %3562 = vmatprep.subr.bf16.mxu0 %v3349
    %3563 = vmatpush1.bf16.msra.mxu0 %v3348
    %3564 = vmatprep.subr.bf16.mxu0 %v3351
    %3565 = vmatpush1.bf16.msra.mxu0 %v3350
    %3566 = vmatprep.subr.bf16.mxu0 %v3353
    %3567 = vmatpush1.bf16.msra.mxu0 %v3352
    %3568 = vmatprep.mubr.bf16.mxu0 %v3243
    %3569 = vmatmul.mubr.bf16.gmra.mrb[0].mxu0 %v3242
    %v3570 = vpop.f32.mrb[0].mxu0
    %v3571 = vadd.f32 %v3518, %v3570
    %v3572 = vpop.f32.mrb[0].mxu0
    %v3573 = vadd.f32 %v3520, %v3572
    %v3574 = vpop.f32.mrb[0].mxu0
    %v3575 = vadd.f32 %v3522, %v3574
    %v3576 = vpop.f32.mrb[0].mxu0
    %v3577 = vadd.f32 %v3524, %v3576
    %3578 = vmatprep.mubr.bf16.mxu0 %v3253
    %3579 = vmatmul.mubr.bf16.gmra.mrb[0].mxu0 %v3252
    %v3580 = vpop.f32.mrb[0].mxu0
    %v3581 = vadd.f32 %v3528, %v3580
    %v3582 = vpop.f32.mrb[0].mxu0
    %v3583 = vadd.f32 %v3530, %v3582
    %v3584 = vpop.f32.mrb[0].mxu0
    %v3585 = vadd.f32 %v3532, %v3584
    %v3586 = vpop.f32.mrb[0].mxu0
    %v3587 = vadd.f32 %v3534, %v3586
    %3588 = vdwg.mxu0
    %3589 = vmatprep.subr.bf16.mxu0 %v3355
    %3590 = vmatpush1.bf16.msra.mxu0 %v3354
    %3591 = vmatprep.subr.bf16.mxu0 %v3357
    %3592 = vmatpush1.bf16.msra.mxu0 %v3356
    %3593 = vmatprep.subr.bf16.mxu0 %v3359
    %3594 = vmatpush1.bf16.msra.mxu0 %v3358
    %3595 = vmatprep.subr.bf16.mxu0 %v3361
    %3596 = vmatpush1.bf16.msra.mxu0 %v3360
    %3597 = vmatprep.subr.bf16.mxu0 %v3363
    %3598 = vmatpush1.bf16.msra.mxu0 %v3362
    %3599 = vmatprep.subr.bf16.mxu0 %v3365
    %3600 = vmatpush1.bf16.msra.mxu0 %v3364
    %3601 = vmatprep.subr.bf16.mxu0 %v3367
    %3602 = vmatpush1.bf16.msra.mxu0 %v3366
    %3603 = vmatprep.subr.bf16.mxu0 %v3369
    %3604 = vmatpush1.bf16.msra.mxu0 %v3368
    %3605 = vmatprep.subr.bf16.mxu0 %v3371
    %3606 = vmatpush1.bf16.msra.mxu0 %v3370
    %3607 = vmatprep.subr.bf16.mxu0 %v3373
    %3608 = vmatpush1.bf16.msra.mxu0 %v3372
    %3609 = vmatprep.subr.bf16.mxu0 %v3375
    %3610 = vmatpush1.bf16.msra.mxu0 %v3374
    %3611 = vmatprep.subr.bf16.mxu0 %v3377
    %3612 = vmatpush1.bf16.msra.mxu0 %v3376
    %3613 = vmatprep.subr.bf16.mxu0 %v3379
    %3614 = vmatpush1.bf16.msra.mxu0 %v3378
    %3615 = vmatprep.subr.bf16.mxu0 %v3381
    %3616 = vmatpush1.bf16.msra.mxu0 %v3380
    %3617 = vmatprep.subr.bf16.mxu0 %v3383
    %3618 = vmatpush1.bf16.msra.mxu0 %v3382
    %3619 = vmatprep.subr.bf16.mxu0 %v3385
    %3620 = vmatpush1.bf16.msra.mxu0 %v3384
    %3621 = vmatprep.mubr.bf16.mxu0 %v3245
    %3622 = vmatmul.mubr.bf16.gmra.mrb[0].mxu0 %v3244
    %v3623 = vpop.f32.mrb[0].mxu0
    %v3624 = vadd.f32 %v3571, %v3623
    %v3625 = vpop.f32.mrb[0].mxu0
    %v3626 = vadd.f32 %v3573, %v3625
    %v3627 = vpop.f32.mrb[0].mxu0
    %v3628 = vadd.f32 %v3575, %v3627
    %v3629 = vpop.f32.mrb[0].mxu0
    %v3630 = vadd.f32 %v3577, %v3629
    %3631 = vmatprep.mubr.bf16.mxu0 %v3255
    %3632 = vmatmul.mubr.bf16.gmra.mrb[0].mxu0 %v3254
    %v3633 = vpop.f32.mrb[0].mxu0
    %v3634 = vadd.f32 %v3581, %v3633
    %v3635 = vpop.f32.mrb[0].mxu0
    %v3636 = vadd.f32 %v3583, %v3635
    %v3637 = vpop.f32.mrb[0].mxu0
    %v3638 = vadd.f32 %v3585, %v3637
    %v3639 = vpop.f32.mrb[0].mxu0
    %v3640 = vadd.f32 %v3587, %v3639
    %3641 = vdwg.mxu0
    %3642 = vmatprep.subr.bf16.mxu0 %v3387
    %3643 = vmatpush1.bf16.msra.mxu0 %v3386
    %3644 = vmatprep.subr.bf16.mxu0 %v3389
    %3645 = vmatpush1.bf16.msra.mxu0 %v3388
    %3646 = vmatprep.subr.bf16.mxu0 %v3391
    %3647 = vmatpush1.bf16.msra.mxu0 %v3390
    %3648 = vmatprep.subr.bf16.mxu0 %v3393
    %3649 = vmatpush1.bf16.msra.mxu0 %v3392
    %3650 = vmatprep.subr.bf16.mxu0 %v3395
    %3651 = vmatpush1.bf16.msra.mxu0 %v3394
    %3652 = vmatprep.subr.bf16.mxu0 %v3397
    %3653 = vmatpush1.bf16.msra.mxu0 %v3396
    %3654 = vmatprep.subr.bf16.mxu0 %v3399
    %3655 = vmatpush1.bf16.msra.mxu0 %v3398
    %3656 = vmatprep.subr.bf16.mxu0 %v3401
    %3657 = vmatpush1.bf16.msra.mxu0 %v3400
    %3658 = vmatprep.subr.bf16.mxu0 %v3403
    %3659 = vmatpush1.bf16.msra.mxu0 %v3402
    %3660 = vmatprep.subr.bf16.mxu0 %v3405
    %3661 = vmatpush1.bf16.msra.mxu0 %v3404
    %3662 = vmatprep.subr.bf16.mxu0 %v3407
    %3663 = vmatpush1.bf16.msra.mxu0 %v3406
    %3664 = vmatprep.subr.bf16.mxu0 %v3409
    %3665 = vmatpush1.bf16.msra.mxu0 %v3408
    %3666 = vmatprep.subr.bf16.mxu0 %v3411
    %3667 = vmatpush1.bf16.msra.mxu0 %v3410
    %3668 = vmatprep.subr.bf16.mxu0 %v3413
    %3669 = vmatpush1.bf16.msra.mxu0 %v3412
    %3670 = vmatprep.subr.bf16.mxu0 %v3415
    %3671 = vmatpush1.bf16.msra.mxu0 %v3414
    %3672 = vmatprep.subr.bf16.mxu0 %v3417
    %3673 = vmatpush1.bf16.msra.mxu0 %v3416
    %3674 = vmatprep.mubr.bf16.mxu0 %v3247
    %3675 = vmatmul.mubr.bf16.gmra.mrb[0].mxu0 %v3246
    %v3676 = vpop.f32.mrb[0].mxu0
    %v3677 = vadd.f32 %v3624, %v3676
    %v3678 = vpop.f32.mrb[0].mxu0
    %v3679 = vadd.f32 %v3626, %v3678
    %v3680 = vpop.f32.mrb[0].mxu0
    %v3681 = vadd.f32 %v3628, %v3680
    %v3682 = vpop.f32.mrb[0].mxu0
    %v3683 = vadd.f32 %v3630, %v3682
    %3684 = vmatprep.mubr.bf16.mxu0 %v3257
    %3685 = vmatmul.mubr.bf16.gmra.mrb[0].mxu0 %v3256
    %v3686 = vpop.f32.mrb[0].mxu0
    %v3687 = vadd.f32 %v3634, %v3686
    %v3688 = vpop.f32.mrb[0].mxu0
    %v3689 = vadd.f32 %v3636, %v3688
    %v3690 = vpop.f32.mrb[0].mxu0
    %v3691 = vadd.f32 %v3638, %v3690
    %v3692 = vpop.f32.mrb[0].mxu0
    %v3693 = vadd.f32 %v3640, %v3692
    %3694 = vdwg.mxu0
    %v3695 = vmax.f32 %v3677, 0.0
    %v3696 = vmax.f32 %v3679, 0.0
    %v3697 = vmax.f32 %v3681, 0.0
    %v3698 = vmax.f32 %v3683, 0.0
    %v3699 = vmax.f32 %v3687, 0.0
    %v3700 = vmax.f32 %v3689, 0.0
    %v3701 = vmax.f32 %v3691, 0.0
    %v3702 = vmax.f32 %v3693, 0.0
    %v3703 = vpack.c.bf16 %v3697, %v3695
    %v3704 = vpack.c.bf16 %v3698, %v3696
    %v3705 = vpack.c.bf16 %v3701, %v3699
    %v3706 = vpack.c.bf16 %v3702, %v3700
    %3707 = vst [vmem:[#allocation2 + $0x10] sm:$0xff] %v3703
    %3708 = vst [vmem:[#allocation2 + $0x18] sm:$0xff] %v3704
    %3709 = vst [vmem:[#allocation2 + $0x20] sm:$0xff] %v3705
    %3710 = vst [vmem:[#allocation2 + $0x28] sm:$0xff] %v3706
    %s3712 = sshll.u32 1, 14
    %s3713 = sxor.u32 4294967295, %s3712
    %s3715 = sadd.s32 2, %s169
    %s3717 = sshll.u32 7, 26
    %s3718 = sxor.u32 4294967295, %s3717
    %s3719 = sand.u32 0, %s3718
    %s3720 = sshll.u32 %s3715, 26
    %s3721 = sor.u32 %s3719, %s3720
    %s3722 = sshll.u32 [#allocation5], 4
    %s3723 = int_to_ptr.vmem [resolvable:$true] %s3722
    %3726 = sst [smem:[#allocation32]] 256
    %s3727 = scalar_lea.smem [#allocation32], 1
    %3728 = sst [smem:[%s3727]] 256
    %s3729 = scalar_lea.smem [#allocation32], 2
    %3730 = sst [smem:[%s3729]] 2
    %s3731 = scalar_lea.smem [#allocation32], 3
    %3732 = sst [smem:[%s3731]] 64
    %s3733 = scalar_lea.smem [#allocation32], 4
    %3734 = sst [smem:[%s3733]] 128
    %s3735 = scalar_lea.smem [#allocation32], 5
    %3736 = sst [smem:[%s3735]] 2
    %s3737 = scalar_lea.smem [#allocation32], 6
    %3738 = sst [smem:[%s3737]] 128
    %s3739 = scalar_lea.smem [#allocation32], 7
    %3740 = sst [smem:[%s3739]] 64
    %s3741 = scalar_lea.smem [#allocation32], 8
    %3742 = sst [smem:[%s3741]] 4
    %3744 = dma.general %s9, 12288, %s3723, [#allocation6], [#allocation31], [#allocation32], %s3721, 0
    %v3745 = vld [vmem:[#allocation2] sm:$0x80]
    %v3746 = vld [vmem:[#allocation2 + $0x8] sm:$0x80]
    %v3747 = vld [vmem:[#allocation2 + $0x10] sm:$0xff]
    %v3748 = vld [vmem:[#allocation2 + $0x18] sm:$0xff]
    %v3749 = vld [vmem:[#allocation2 + $0x20] sm:$0x7f]
    %v3750 = vld [vmem:[#allocation2 + $0x28] sm:$0x7f]
    %v3757 = vrot.slane %v3745, 7
    %v3758 = vrot.slane %v3747, 7
    %v3759 = vsel %vm767, %v3757, %v3758
    %v3760 = vrot.slane %v3746, 7
    %v3761 = vrot.slane %v3748, 7
    %v3762 = vsel %vm767, %v3760, %v3761
    %v3763 = vrot.slane %v3749, 7
    %v3764 = vsel %vm767, %v3758, %v3763
    %v3765 = vrot.slane %v3750, 7
    %v3766 = vsel %vm767, %v3761, %v3765
    %3771 = vst [vmem:[#allocation4] sm:$0xff] %v3759
    %3772 = vst [vmem:[#allocation4 + $0x8] sm:$0xff] %v3762
    %3773 = vst [vmem:[#allocation4 + $0xb0] sm:$0xff] %v3764
    %3774 = vst [vmem:[#allocation4 + $0xb8] sm:$0xff] %v3766
    %v3775 = vld [vmem:[#allocation2 + $0x10] sm:$0xff]
    %v3776 = vld [vmem:[#allocation2 + $0x18] sm:$0xff]
    %v3777 = vld [vmem:[#allocation2 + $0x20] sm:$0xff]
    %v3778 = vld [vmem:[#allocation2 + $0x28] sm:$0xff]
    %3779 = vst [vmem:[#allocation4 + $0x10] sm:$0xff] %v3775
    %3780 = vst [vmem:[#allocation4 + $0x18] sm:$0xff] %v3776
    %3781 = vst [vmem:[#allocation4 + $0xc0] sm:$0xff] %v3777
    %3782 = vst [vmem:[#allocation4 + $0xc8] sm:$0xff] %v3778
    %v3783 = vld [vmem:[#allocation2 + $0x10] sm:$0xfe]
    %v3784 = vld [vmem:[#allocation2 + $0x18] sm:$0xfe]
    %v3785 = vld [vmem:[#allocation2 + $0x20] sm:$0xff]
    %v3786 = vld [vmem:[#allocation2 + $0x28] sm:$0xff]
    %v3787 = vld [vmem:[#allocation2 + $0x30] sm:$0x1]
    %v3788 = vld [vmem:[#allocation2 + $0x38] sm:$0x1]
    %v3795 = vrot.slane %v3783, 1
    %v3796 = vrot.slane %v3785, 1
    %v3797 = vsel %vm806, %v3795, %v3796
    %v3798 = vrot.slane %v3784, 1
    %v3799 = vrot.slane %v3786, 1
    %v3800 = vsel %vm806, %v3798, %v3799
    %v3801 = vrot.slane %v3787, 1
    %v3802 = vsel %vm806, %v3796, %v3801
    %v3803 = vrot.slane %v3788, 1
    %v3804 = vsel %vm806, %v3799, %v3803
    %3809 = vst [vmem:[#allocation4 + $0x20] sm:$0xff] %v3797
    %3810 = vst [vmem:[#allocation4 + $0x28] sm:$0xff] %v3800
    %3811 = vst [vmem:[#allocation4 + $0xd0] sm:$0xff] %v3802
    %3812 = vst [vmem:[#allocation4 + $0xd8] sm:$0xff] %v3804
    %s3813 = smul.u32 4, 96
    %s3814 = smul.u32 %s3813, 2
    %s3815 = sshll.u32 %s3814, 4
    %3816 = dma.done %s596, %s3815
    %v3817 = vld [vmem:[#allocation4] sm:$0xff]
    %v3818 = vld [vmem:[#allocation4 + $0x8] sm:$0xff]
    %v3819 = vld [vmem:[#allocation4 + $0x10] sm:$0xff]
    %v3820 = vld [vmem:[#allocation4 + $0x18] sm:$0xff]
    %v3821 = vld [vmem:[#allocation4 + $0x20] sm:$0xff]
    %v3822 = vld [vmem:[#allocation4 + $0x28] sm:$0xff]
    %v3823 = vld [vmem:[#allocation4 + $0xb0] sm:$0xff]
    %v3824 = vld [vmem:[#allocation4 + $0xb8] sm:$0xff]
    %v3825 = vld [vmem:[#allocation4 + $0xc0] sm:$0xff]
    %v3826 = vld [vmem:[#allocation4 + $0xc8] sm:$0xff]
    %v3827 = vld [vmem:[#allocation4 + $0xd0] sm:$0xff]
    %v3828 = vld [vmem:[#allocation4 + $0xd8] sm:$0xff]
    %v3829 = vld [vmem:[#allocation5 + $0xb00] sm:$0xff]
    %v3830 = vld [vmem:[#allocation5 + $0xb08] sm:$0xff]
    %v3831 = vld [vmem:[#allocation5 + $0xb10] sm:$0xff]
    %v3832 = vld [vmem:[#allocation5 + $0xb18] sm:$0xff]
    %v3833 = vld [vmem:[#allocation5 + $0xb20] sm:$0xff]
    %v3834 = vld [vmem:[#allocation5 + $0xb28] sm:$0xff]
    %v3835 = vld [vmem:[#allocation5 + $0xb30] sm:$0xff]
    %v3836 = vld [vmem:[#allocation5 + $0xb38] sm:$0xff]
    %v3837 = vld [vmem:[#allocation5 + $0xb40] sm:$0xff]
    %v3838 = vld [vmem:[#allocation5 + $0xb48] sm:$0xff]
    %v3839 = vld [vmem:[#allocation5 + $0xb50] sm:$0xff]
    %v3840 = vld [vmem:[#allocation5 + $0xb58] sm:$0xff]
    %v3841 = vld [vmem:[#allocation5 + $0xb60] sm:$0xff]
    %v3842 = vld [vmem:[#allocation5 + $0xb68] sm:$0xff]
    %v3843 = vld [vmem:[#allocation5 + $0xb70] sm:$0xff]
    %v3844 = vld [vmem:[#allocation5 + $0xb78] sm:$0xff]
    %v3845 = vld [vmem:[#allocation5 + $0xb80] sm:$0xff]
    %v3846 = vld [vmem:[#allocation5 + $0xb88] sm:$0xff]
    %v3847 = vld [vmem:[#allocation5 + $0xb90] sm:$0xff]
    %v3848 = vld [vmem:[#allocation5 + $0xb98] sm:$0xff]
    %v3849 = vld [vmem:[#allocation5 + $0xba0] sm:$0xff]
    %v3850 = vld [vmem:[#allocation5 + $0xba8] sm:$0xff]
    %v3851 = vld [vmem:[#allocation5 + $0xbb0] sm:$0xff]
    %v3852 = vld [vmem:[#allocation5 + $0xbb8] sm:$0xff]
    %v3853 = vld [vmem:[#allocation5 + $0xbc0] sm:$0xff]
    %v3854 = vld [vmem:[#allocation5 + $0xbc8] sm:$0xff]
    %v3855 = vld [vmem:[#allocation5 + $0xbd0] sm:$0xff]
    %v3856 = vld [vmem:[#allocation5 + $0xbd8] sm:$0xff]
    %v3857 = vld [vmem:[#allocation5 + $0xbe0] sm:$0xff]
    %v3858 = vld [vmem:[#allocation5 + $0xbe8] sm:$0xff]
    %v3859 = vld [vmem:[#allocation5 + $0xbf0] sm:$0xff]
    %v3860 = vld [vmem:[#allocation5 + $0xbf8] sm:$0xff]
    %v3861 = vld [vmem:[#allocation5 + $0xc00] sm:$0xff]
    %v3862 = vld [vmem:[#allocation5 + $0xc08] sm:$0xff]
    %v3863 = vld [vmem:[#allocation5 + $0xc10] sm:$0xff]
    %v3864 = vld [vmem:[#allocation5 + $0xc18] sm:$0xff]
    %v3865 = vld [vmem:[#allocation5 + $0xc20] sm:$0xff]
    %v3866 = vld [vmem:[#allocation5 + $0xc28] sm:$0xff]
    %v3867 = vld [vmem:[#allocation5 + $0xc30] sm:$0xff]
    %v3868 = vld [vmem:[#allocation5 + $0xc38] sm:$0xff]
    %v3869 = vld [vmem:[#allocation5 + $0xc40] sm:$0xff]
    %v3870 = vld [vmem:[#allocation5 + $0xc48] sm:$0xff]
    %v3871 = vld [vmem:[#allocation5 + $0xc50] sm:$0xff]
    %v3872 = vld [vmem:[#allocation5 + $0xc58] sm:$0xff]
    %v3873 = vld [vmem:[#allocation5 + $0xc60] sm:$0xff]
    %v3874 = vld [vmem:[#allocation5 + $0xc68] sm:$0xff]
    %v3875 = vld [vmem:[#allocation5 + $0xc70] sm:$0xff]
    %v3876 = vld [vmem:[#allocation5 + $0xc78] sm:$0xff]
    %v3877 = vld [vmem:[#allocation5 + $0xc80] sm:$0xff]
    %v3878 = vld [vmem:[#allocation5 + $0xc88] sm:$0xff]
    %v3879 = vld [vmem:[#allocation5 + $0xc90] sm:$0xff]
    %v3880 = vld [vmem:[#allocation5 + $0xc98] sm:$0xff]
    %v3881 = vld [vmem:[#allocation5 + $0xca0] sm:$0xff]
    %v3882 = vld [vmem:[#allocation5 + $0xca8] sm:$0xff]
    %v3883 = vld [vmem:[#allocation5 + $0xcb0] sm:$0xff]
    %v3884 = vld [vmem:[#allocation5 + $0xcb8] sm:$0xff]
    %v3885 = vld [vmem:[#allocation5 + $0xcc0] sm:$0xff]
    %v3886 = vld [vmem:[#allocation5 + $0xcc8] sm:$0xff]
    %v3887 = vld [vmem:[#allocation5 + $0xcd0] sm:$0xff]
    %v3888 = vld [vmem:[#allocation5 + $0xcd8] sm:$0xff]
    %v3889 = vld [vmem:[#allocation5 + $0xce0] sm:$0xff]
    %v3890 = vld [vmem:[#allocation5 + $0xce8] sm:$0xff]
    %v3891 = vld [vmem:[#allocation5 + $0xcf0] sm:$0xff]
    %v3892 = vld [vmem:[#allocation5 + $0xcf8] sm:$0xff]
    %v3893 = vld [vmem:[#allocation5 + $0xd00] sm:$0xff]
    %v3894 = vld [vmem:[#allocation5 + $0xd08] sm:$0xff]
    %v3895 = vld [vmem:[#allocation5 + $0xd10] sm:$0xff]
    %v3896 = vld [vmem:[#allocation5 + $0xd18] sm:$0xff]
    %v3897 = vld [vmem:[#allocation5 + $0xd20] sm:$0xff]
    %v3898 = vld [vmem:[#allocation5 + $0xd28] sm:$0xff]
    %v3899 = vld [vmem:[#allocation5 + $0xd30] sm:$0xff]
    %v3900 = vld [vmem:[#allocation5 + $0xd38] sm:$0xff]
    %v3901 = vld [vmem:[#allocation5 + $0xd40] sm:$0xff]
    %v3902 = vld [vmem:[#allocation5 + $0xd48] sm:$0xff]
    %v3903 = vld [vmem:[#allocation5 + $0xd50] sm:$0xff]
    %v3904 = vld [vmem:[#allocation5 + $0xd58] sm:$0xff]
    %v3905 = vld [vmem:[#allocation5 + $0xd60] sm:$0xff]
    %v3906 = vld [vmem:[#allocation5 + $0xd68] sm:$0xff]
    %v3907 = vld [vmem:[#allocation5 + $0xd70] sm:$0xff]
    %v3908 = vld [vmem:[#allocation5 + $0xd78] sm:$0xff]
    %v3909 = vld [vmem:[#allocation5 + $0xd80] sm:$0xff]
    %v3910 = vld [vmem:[#allocation5 + $0xd88] sm:$0xff]
    %v3911 = vld [vmem:[#allocation5 + $0xd90] sm:$0xff]
    %v3912 = vld [vmem:[#allocation5 + $0xd98] sm:$0xff]
    %v3913 = vld [vmem:[#allocation5 + $0xda0] sm:$0xff]
    %v3914 = vld [vmem:[#allocation5 + $0xda8] sm:$0xff]
    %v3915 = vld [vmem:[#allocation5 + $0xdb0] sm:$0xff]
    %v3916 = vld [vmem:[#allocation5 + $0xdb8] sm:$0xff]
    %v3917 = vld [vmem:[#allocation5 + $0xdc0] sm:$0xff]
    %v3918 = vld [vmem:[#allocation5 + $0xdc8] sm:$0xff]
    %v3919 = vld [vmem:[#allocation5 + $0xdd0] sm:$0xff]
    %v3920 = vld [vmem:[#allocation5 + $0xdd8] sm:$0xff]
    %v3921 = vld [vmem:[#allocation5 + $0xde0] sm:$0xff]
    %v3922 = vld [vmem:[#allocation5 + $0xde8] sm:$0xff]
    %v3923 = vld [vmem:[#allocation5 + $0xdf0] sm:$0xff]
    %v3924 = vld [vmem:[#allocation5 + $0xdf8] sm:$0xff]
    %v3925 = vld [vmem:[#allocation18] sm:$0x3]
    %v3927 = vlaneseq
    %v3928 = vshrl.u32 %v3927, 7
    %v3929 = vsub.s32 0, %v3928
    %v3930 = vrot.slane %v3925, %v3929
    %v3931 = vlaneseq
    %v3932 = vshrl.u32 %v3931, 7
    %v3933 = vsub.s32 1, %v3932
    %v3934 = vrot.slane %v3925, %v3933
    %3937 = vmatprep.subr.bf16.mxu0 %v3830
    %3938 = vmatpush1.bf16.msra.mxu0 %v3829
    %3939 = vmatprep.subr.bf16.mxu0 %v3832
    %3940 = vmatpush1.bf16.msra.mxu0 %v3831
    %3941 = vmatprep.subr.bf16.mxu0 %v3834
    %3942 = vmatpush1.bf16.msra.mxu0 %v3833
    %3943 = vmatprep.subr.bf16.mxu0 %v3836
    %3944 = vmatpush1.bf16.msra.mxu0 %v3835
    %3945 = vmatprep.subr.bf16.mxu0 %v3838
    %3946 = vmatpush1.bf16.msra.mxu0 %v3837
    %3947 = vmatprep.subr.bf16.mxu0 %v3840
    %3948 = vmatpush1.bf16.msra.mxu0 %v3839
    %3949 = vmatprep.subr.bf16.mxu0 %v3842
    %3950 = vmatpush1.bf16.msra.mxu0 %v3841
    %3951 = vmatprep.subr.bf16.mxu0 %v3844
    %3952 = vmatpush1.bf16.msra.mxu0 %v3843
    %3953 = vmatprep.subr.bf16.mxu0 %v3846
    %3954 = vmatpush1.bf16.msra.mxu0 %v3845
    %3955 = vmatprep.subr.bf16.mxu0 %v3848
    %3956 = vmatpush1.bf16.msra.mxu0 %v3847
    %3957 = vmatprep.subr.bf16.mxu0 %v3850
    %3958 = vmatpush1.bf16.msra.mxu0 %v3849
    %3959 = vmatprep.subr.bf16.mxu0 %v3852
    %3960 = vmatpush1.bf16.msra.mxu0 %v3851
    %3961 = vmatprep.subr.bf16.mxu0 %v3854
    %3962 = vmatpush1.bf16.msra.mxu0 %v3853
    %3963 = vmatprep.subr.bf16.mxu0 %v3856
    %3964 = vmatpush1.bf16.msra.mxu0 %v3855
    %3965 = vmatprep.subr.bf16.mxu0 %v3858
    %3966 = vmatpush1.bf16.msra.mxu0 %v3857
    %3967 = vmatprep.subr.bf16.mxu0 %v3860
    %3968 = vmatpush1.bf16.msra.mxu0 %v3859
    %3969 = vmatprep.mubr.bf16.mxu0 %v3818
    %3970 = vmatmul.mubr.bf16.gmra.mrb[0].mxu0 %v3817
    %v3971 = vpop.f32.mrb[0].mxu0
    %v3972 = vadd.f32 %v3930, %v3971
    %v3973 = vpop.f32.mrb[0].mxu0
    %v3974 = vadd.f32 %v3934, %v3973
    %v3975 = vpop.f32.mrb[0].mxu0
    %v3976 = vadd.f32 %v3930, %v3975
    %v3977 = vpop.f32.mrb[0].mxu0
    %v3978 = vadd.f32 %v3934, %v3977
    %3979 = vmatprep.mubr.bf16.mxu0 %v3824
    %3980 = vmatmul.mubr.bf16.gmra.mrb[0].mxu0 %v3823
    %v3981 = vpop.f32.mrb[0].mxu0
    %v3982 = vadd.f32 %v3930, %v3981
    %v3983 = vpop.f32.mrb[0].mxu0
    %v3984 = vadd.f32 %v3934, %v3983
    %v3985 = vpop.f32.mrb[0].mxu0
    %v3986 = vadd.f32 %v3930, %v3985
    %v3987 = vpop.f32.mrb[0].mxu0
    %v3988 = vadd.f32 %v3934, %v3987
    %3989 = vdwg.mxu0
    %3990 = vmatprep.subr.bf16.mxu0 %v3862
    %3991 = vmatpush1.bf16.msra.mxu0 %v3861
    %3992 = vmatprep.subr.bf16.mxu0 %v3864
    %3993 = vmatpush1.bf16.msra.mxu0 %v3863
    %3994 = vmatprep.subr.bf16.mxu0 %v3866
    %3995 = vmatpush1.bf16.msra.mxu0 %v3865
    %3996 = vmatprep.subr.bf16.mxu0 %v3868
    %3997 = vmatpush1.bf16.msra.mxu0 %v3867
    %3998 = vmatprep.subr.bf16.mxu0 %v3870
    %3999 = vmatpush1.bf16.msra.mxu0 %v3869
    %4000 = vmatprep.subr.bf16.mxu0 %v3872
    %4001 = vmatpush1.bf16.msra.mxu0 %v3871
    %4002 = vmatprep.subr.bf16.mxu0 %v3874
    %4003 = vmatpush1.bf16.msra.mxu0 %v3873
    %4004 = vmatprep.subr.bf16.mxu0 %v3876
    %4005 = vmatpush1.bf16.msra.mxu0 %v3875
    %4006 = vmatprep.subr.bf16.mxu0 %v3878
    %4007 = vmatpush1.bf16.msra.mxu0 %v3877
    %4008 = vmatprep.subr.bf16.mxu0 %v3880
    %4009 = vmatpush1.bf16.msra.mxu0 %v3879
    %4010 = vmatprep.subr.bf16.mxu0 %v3882
    %4011 = vmatpush1.bf16.msra.mxu0 %v3881
    %4012 = vmatprep.subr.bf16.mxu0 %v3884
    %4013 = vmatpush1.bf16.msra.mxu0 %v3883
    %4014 = vmatprep.subr.bf16.mxu0 %v3886
    %4015 = vmatpush1.bf16.msra.mxu0 %v3885
    %4016 = vmatprep.subr.bf16.mxu0 %v3888
    %4017 = vmatpush1.bf16.msra.mxu0 %v3887
    %4018 = vmatprep.subr.bf16.mxu0 %v3890
    %4019 = vmatpush1.bf16.msra.mxu0 %v3889
    %4020 = vmatprep.subr.bf16.mxu0 %v3892
    %4021 = vmatpush1.bf16.msra.mxu0 %v3891
    %4022 = vmatprep.mubr.bf16.mxu0 %v3820
    %4023 = vmatmul.mubr.bf16.gmra.mrb[0].mxu0 %v3819
    %v4024 = vpop.f32.mrb[0].mxu0
    %v4025 = vadd.f32 %v3972, %v4024
    %v4026 = vpop.f32.mrb[0].mxu0
    %v4027 = vadd.f32 %v3974, %v4026
    %v4028 = vpop.f32.mrb[0].mxu0
    %v4029 = vadd.f32 %v3976, %v4028
    %v4030 = vpop.f32.mrb[0].mxu0
    %v4031 = vadd.f32 %v3978, %v4030
    %4032 = vmatprep.mubr.bf16.mxu0 %v3826
    %4033 = vmatmul.mubr.bf16.gmra.mrb[0].mxu0 %v3825
    %v4034 = vpop.f32.mrb[0].mxu0
    %v4035 = vadd.f32 %v3982, %v4034
    %v4036 = vpop.f32.mrb[0].mxu0
    %v4037 = vadd.f32 %v3984, %v4036
    %v4038 = vpop.f32.mrb[0].mxu0
    %v4039 = vadd.f32 %v3986, %v4038
    %v4040 = vpop.f32.mrb[0].mxu0
    %v4041 = vadd.f32 %v3988, %v4040
    %4042 = vdwg.mxu0
    %4043 = vmatprep.subr.bf16.mxu0 %v3894
    %4044 = vmatpush1.bf16.msra.mxu0 %v3893
    %4045 = vmatprep.subr.bf16.mxu0 %v3896
    %4046 = vmatpush1.bf16.msra.mxu0 %v3895
    %4047 = vmatprep.subr.bf16.mxu0 %v3898
    %4048 = vmatpush1.bf16.msra.mxu0 %v3897
    %4049 = vmatprep.subr.bf16.mxu0 %v3900
    %4050 = vmatpush1.bf16.msra.mxu0 %v3899
    %4051 = vmatprep.subr.bf16.mxu0 %v3902
    %4052 = vmatpush1.bf16.msra.mxu0 %v3901
    %4053 = vmatprep.subr.bf16.mxu0 %v3904
    %4054 = vmatpush1.bf16.msra.mxu0 %v3903
    %4055 = vmatprep.subr.bf16.mxu0 %v3906
    %4056 = vmatpush1.bf16.msra.mxu0 %v3905
    %4057 = vmatprep.subr.bf16.mxu0 %v3908
    %4058 = vmatpush1.bf16.msra.mxu0 %v3907
    %4059 = vmatprep.subr.bf16.mxu0 %v3910
    %4060 = vmatpush1.bf16.msra.mxu0 %v3909
    %4061 = vmatprep.subr.bf16.mxu0 %v3912
    %4062 = vmatpush1.bf16.msra.mxu0 %v3911
    %4063 = vmatprep.subr.bf16.mxu0 %v3914
    %4064 = vmatpush1.bf16.msra.mxu0 %v3913
    %4065 = vmatprep.subr.bf16.mxu0 %v3916
    %4066 = vmatpush1.bf16.msra.mxu0 %v3915
    %4067 = vmatprep.subr.bf16.mxu0 %v3918
    %4068 = vmatpush1.bf16.msra.mxu0 %v3917
    %4069 = vmatprep.subr.bf16.mxu0 %v3920
    %4070 = vmatpush1.bf16.msra.mxu0 %v3919
    %4071 = vmatprep.subr.bf16.mxu0 %v3922
    %4072 = vmatpush1.bf16.msra.mxu0 %v3921
    %4073 = vmatprep.subr.bf16.mxu0 %v3924
    %4074 = vmatpush1.bf16.msra.mxu0 %v3923
    %4075 = vmatprep.mubr.bf16.mxu0 %v3822
    %4076 = vmatmul.mubr.bf16.gmra.mrb[0].mxu0 %v3821
    %v4077 = vpop.f32.mrb[0].mxu0
    %v4078 = vadd.f32 %v4025, %v4077
    %v4079 = vpop.f32.mrb[0].mxu0
    %v4080 = vadd.f32 %v4027, %v4079
    %v4081 = vpop.f32.mrb[0].mxu0
    %v4082 = vadd.f32 %v4029, %v4081
    %v4083 = vpop.f32.mrb[0].mxu0
    %v4084 = vadd.f32 %v4031, %v4083
    %4085 = vmatprep.mubr.bf16.mxu0 %v3828
    %4086 = vmatmul.mubr.bf16.gmra.mrb[0].mxu0 %v3827
    %v4087 = vpop.f32.mrb[0].mxu0
    %v4088 = vadd.f32 %v4035, %v4087
    %v4089 = vpop.f32.mrb[0].mxu0
    %v4090 = vadd.f32 %v4037, %v4089
    %v4091 = vpop.f32.mrb[0].mxu0
    %v4092 = vadd.f32 %v4039, %v4091
    %v4093 = vpop.f32.mrb[0].mxu0
    %v4094 = vadd.f32 %v4041, %v4093
    %4095 = vdwg.mxu0
    %v4096 = vmax.f32 %v4078, 0.0
    %v4097 = vmax.f32 %v4080, 0.0
    %v4098 = vmax.f32 %v4082, 0.0
    %v4099 = vmax.f32 %v4084, 0.0
    %v4100 = vmax.f32 %v4088, 0.0
    %v4101 = vmax.f32 %v4090, 0.0
    %v4102 = vmax.f32 %v4092, 0.0
    %v4103 = vmax.f32 %v4094, 0.0
    %v4104 = vpack.c.bf16 %v4098, %v4096
    %v4105 = vpack.c.bf16 %v4099, %v4097
    %v4106 = vpack.c.bf16 %v4102, %v4100
    %v4107 = vpack.c.bf16 %v4103, %v4101
    %4108 = vst [vmem:[#allocation2 + $0x10] sm:$0xff] %v4104
    %4109 = vst [vmem:[#allocation2 + $0x18] sm:$0xff] %v4105
    %4110 = vst [vmem:[#allocation2 + $0x20] sm:$0xff] %v4106
    %4111 = vst [vmem:[#allocation2 + $0x28] sm:$0xff] %v4107
    %s4113 = sshll.u32 1, 14
    %s4114 = sxor.u32 4294967295, %s4113
    %s4116 = sadd.s32 2, %s169
    %s4118 = sshll.u32 7, 26
    %s4119 = sxor.u32 4294967295, %s4118
    %s4120 = sand.u32 0, %s4119
    %s4121 = sshll.u32 %s4116, 26
    %s4122 = sor.u32 %s4120, %s4121
    %s4123 = sshll.u32 %s595, 4
    %s4124 = int_to_ptr.vmem [resolvable:$true] %s4123
    %4127 = sst [smem:[#allocation34]] 256
    %s4128 = scalar_lea.smem [#allocation34], 1
    %4129 = sst [smem:[%s4128]] 256
    %s4130 = scalar_lea.smem [#allocation34], 2
    %4131 = sst [smem:[%s4130]] 2
    %s4132 = scalar_lea.smem [#allocation34], 3
    %4133 = sst [smem:[%s4132]] 64
    %s4134 = scalar_lea.smem [#allocation34], 4
    %4135 = sst [smem:[%s4134]] 128
    %s4136 = scalar_lea.smem [#allocation34], 5
    %4137 = sst [smem:[%s4136]] 2
    %s4138 = scalar_lea.smem [#allocation34], 6
    %4139 = sst [smem:[%s4138]] 128
    %s4140 = scalar_lea.smem [#allocation34], 7
    %4141 = sst [smem:[%s4140]] 64
    %s4142 = scalar_lea.smem [#allocation34], 8
    %4143 = sst [smem:[%s4142]] 4
    %4145 = dma.general %s10, 12288, %s4124, %s596, [#allocation33], [#allocation34], %s4122, 0
    %v4146 = vld [vmem:[#allocation2] sm:$0x80]
    %v4147 = vld [vmem:[#allocation2 + $0x8] sm:$0x80]
    %v4148 = vld [vmem:[#allocation2 + $0x10] sm:$0xff]
    %v4149 = vld [vmem:[#allocation2 + $0x18] sm:$0xff]
    %v4150 = vld [vmem:[#allocation2 + $0x20] sm:$0x7f]
    %v4151 = vld [vmem:[#allocation2 + $0x28] sm:$0x7f]
    %v4158 = vrot.slane %v4146, 7
    %v4159 = vrot.slane %v4148, 7
    %v4160 = vsel %vm767, %v4158, %v4159
    %v4161 = vrot.slane %v4147, 7
    %v4162 = vrot.slane %v4149, 7
    %v4163 = vsel %vm767, %v4161, %v4162
    %v4164 = vrot.slane %v4150, 7
    %v4165 = vsel %vm767, %v4159, %v4164
    %v4166 = vrot.slane %v4151, 7
    %v4167 = vsel %vm767, %v4162, %v4166
    %4172 = vst [vmem:[#allocation4] sm:$0xff] %v4160
    %4173 = vst [vmem:[#allocation4 + $0x8] sm:$0xff] %v4163
    %4174 = vst [vmem:[#allocation4 + $0xb0] sm:$0xff] %v4165
    %4175 = vst [vmem:[#allocation4 + $0xb8] sm:$0xff] %v4167
    %v4176 = vld [vmem:[#allocation2 + $0x10] sm:$0xff]
    %v4177 = vld [vmem:[#allocation2 + $0x18] sm:$0xff]
    %v4178 = vld [vmem:[#allocation2 + $0x20] sm:$0xff]
    %v4179 = vld [vmem:[#allocation2 + $0x28] sm:$0xff]
    %4180 = vst [vmem:[#allocation4 + $0x10] sm:$0xff] %v4176
    %4181 = vst [vmem:[#allocation4 + $0x18] sm:$0xff] %v4177
    %4182 = vst [vmem:[#allocation4 + $0xc0] sm:$0xff] %v4178
    %4183 = vst [vmem:[#allocation4 + $0xc8] sm:$0xff] %v4179
    %v4184 = vld [vmem:[#allocation2 + $0x10] sm:$0xfe]
    %v4185 = vld [vmem:[#allocation2 + $0x18] sm:$0xfe]
    %v4186 = vld [vmem:[#allocation2 + $0x20] sm:$0xff]
    %v4187 = vld [vmem:[#allocation2 + $0x28] sm:$0xff]
    %v4188 = vld [vmem:[#allocation2 + $0x30] sm:$0x1]
    %v4189 = vld [vmem:[#allocation2 + $0x38] sm:$0x1]
    %v4196 = vrot.slane %v4184, 1
    %v4197 = vrot.slane %v4186, 1
    %v4198 = vsel %vm806, %v4196, %v4197
    %v4199 = vrot.slane %v4185, 1
    %v4200 = vrot.slane %v4187, 1
    %v4201 = vsel %vm806, %v4199, %v4200
    %v4202 = vrot.slane %v4188, 1
    %v4203 = vsel %vm806, %v4197, %v4202
    %v4204 = vrot.slane %v4189, 1
    %v4205 = vsel %vm806, %v4200, %v4204
    %4210 = vst [vmem:[#allocation4 + $0x20] sm:$0xff] %v4198
    %4211 = vst [vmem:[#allocation4 + $0x28] sm:$0xff] %v4201
    %4212 = vst [vmem:[#allocation4 + $0xd0] sm:$0xff] %v4203
    %4213 = vst [vmem:[#allocation4 + $0xd8] sm:$0xff] %v4205
    %s4214 = sshll.u32 %s3814, 4
    %4215 = dma.done [#allocation6], %s4214
    %v4216 = vld [vmem:[#allocation4] sm:$0xff]
    %v4217 = vld [vmem:[#allocation4 + $0x8] sm:$0xff]
    %v4218 = vld [vmem:[#allocation4 + $0x10] sm:$0xff]
    %v4219 = vld [vmem:[#allocation4 + $0x18] sm:$0xff]
    %v4220 = vld [vmem:[#allocation4 + $0x20] sm:$0xff]
    %v4221 = vld [vmem:[#allocation4 + $0x28] sm:$0xff]
    %v4222 = vld [vmem:[#allocation4 + $0xb0] sm:$0xff]
    %v4223 = vld [vmem:[#allocation4 + $0xb8] sm:$0xff]
    %v4224 = vld [vmem:[#allocation4 + $0xc0] sm:$0xff]
    %v4225 = vld [vmem:[#allocation4 + $0xc8] sm:$0xff]
    %v4226 = vld [vmem:[#allocation4 + $0xd0] sm:$0xff]
    %v4227 = vld [vmem:[#allocation4 + $0xd8] sm:$0xff]
    %v4228 = vld [vmem:[#allocation5] sm:$0xff]
    %v4229 = vld [vmem:[#allocation5 + $0x8] sm:$0xff]
    %v4230 = vld [vmem:[#allocation5 + $0x10] sm:$0xff]
    %v4231 = vld [vmem:[#allocation5 + $0x18] sm:$0xff]
    %v4232 = vld [vmem:[#allocation5 + $0x20] sm:$0xff]
    %v4233 = vld [vmem:[#allocation5 + $0x28] sm:$0xff]
    %v4234 = vld [vmem:[#allocation5 + $0x30] sm:$0xff]
    %v4235 = vld [vmem:[#allocation5 + $0x38] sm:$0xff]
    %v4236 = vld [vmem:[#allocation5 + $0x40] sm:$0xff]
    %v4237 = vld [vmem:[#allocation5 + $0x48] sm:$0xff]
    %v4238 = vld [vmem:[#allocation5 + $0x50] sm:$0xff]
    %v4239 = vld [vmem:[#allocation5 + $0x58] sm:$0xff]
    %v4240 = vld [vmem:[#allocation5 + $0x60] sm:$0xff]
    %v4241 = vld [vmem:[#allocation5 + $0x68] sm:$0xff]
    %v4242 = vld [vmem:[#allocation5 + $0x70] sm:$0xff]
    %v4243 = vld [vmem:[#allocation5 + $0x78] sm:$0xff]
    %v4244 = vld [vmem:[#allocation5 + $0x80] sm:$0xff]
    %v4245 = vld [vmem:[#allocation5 + $0x88] sm:$0xff]
    %v4246 = vld [vmem:[#allocation5 + $0x90] sm:$0xff]
    %v4247 = vld [vmem:[#allocation5 + $0x98] sm:$0xff]
    %v4248 = vld [vmem:[#allocation5 + $0xa0] sm:$0xff]
    %v4249 = vld [vmem:[#allocation5 + $0xa8] sm:$0xff]
    %v4250 = vld [vmem:[#allocation5 + $0xb0] sm:$0xff]
    %v4251 = vld [vmem:[#allocation5 + $0xb8] sm:$0xff]
    %v4252 = vld [vmem:[#allocation5 + $0xc0] sm:$0xff]
    %v4253 = vld [vmem:[#allocation5 + $0xc8] sm:$0xff]
    %v4254 = vld [vmem:[#allocation5 + $0xd0] sm:$0xff]
    %v4255 = vld [vmem:[#allocation5 + $0xd8] sm:$0xff]
    %v4256 = vld [vmem:[#allocation5 + $0xe0] sm:$0xff]
    %v4257 = vld [vmem:[#allocation5 + $0xe8] sm:$0xff]
    %v4258 = vld [vmem:[#allocation5 + $0xf0] sm:$0xff]
    %v4259 = vld [vmem:[#allocation5 + $0xf8] sm:$0xff]
    %v4260 = vld [vmem:[#allocation5 + $0x100] sm:$0xff]
    %v4261 = vld [vmem:[#allocation5 + $0x108] sm:$0xff]
    %v4262 = vld [vmem:[#allocation5 + $0x110] sm:$0xff]
    %v4263 = vld [vmem:[#allocation5 + $0x118] sm:$0xff]
    %v4264 = vld [vmem:[#allocation5 + $0x120] sm:$0xff]
    %v4265 = vld [vmem:[#allocation5 + $0x128] sm:$0xff]
    %v4266 = vld [vmem:[#allocation5 + $0x130] sm:$0xff]
    %v4267 = vld [vmem:[#allocation5 + $0x138] sm:$0xff]
    %v4268 = vld [vmem:[#allocation5 + $0x140] sm:$0xff]
    %v4269 = vld [vmem:[#allocation5 + $0x148] sm:$0xff]
    %v4270 = vld [vmem:[#allocation5 + $0x150] sm:$0xff]
    %v4271 = vld [vmem:[#allocation5 + $0x158] sm:$0xff]
    %v4272 = vld [vmem:[#allocation5 + $0x160] sm:$0xff]
    %v4273 = vld [vmem:[#allocation5 + $0x168] sm:$0xff]
    %v4274 = vld [vmem:[#allocation5 + $0x170] sm:$0xff]
    %v4275 = vld [vmem:[#allocation5 + $0x178] sm:$0xff]
    %v4276 = vld [vmem:[#allocation5 + $0x180] sm:$0xff]
    %v4277 = vld [vmem:[#allocation5 + $0x188] sm:$0xff]
    %v4278 = vld [vmem:[#allocation5 + $0x190] sm:$0xff]
    %v4279 = vld [vmem:[#allocation5 + $0x198] sm:$0xff]
    %v4280 = vld [vmem:[#allocation5 + $0x1a0] sm:$0xff]
    %v4281 = vld [vmem:[#allocation5 + $0x1a8] sm:$0xff]
    %v4282 = vld [vmem:[#allocation5 + $0x1b0] sm:$0xff]
    %v4283 = vld [vmem:[#allocation5 + $0x1b8] sm:$0xff]
    %v4284 = vld [vmem:[#allocation5 + $0x1c0] sm:$0xff]
    %v4285 = vld [vmem:[#allocation5 + $0x1c8] sm:$0xff]
    %v4286 = vld [vmem:[#allocation5 + $0x1d0] sm:$0xff]
    %v4287 = vld [vmem:[#allocation5 + $0x1d8] sm:$0xff]
    %v4288 = vld [vmem:[#allocation5 + $0x1e0] sm:$0xff]
    %v4289 = vld [vmem:[#allocation5 + $0x1e8] sm:$0xff]
    %v4290 = vld [vmem:[#allocation5 + $0x1f0] sm:$0xff]
    %v4291 = vld [vmem:[#allocation5 + $0x1f8] sm:$0xff]
    %v4292 = vld [vmem:[#allocation5 + $0x200] sm:$0xff]
    %v4293 = vld [vmem:[#allocation5 + $0x208] sm:$0xff]
    %v4294 = vld [vmem:[#allocation5 + $0x210] sm:$0xff]
    %v4295 = vld [vmem:[#allocation5 + $0x218] sm:$0xff]
    %v4296 = vld [vmem:[#allocation5 + $0x220] sm:$0xff]
    %v4297 = vld [vmem:[#allocation5 + $0x228] sm:$0xff]
    %v4298 = vld [vmem:[#allocation5 + $0x230] sm:$0xff]
    %v4299 = vld [vmem:[#allocation5 + $0x238] sm:$0xff]
    %v4300 = vld [vmem:[#allocation5 + $0x240] sm:$0xff]
    %v4301 = vld [vmem:[#allocation5 + $0x248] sm:$0xff]
    %v4302 = vld [vmem:[#allocation5 + $0x250] sm:$0xff]
    %v4303 = vld [vmem:[#allocation5 + $0x258] sm:$0xff]
    %v4304 = vld [vmem:[#allocation5 + $0x260] sm:$0xff]
    %v4305 = vld [vmem:[#allocation5 + $0x268] sm:$0xff]
    %v4306 = vld [vmem:[#allocation5 + $0x270] sm:$0xff]
    %v4307 = vld [vmem:[#allocation5 + $0x278] sm:$0xff]
    %v4308 = vld [vmem:[#allocation5 + $0x280] sm:$0xff]
    %v4309 = vld [vmem:[#allocation5 + $0x288] sm:$0xff]
    %v4310 = vld [vmem:[#allocation5 + $0x290] sm:$0xff]
    %v4311 = vld [vmem:[#allocation5 + $0x298] sm:$0xff]
    %v4312 = vld [vmem:[#allocation5 + $0x2a0] sm:$0xff]
    %v4313 = vld [vmem:[#allocation5 + $0x2a8] sm:$0xff]
    %v4314 = vld [vmem:[#allocation5 + $0x2b0] sm:$0xff]
    %v4315 = vld [vmem:[#allocation5 + $0x2b8] sm:$0xff]
    %v4316 = vld [vmem:[#allocation5 + $0x2c0] sm:$0xff]
    %v4317 = vld [vmem:[#allocation5 + $0x2c8] sm:$0xff]
    %v4318 = vld [vmem:[#allocation5 + $0x2d0] sm:$0xff]
    %v4319 = vld [vmem:[#allocation5 + $0x2d8] sm:$0xff]
    %v4320 = vld [vmem:[#allocation5 + $0x2e0] sm:$0xff]
    %v4321 = vld [vmem:[#allocation5 + $0x2e8] sm:$0xff]
    %v4322 = vld [vmem:[#allocation5 + $0x2f0] sm:$0xff]
    %v4323 = vld [vmem:[#allocation5 + $0x2f8] sm:$0xff]
    %v4324 = vld [vmem:[#allocation20] sm:$0x3]
    %v4326 = vlaneseq
    %v4327 = vshrl.u32 %v4326, 7
    %v4328 = vsub.s32 0, %v4327
    %v4329 = vrot.slane %v4324, %v4328
    %v4330 = vlaneseq
    %v4331 = vshrl.u32 %v4330, 7
    %v4332 = vsub.s32 1, %v4331
    %v4333 = vrot.slane %v4324, %v4332
    %4336 = vmatprep.subr.bf16.mxu0 %v4229
    %4337 = vmatpush1.bf16.msra.mxu0 %v4228
    %4338 = vmatprep.subr.bf16.mxu0 %v4231
    %4339 = vmatpush1.bf16.msra.mxu0 %v4230
    %4340 = vmatprep.subr.bf16.mxu0 %v4233
    %4341 = vmatpush1.bf16.msra.mxu0 %v4232
    %4342 = vmatprep.subr.bf16.mxu0 %v4235
    %4343 = vmatpush1.bf16.msra.mxu0 %v4234
    %4344 = vmatprep.subr.bf16.mxu0 %v4237
    %4345 = vmatpush1.bf16.msra.mxu0 %v4236
    %4346 = vmatprep.subr.bf16.mxu0 %v4239
    %4347 = vmatpush1.bf16.msra.mxu0 %v4238
    %4348 = vmatprep.subr.bf16.mxu0 %v4241
    %4349 = vmatpush1.bf16.msra.mxu0 %v4240
    %4350 = vmatprep.subr.bf16.mxu0 %v4243
    %4351 = vmatpush1.bf16.msra.mxu0 %v4242
    %4352 = vmatprep.subr.bf16.mxu0 %v4245
    %4353 = vmatpush1.bf16.msra.mxu0 %v4244
    %4354 = vmatprep.subr.bf16.mxu0 %v4247
    %4355 = vmatpush1.bf16.msra.mxu0 %v4246
    %4356 = vmatprep.subr.bf16.mxu0 %v4249
    %4357 = vmatpush1.bf16.msra.mxu0 %v4248
    %4358 = vmatprep.subr.bf16.mxu0 %v4251
    %4359 = vmatpush1.bf16.msra.mxu0 %v4250
    %4360 = vmatprep.subr.bf16.mxu0 %v4253
    %4361 = vmatpush1.bf16.msra.mxu0 %v4252
    %4362 = vmatprep.subr.bf16.mxu0 %v4255
    %4363 = vmatpush1.bf16.msra.mxu0 %v4254
    %4364 = vmatprep.subr.bf16.mxu0 %v4257
    %4365 = vmatpush1.bf16.msra.mxu0 %v4256
    %4366 = vmatprep.subr.bf16.mxu0 %v4259
    %4367 = vmatpush1.bf16.msra.mxu0 %v4258
    %4368 = vmatprep.mubr.bf16.mxu0 %v4217
    %4369 = vmatmul.mubr.bf16.gmra.mrb[0].mxu0 %v4216
    %v4370 = vpop.f32.mrb[0].mxu0
    %v4371 = vadd.f32 %v4329, %v4370
    %v4372 = vpop.f32.mrb[0].mxu0
    %v4373 = vadd.f32 %v4333, %v4372
    %v4374 = vpop.f32.mrb[0].mxu0
    %v4375 = vadd.f32 %v4329, %v4374
    %v4376 = vpop.f32.mrb[0].mxu0
    %v4377 = vadd.f32 %v4333, %v4376
    %4378 = vmatprep.mubr.bf16.mxu0 %v4223
    %4379 = vmatmul.mubr.bf16.gmra.mrb[0].mxu0 %v4222
    %v4380 = vpop.f32.mrb[0].mxu0
    %v4381 = vadd.f32 %v4329, %v4380
    %v4382 = vpop.f32.mrb[0].mxu0
    %v4383 = vadd.f32 %v4333, %v4382
    %v4384 = vpop.f32.mrb[0].mxu0
    %v4385 = vadd.f32 %v4329, %v4384
    %v4386 = vpop.f32.mrb[0].mxu0
    %v4387 = vadd.f32 %v4333, %v4386
    %4388 = vdwg.mxu0
    %4389 = vmatprep.subr.bf16.mxu0 %v4261
    %4390 = vmatpush1.bf16.msra.mxu0 %v4260
    %4391 = vmatprep.subr.bf16.mxu0 %v4263
    %4392 = vmatpush1.bf16.msra.mxu0 %v4262
    %4393 = vmatprep.subr.bf16.mxu0 %v4265
    %4394 = vmatpush1.bf16.msra.mxu0 %v4264
    %4395 = vmatprep.subr.bf16.mxu0 %v4267
    %4396 = vmatpush1.bf16.msra.mxu0 %v4266
    %4397 = vmatprep.subr.bf16.mxu0 %v4269
    %4398 = vmatpush1.bf16.msra.mxu0 %v4268
    %4399 = vmatprep.subr.bf16.mxu0 %v4271
    %4400 = vmatpush1.bf16.msra.mxu0 %v4270
    %4401 = vmatprep.subr.bf16.mxu0 %v4273
    %4402 = vmatpush1.bf16.msra.mxu0 %v4272
    %4403 = vmatprep.subr.bf16.mxu0 %v4275
    %4404 = vmatpush1.bf16.msra.mxu0 %v4274
    %4405 = vmatprep.subr.bf16.mxu0 %v4277
    %4406 = vmatpush1.bf16.msra.mxu0 %v4276
    %4407 = vmatprep.subr.bf16.mxu0 %v4279
    %4408 = vmatpush1.bf16.msra.mxu0 %v4278
    %4409 = vmatprep.subr.bf16.mxu0 %v4281
    %4410 = vmatpush1.bf16.msra.mxu0 %v4280
    %4411 = vmatprep.subr.bf16.mxu0 %v4283
    %4412 = vmatpush1.bf16.msra.mxu0 %v4282
    %4413 = vmatprep.subr.bf16.mxu0 %v4285
    %4414 = vmatpush1.bf16.msra.mxu0 %v4284
    %4415 = vmatprep.subr.bf16.mxu0 %v4287
    %4416 = vmatpush1.bf16.msra.mxu0 %v4286
    %4417 = vmatprep.subr.bf16.mxu0 %v4289
    %4418 = vmatpush1.bf16.msra.mxu0 %v4288
    %4419 = vmatprep.subr.bf16.mxu0 %v4291
    %4420 = vmatpush1.bf16.msra.mxu0 %v4290
    %4421 = vmatprep.mubr.bf16.mxu0 %v4219
    %4422 = vmatmul.mubr.bf16.gmra.mrb[0].mxu0 %v4218
    %v4423 = vpop.f32.mrb[0].mxu0
    %v4424 = vadd.f32 %v4371, %v4423
    %v4425 = vpop.f32.mrb[0].mxu0
    %v4426 = vadd.f32 %v4373, %v4425
    %v4427 = vpop.f32.mrb[0].mxu0
    %v4428 = vadd.f32 %v4375, %v4427
    %v4429 = vpop.f32.mrb[0].mxu0
    %v4430 = vadd.f32 %v4377, %v4429
    %4431 = vmatprep.mubr.bf16.mxu0 %v4225
    %4432 = vmatmul.mubr.bf16.gmra.mrb[0].mxu0 %v4224
    %v4433 = vpop.f32.mrb[0].mxu0
    %v4434 = vadd.f32 %v4381, %v4433
    %v4435 = vpop.f32.mrb[0].mxu0
    %v4436 = vadd.f32 %v4383, %v4435
    %v4437 = vpop.f32.mrb[0].mxu0
    %v4438 = vadd.f32 %v4385, %v4437
    %v4439 = vpop.f32.mrb[0].mxu0
    %v4440 = vadd.f32 %v4387, %v4439
    %4441 = vdwg.mxu0
    %4442 = vmatprep.subr.bf16.mxu0 %v4293
    %4443 = vmatpush1.bf16.msra.mxu0 %v4292
    %4444 = vmatprep.subr.bf16.mxu0 %v4295
    %4445 = vmatpush1.bf16.msra.mxu0 %v4294
    %4446 = vmatprep.subr.bf16.mxu0 %v4297
    %4447 = vmatpush1.bf16.msra.mxu0 %v4296
    %4448 = vmatprep.subr.bf16.mxu0 %v4299
    %4449 = vmatpush1.bf16.msra.mxu0 %v4298
    %4450 = vmatprep.subr.bf16.mxu0 %v4301
    %4451 = vmatpush1.bf16.msra.mxu0 %v4300
    %4452 = vmatprep.subr.bf16.mxu0 %v4303
    %4453 = vmatpush1.bf16.msra.mxu0 %v4302
    %4454 = vmatprep.subr.bf16.mxu0 %v4305
    %4455 = vmatpush1.bf16.msra.mxu0 %v4304
    %4456 = vmatprep.subr.bf16.mxu0 %v4307
    %4457 = vmatpush1.bf16.msra.mxu0 %v4306
    %4458 = vmatprep.subr.bf16.mxu0 %v4309
    %4459 = vmatpush1.bf16.msra.mxu0 %v4308
    %4460 = vmatprep.subr.bf16.mxu0 %v4311
    %4461 = vmatpush1.bf16.msra.mxu0 %v4310
    %4462 = vmatprep.subr.bf16.mxu0 %v4313
    %4463 = vmatpush1.bf16.msra.mxu0 %v4312
    %4464 = vmatprep.subr.bf16.mxu0 %v4315
    %4465 = vmatpush1.bf16.msra.mxu0 %v4314
    %4466 = vmatprep.subr.bf16.mxu0 %v4317
    %4467 = vmatpush1.bf16.msra.mxu0 %v4316
    %4468 = vmatprep.subr.bf16.mxu0 %v4319
    %4469 = vmatpush1.bf16.msra.mxu0 %v4318
    %4470 = vmatprep.subr.bf16.mxu0 %v4321
    %4471 = vmatpush1.bf16.msra.mxu0 %v4320
    %4472 = vmatprep.subr.bf16.mxu0 %v4323
    %4473 = vmatpush1.bf16.msra.mxu0 %v4322
    %4474 = vmatprep.mubr.bf16.mxu0 %v4221
    %4475 = vmatmul.mubr.bf16.gmra.mrb[0].mxu0 %v4220
    %v4476 = vpop.f32.mrb[0].mxu0
    %v4477 = vadd.f32 %v4424, %v4476
    %v4478 = vpop.f32.mrb[0].mxu0
    %v4479 = vadd.f32 %v4426, %v4478
    %v4480 = vpop.f32.mrb[0].mxu0
    %v4481 = vadd.f32 %v4428, %v4480
    %v4482 = vpop.f32.mrb[0].mxu0
    %v4483 = vadd.f32 %v4430, %v4482
    %4484 = vmatprep.mubr.bf16.mxu0 %v4227
    %4485 = vmatmul.mubr.bf16.gmra.mrb[0].mxu0 %v4226
    %v4486 = vpop.f32.mrb[0].mxu0
    %v4487 = vadd.f32 %v4434, %v4486
    %v4488 = vpop.f32.mrb[0].mxu0
    %v4489 = vadd.f32 %v4436, %v4488
    %v4490 = vpop.f32.mrb[0].mxu0
    %v4491 = vadd.f32 %v4438, %v4490
    %v4492 = vpop.f32.mrb[0].mxu0
    %v4493 = vadd.f32 %v4440, %v4492
    %4494 = vdwg.mxu0
    %v4495 = vmax.f32 %v4477, 0.0
    %v4496 = vmax.f32 %v4479, 0.0
    %v4497 = vmax.f32 %v4481, 0.0
    %v4498 = vmax.f32 %v4483, 0.0
    %v4499 = vmax.f32 %v4487, 0.0
    %v4500 = vmax.f32 %v4489, 0.0
    %v4501 = vmax.f32 %v4491, 0.0
    %v4502 = vmax.f32 %v4493, 0.0
    %v4503 = vpack.c.bf16 %v4497, %v4495
    %v4504 = vpack.c.bf16 %v4498, %v4496
    %v4505 = vpack.c.bf16 %v4501, %v4499
    %v4506 = vpack.c.bf16 %v4502, %v4500
    %4507 = vst [vmem:[#allocation2 + $0x10] sm:$0xff] %v4503
    %4508 = vst [vmem:[#allocation2 + $0x18] sm:$0xff] %v4504
    %4509 = vst [vmem:[#allocation2 + $0x20] sm:$0xff] %v4505
    %4510 = vst [vmem:[#allocation2 + $0x28] sm:$0xff] %v4506
    %v4511 = vld [vmem:[#allocation2] sm:$0x80]
    %v4512 = vld [vmem:[#allocation2 + $0x8] sm:$0x80]
    %v4513 = vld [vmem:[#allocation2 + $0x10] sm:$0xff]
    %v4514 = vld [vmem:[#allocation2 + $0x18] sm:$0xff]
    %v4515 = vld [vmem:[#allocation2 + $0x20] sm:$0x7f]
    %v4516 = vld [vmem:[#allocation2 + $0x28] sm:$0x7f]
    %v4523 = vrot.slane %v4511, 7
    %v4524 = vrot.slane %v4513, 7
    %v4525 = vsel %vm767, %v4523, %v4524
    %v4526 = vrot.slane %v4512, 7
    %v4527 = vrot.slane %v4514, 7
    %v4528 = vsel %vm767, %v4526, %v4527
    %v4529 = vrot.slane %v4515, 7
    %v4530 = vsel %vm767, %v4524, %v4529
    %v4531 = vrot.slane %v4516, 7
    %v4532 = vsel %vm767, %v4527, %v4531
    %4537 = vst [vmem:[#allocation4] sm:$0xff] %v4525
    %4538 = vst [vmem:[#allocation4 + $0x8] sm:$0xff] %v4528
    %4539 = vst [vmem:[#allocation4 + $0xb0] sm:$0xff] %v4530
    %4540 = vst [vmem:[#allocation4 + $0xb8] sm:$0xff] %v4532
    %v4541 = vld [vmem:[#allocation2 + $0x10] sm:$0xff]
    %v4542 = vld [vmem:[#allocation2 + $0x18] sm:$0xff]
    %v4543 = vld [vmem:[#allocation2 + $0x20] sm:$0xff]
    %v4544 = vld [vmem:[#allocation2 + $0x28] sm:$0xff]
    %4545 = vst [vmem:[#allocation4 + $0x10] sm:$0xff] %v4541
    %4546 = vst [vmem:[#allocation4 + $0x18] sm:$0xff] %v4542
    %4547 = vst [vmem:[#allocation4 + $0xc0] sm:$0xff] %v4543
    %4548 = vst [vmem:[#allocation4 + $0xc8] sm:$0xff] %v4544
    %v4549 = vld [vmem:[#allocation2 + $0x10] sm:$0xfe]
    %v4550 = vld [vmem:[#allocation2 + $0x18] sm:$0xfe]
    %v4551 = vld [vmem:[#allocation2 + $0x20] sm:$0xff]
    %v4552 = vld [vmem:[#allocation2 + $0x28] sm:$0xff]
    %v4553 = vld [vmem:[#allocation2 + $0x30] sm:$0x1]
    %v4554 = vld [vmem:[#allocation2 + $0x38] sm:$0x1]
    %v4561 = vrot.slane %v4549, 1
    %v4562 = vrot.slane %v4551, 1
    %v4563 = vsel %vm806, %v4561, %v4562
    %v4564 = vrot.slane %v4550, 1
    %v4565 = vrot.slane %v4552, 1
    %v4566 = vsel %vm806, %v4564, %v4565
    %v4567 = vrot.slane %v4553, 1
    %v4568 = vsel %vm806, %v4562, %v4567
    %v4569 = vrot.slane %v4554, 1
    %v4570 = vsel %vm806, %v4565, %v4569
    %4575 = vst [vmem:[#allocation4 + $0x20] sm:$0xff] %v4563
    %4576 = vst [vmem:[#allocation4 + $0x28] sm:$0xff] %v4566
    %4577 = vst [vmem:[#allocation4 + $0xd0] sm:$0xff] %v4568
    %4578 = vst [vmem:[#allocation4 + $0xd8] sm:$0xff] %v4570
    %s4579 = sshll.u32 %s3814, 4
    %4580 = dma.done %s596, %s4579
    %v4581 = vld [vmem:[#allocation4] sm:$0xff]
    %v4582 = vld [vmem:[#allocation4 + $0x8] sm:$0xff]
    %v4583 = vld [vmem:[#allocation4 + $0x10] sm:$0xff]
    %v4584 = vld [vmem:[#allocation4 + $0x18] sm:$0xff]
    %v4585 = vld [vmem:[#allocation4 + $0x20] sm:$0xff]
    %v4586 = vld [vmem:[#allocation4 + $0x28] sm:$0xff]
    %v4587 = vld [vmem:[#allocation4 + $0xb0] sm:$0xff]
    %v4588 = vld [vmem:[#allocation4 + $0xb8] sm:$0xff]
    %v4589 = vld [vmem:[#allocation4 + $0xc0] sm:$0xff]
    %v4590 = vld [vmem:[#allocation4 + $0xc8] sm:$0xff]
    %v4591 = vld [vmem:[#allocation4 + $0xd0] sm:$0xff]
    %v4592 = vld [vmem:[#allocation4 + $0xd8] sm:$0xff]
    %v4593 = vld [vmem:[#allocation5 + $0xb00] sm:$0xff]
    %v4594 = vld [vmem:[#allocation5 + $0xb08] sm:$0xff]
    %v4595 = vld [vmem:[#allocation5 + $0xb10] sm:$0xff]
    %v4596 = vld [vmem:[#allocation5 + $0xb18] sm:$0xff]
    %v4597 = vld [vmem:[#allocation5 + $0xb20] sm:$0xff]
    %v4598 = vld [vmem:[#allocation5 + $0xb28] sm:$0xff]
    %v4599 = vld [vmem:[#allocation5 + $0xb30] sm:$0xff]
    %v4600 = vld [vmem:[#allocation5 + $0xb38] sm:$0xff]
    %v4601 = vld [vmem:[#allocation5 + $0xb40] sm:$0xff]
    %v4602 = vld [vmem:[#allocation5 + $0xb48] sm:$0xff]
    %v4603 = vld [vmem:[#allocation5 + $0xb50] sm:$0xff]
    %v4604 = vld [vmem:[#allocation5 + $0xb58] sm:$0xff]
    %v4605 = vld [vmem:[#allocation5 + $0xb60] sm:$0xff]
    %v4606 = vld [vmem:[#allocation5 + $0xb68] sm:$0xff]
    %v4607 = vld [vmem:[#allocation5 + $0xb70] sm:$0xff]
    %v4608 = vld [vmem:[#allocation5 + $0xb78] sm:$0xff]
    %v4609 = vld [vmem:[#allocation5 + $0xb80] sm:$0xff]
    %v4610 = vld [vmem:[#allocation5 + $0xb88] sm:$0xff]
    %v4611 = vld [vmem:[#allocation5 + $0xb90] sm:$0xff]
    %v4612 = vld [vmem:[#allocation5 + $0xb98] sm:$0xff]
    %v4613 = vld [vmem:[#allocation5 + $0xba0] sm:$0xff]
    %v4614 = vld [vmem:[#allocation5 + $0xba8] sm:$0xff]
    %v4615 = vld [vmem:[#allocation5 + $0xbb0] sm:$0xff]
    %v4616 = vld [vmem:[#allocation5 + $0xbb8] sm:$0xff]
    %v4617 = vld [vmem:[#allocation5 + $0xbc0] sm:$0xff]
    %v4618 = vld [vmem:[#allocation5 + $0xbc8] sm:$0xff]
    %v4619 = vld [vmem:[#allocation5 + $0xbd0] sm:$0xff]
    %v4620 = vld [vmem:[#allocation5 + $0xbd8] sm:$0xff]
    %v4621 = vld [vmem:[#allocation5 + $0xbe0] sm:$0xff]
    %v4622 = vld [vmem:[#allocation5 + $0xbe8] sm:$0xff]
    %v4623 = vld [vmem:[#allocation5 + $0xbf0] sm:$0xff]
    %v4624 = vld [vmem:[#allocation5 + $0xbf8] sm:$0xff]
    %v4625 = vld [vmem:[#allocation5 + $0xc00] sm:$0xff]
    %v4626 = vld [vmem:[#allocation5 + $0xc08] sm:$0xff]
    %v4627 = vld [vmem:[#allocation5 + $0xc10] sm:$0xff]
    %v4628 = vld [vmem:[#allocation5 + $0xc18] sm:$0xff]
    %v4629 = vld [vmem:[#allocation5 + $0xc20] sm:$0xff]
    %v4630 = vld [vmem:[#allocation5 + $0xc28] sm:$0xff]
    %v4631 = vld [vmem:[#allocation5 + $0xc30] sm:$0xff]
    %v4632 = vld [vmem:[#allocation5 + $0xc38] sm:$0xff]
    %v4633 = vld [vmem:[#allocation5 + $0xc40] sm:$0xff]
    %v4634 = vld [vmem:[#allocation5 + $0xc48] sm:$0xff]
    %v4635 = vld [vmem:[#allocation5 + $0xc50] sm:$0xff]
    %v4636 = vld [vmem:[#allocation5 + $0xc58] sm:$0xff]
    %v4637 = vld [vmem:[#allocation5 + $0xc60] sm:$0xff]
    %v4638 = vld [vmem:[#allocation5 + $0xc68] sm:$0xff]
    %v4639 = vld [vmem:[#allocation5 + $0xc70] sm:$0xff]
    %v4640 = vld [vmem:[#allocation5 + $0xc78] sm:$0xff]
    %v4641 = vld [vmem:[#allocation5 + $0xc80] sm:$0xff]
    %v4642 = vld [vmem:[#allocation5 + $0xc88] sm:$0xff]
    %v4643 = vld [vmem:[#allocation5 + $0xc90] sm:$0xff]
    %v4644 = vld [vmem:[#allocation5 + $0xc98] sm:$0xff]
    %v4645 = vld [vmem:[#allocation5 + $0xca0] sm:$0xff]
    %v4646 = vld [vmem:[#allocation5 + $0xca8] sm:$0xff]
    %v4647 = vld [vmem:[#allocation5 + $0xcb0] sm:$0xff]
    %v4648 = vld [vmem:[#allocation5 + $0xcb8] sm:$0xff]
    %v4649 = vld [vmem:[#allocation5 + $0xcc0] sm:$0xff]
    %v4650 = vld [vmem:[#allocation5 + $0xcc8] sm:$0xff]
    %v4651 = vld [vmem:[#allocation5 + $0xcd0] sm:$0xff]
    %v4652 = vld [vmem:[#allocation5 + $0xcd8] sm:$0xff]
    %v4653 = vld [vmem:[#allocation5 + $0xce0] sm:$0xff]
    %v4654 = vld [vmem:[#allocation5 + $0xce8] sm:$0xff]
    %v4655 = vld [vmem:[#allocation5 + $0xcf0] sm:$0xff]
    %v4656 = vld [vmem:[#allocation5 + $0xcf8] sm:$0xff]
    %v4657 = vld [vmem:[#allocation5 + $0xd00] sm:$0xff]
    %v4658 = vld [vmem:[#allocation5 + $0xd08] sm:$0xff]
    %v4659 = vld [vmem:[#allocation5 + $0xd10] sm:$0xff]
    %v4660 = vld [vmem:[#allocation5 + $0xd18] sm:$0xff]
    %v4661 = vld [vmem:[#allocation5 + $0xd20] sm:$0xff]
    %v4662 = vld [vmem:[#allocation5 + $0xd28] sm:$0xff]
    %v4663 = vld [vmem:[#allocation5 + $0xd30] sm:$0xff]
    %v4664 = vld [vmem:[#allocation5 + $0xd38] sm:$0xff]
    %v4665 = vld [vmem:[#allocation5 + $0xd40] sm:$0xff]
    %v4666 = vld [vmem:[#allocation5 + $0xd48] sm:$0xff]
    %v4667 = vld [vmem:[#allocation5 + $0xd50] sm:$0xff]
    %v4668 = vld [vmem:[#allocation5 + $0xd58] sm:$0xff]
    %v4669 = vld [vmem:[#allocation5 + $0xd60] sm:$0xff]
    %v4670 = vld [vmem:[#allocation5 + $0xd68] sm:$0xff]
    %v4671 = vld [vmem:[#allocation5 + $0xd70] sm:$0xff]
    %v4672 = vld [vmem:[#allocation5 + $0xd78] sm:$0xff]
    %v4673 = vld [vmem:[#allocation5 + $0xd80] sm:$0xff]
    %v4674 = vld [vmem:[#allocation5 + $0xd88] sm:$0xff]
    %v4675 = vld [vmem:[#allocation5 + $0xd90] sm:$0xff]
    %v4676 = vld [vmem:[#allocation5 + $0xd98] sm:$0xff]
    %v4677 = vld [vmem:[#allocation5 + $0xda0] sm:$0xff]
    %v4678 = vld [vmem:[#allocation5 + $0xda8] sm:$0xff]
    %v4679 = vld [vmem:[#allocation5 + $0xdb0] sm:$0xff]
    %v4680 = vld [vmem:[#allocation5 + $0xdb8] sm:$0xff]
    %v4681 = vld [vmem:[#allocation5 + $0xdc0] sm:$0xff]
    %v4682 = vld [vmem:[#allocation5 + $0xdc8] sm:$0xff]
    %v4683 = vld [vmem:[#allocation5 + $0xdd0] sm:$0xff]
    %v4684 = vld [vmem:[#allocation5 + $0xdd8] sm:$0xff]
    %v4685 = vld [vmem:[#allocation5 + $0xde0] sm:$0xff]
    %v4686 = vld [vmem:[#allocation5 + $0xde8] sm:$0xff]
    %v4687 = vld [vmem:[#allocation5 + $0xdf0] sm:$0xff]
    %v4688 = vld [vmem:[#allocation5 + $0xdf8] sm:$0xff]
    %v4689 = vld [vmem:[#allocation21] sm:$0x3]
    %v4691 = vlaneseq
    %v4692 = vshrl.u32 %v4691, 7
    %v4693 = vsub.s32 0, %v4692
    %v4694 = vrot.slane %v4689, %v4693
    %v4695 = vlaneseq
    %v4696 = vshrl.u32 %v4695, 7
    %v4697 = vsub.s32 1, %v4696
    %v4698 = vrot.slane %v4689, %v4697
    %4701 = vmatprep.subr.bf16.mxu0 %v4594
    %4702 = vmatpush1.bf16.msra.mxu0 %v4593
    %4703 = vmatprep.subr.bf16.mxu0 %v4596
    %4704 = vmatpush1.bf16.msra.mxu0 %v4595
    %4705 = vmatprep.subr.bf16.mxu0 %v4598
    %4706 = vmatpush1.bf16.msra.mxu0 %v4597
    %4707 = vmatprep.subr.bf16.mxu0 %v4600
    %4708 = vmatpush1.bf16.msra.mxu0 %v4599
    %4709 = vmatprep.subr.bf16.mxu0 %v4602
    %4710 = vmatpush1.bf16.msra.mxu0 %v4601
    %4711 = vmatprep.subr.bf16.mxu0 %v4604
    %4712 = vmatpush1.bf16.msra.mxu0 %v4603
    %4713 = vmatprep.subr.bf16.mxu0 %v4606
    %4714 = vmatpush1.bf16.msra.mxu0 %v4605
    %4715 = vmatprep.subr.bf16.mxu0 %v4608
    %4716 = vmatpush1.bf16.msra.mxu0 %v4607
    %4717 = vmatprep.subr.bf16.mxu0 %v4610
    %4718 = vmatpush1.bf16.msra.mxu0 %v4609
    %4719 = vmatprep.subr.bf16.mxu0 %v4612
    %4720 = vmatpush1.bf16.msra.mxu0 %v4611
    %4721 = vmatprep.subr.bf16.mxu0 %v4614
    %4722 = vmatpush1.bf16.msra.mxu0 %v4613
    %4723 = vmatprep.subr.bf16.mxu0 %v4616
    %4724 = vmatpush1.bf16.msra.mxu0 %v4615
    %4725 = vmatprep.subr.bf16.mxu0 %v4618
    %4726 = vmatpush1.bf16.msra.mxu0 %v4617
    %4727 = vmatprep.subr.bf16.mxu0 %v4620
    %4728 = vmatpush1.bf16.msra.mxu0 %v4619
    %4729 = vmatprep.subr.bf16.mxu0 %v4622
    %4730 = vmatpush1.bf16.msra.mxu0 %v4621
    %4731 = vmatprep.subr.bf16.mxu0 %v4624
    %4732 = vmatpush1.bf16.msra.mxu0 %v4623
    %4733 = vmatprep.mubr.bf16.mxu0 %v4582
    %4734 = vmatmul.mubr.bf16.gmra.mrb[0].mxu0 %v4581
    %v4735 = vpop.f32.mrb[0].mxu0
    %v4736 = vadd.f32 %v4694, %v4735
    %v4737 = vpop.f32.mrb[0].mxu0
    %v4738 = vadd.f32 %v4698, %v4737
    %v4739 = vpop.f32.mrb[0].mxu0
    %v4740 = vadd.f32 %v4694, %v4739
    %v4741 = vpop.f32.mrb[0].mxu0
    %v4742 = vadd.f32 %v4698, %v4741
    %4743 = vmatprep.mubr.bf16.mxu0 %v4588
    %4744 = vmatmul.mubr.bf16.gmra.mrb[0].mxu0 %v4587
    %v4745 = vpop.f32.mrb[0].mxu0
    %v4746 = vadd.f32 %v4694, %v4745
    %v4747 = vpop.f32.mrb[0].mxu0
    %v4748 = vadd.f32 %v4698, %v4747
    %v4749 = vpop.f32.mrb[0].mxu0
    %v4750 = vadd.f32 %v4694, %v4749
    %v4751 = vpop.f32.mrb[0].mxu0
    %v4752 = vadd.f32 %v4698, %v4751
    %4753 = vdwg.mxu0
    %4754 = vmatprep.subr.bf16.mxu0 %v4626
    %4755 = vmatpush1.bf16.msra.mxu0 %v4625
    %4756 = vmatprep.subr.bf16.mxu0 %v4628
    %4757 = vmatpush1.bf16.msra.mxu0 %v4627
    %4758 = vmatprep.subr.bf16.mxu0 %v4630
    %4759 = vmatpush1.bf16.msra.mxu0 %v4629
    %4760 = vmatprep.subr.bf16.mxu0 %v4632
    %4761 = vmatpush1.bf16.msra.mxu0 %v4631
    %4762 = vmatprep.subr.bf16.mxu0 %v4634
    %4763 = vmatpush1.bf16.msra.mxu0 %v4633
    %4764 = vmatprep.subr.bf16.mxu0 %v4636
    %4765 = vmatpush1.bf16.msra.mxu0 %v4635
    %4766 = vmatprep.subr.bf16.mxu0 %v4638
    %4767 = vmatpush1.bf16.msra.mxu0 %v4637
    %4768 = vmatprep.subr.bf16.mxu0 %v4640
    %4769 = vmatpush1.bf16.msra.mxu0 %v4639
    %4770 = vmatprep.subr.bf16.mxu0 %v4642
    %4771 = vmatpush1.bf16.msra.mxu0 %v4641
    %4772 = vmatprep.subr.bf16.mxu0 %v4644
    %4773 = vmatpush1.bf16.msra.mxu0 %v4643
    %4774 = vmatprep.subr.bf16.mxu0 %v4646
    %4775 = vmatpush1.bf16.msra.mxu0 %v4645
    %4776 = vmatprep.subr.bf16.mxu0 %v4648
    %4777 = vmatpush1.bf16.msra.mxu0 %v4647
    %4778 = vmatprep.subr.bf16.mxu0 %v4650
    %4779 = vmatpush1.bf16.msra.mxu0 %v4649
    %4780 = vmatprep.subr.bf16.mxu0 %v4652
    %4781 = vmatpush1.bf16.msra.mxu0 %v4651
    %4782 = vmatprep.subr.bf16.mxu0 %v4654
    %4783 = vmatpush1.bf16.msra.mxu0 %v4653
    %4784 = vmatprep.subr.bf16.mxu0 %v4656
    %4785 = vmatpush1.bf16.msra.mxu0 %v4655
    %4786 = vmatprep.mubr.bf16.mxu0 %v4584
    %4787 = vmatmul.mubr.bf16.gmra.mrb[0].mxu0 %v4583
    %v4788 = vpop.f32.mrb[0].mxu0
    %v4789 = vadd.f32 %v4736, %v4788
    %v4790 = vpop.f32.mrb[0].mxu0
    %v4791 = vadd.f32 %v4738, %v4790
    %v4792 = vpop.f32.mrb[0].mxu0
    %v4793 = vadd.f32 %v4740, %v4792
    %v4794 = vpop.f32.mrb[0].mxu0
    %v4795 = vadd.f32 %v4742, %v4794
    %4796 = vmatprep.mubr.bf16.mxu0 %v4590
    %4797 = vmatmul.mubr.bf16.gmra.mrb[0].mxu0 %v4589
    %v4798 = vpop.f32.mrb[0].mxu0
    %v4799 = vadd.f32 %v4746, %v4798
    %v4800 = vpop.f32.mrb[0].mxu0
    %v4801 = vadd.f32 %v4748, %v4800
    %v4802 = vpop.f32.mrb[0].mxu0
    %v4803 = vadd.f32 %v4750, %v4802
    %v4804 = vpop.f32.mrb[0].mxu0
    %v4805 = vadd.f32 %v4752, %v4804
    %4806 = vdwg.mxu0
    %4807 = vmatprep.subr.bf16.mxu0 %v4658
    %4808 = vmatpush1.bf16.msra.mxu0 %v4657
    %4809 = vmatprep.subr.bf16.mxu0 %v4660
    %4810 = vmatpush1.bf16.msra.mxu0 %v4659
    %4811 = vmatprep.subr.bf16.mxu0 %v4662
    %4812 = vmatpush1.bf16.msra.mxu0 %v4661
    %4813 = vmatprep.subr.bf16.mxu0 %v4664
    %4814 = vmatpush1.bf16.msra.mxu0 %v4663
    %4815 = vmatprep.subr.bf16.mxu0 %v4666
    %4816 = vmatpush1.bf16.msra.mxu0 %v4665
    %4817 = vmatprep.subr.bf16.mxu0 %v4668
    %4818 = vmatpush1.bf16.msra.mxu0 %v4667
    %4819 = vmatprep.subr.bf16.mxu0 %v4670
    %4820 = vmatpush1.bf16.msra.mxu0 %v4669
    %4821 = vmatprep.subr.bf16.mxu0 %v4672
    %4822 = vmatpush1.bf16.msra.mxu0 %v4671
    %4823 = vmatprep.subr.bf16.mxu0 %v4674
    %4824 = vmatpush1.bf16.msra.mxu0 %v4673
    %4825 = vmatprep.subr.bf16.mxu0 %v4676
    %4826 = vmatpush1.bf16.msra.mxu0 %v4675
    %4827 = vmatprep.subr.bf16.mxu0 %v4678
    %4828 = vmatpush1.bf16.msra.mxu0 %v4677
    %4829 = vmatprep.subr.bf16.mxu0 %v4680
    %4830 = vmatpush1.bf16.msra.mxu0 %v4679
    %4831 = vmatprep.subr.bf16.mxu0 %v4682
    %4832 = vmatpush1.bf16.msra.mxu0 %v4681
    %4833 = vmatprep.subr.bf16.mxu0 %v4684
    %4834 = vmatpush1.bf16.msra.mxu0 %v4683
    %4835 = vmatprep.subr.bf16.mxu0 %v4686
    %4836 = vmatpush1.bf16.msra.mxu0 %v4685
    %4837 = vmatprep.subr.bf16.mxu0 %v4688
    %4838 = vmatpush1.bf16.msra.mxu0 %v4687
    %4839 = vmatprep.mubr.bf16.mxu0 %v4586
    %4840 = vmatmul.mubr.bf16.gmra.mrb[0].mxu0 %v4585
    %v4841 = vpop.f32.mrb[0].mxu0
    %v4842 = vadd.f32 %v4789, %v4841
    %v4843 = vpop.f32.mrb[0].mxu0
    %v4844 = vadd.f32 %v4791, %v4843
    %v4845 = vpop.f32.mrb[0].mxu0
    %v4846 = vadd.f32 %v4793, %v4845
    %v4847 = vpop.f32.mrb[0].mxu0
    %v4848 = vadd.f32 %v4795, %v4847
    %4849 = vmatprep.mubr.bf16.mxu0 %v4592
    %4850 = vmatmul.mubr.bf16.gmra.mrb[0].mxu0 %v4591
    %v4851 = vpop.f32.mrb[0].mxu0
    %v4852 = vadd.f32 %v4799, %v4851
    %v4853 = vpop.f32.mrb[0].mxu0
    %v4854 = vadd.f32 %v4801, %v4853
    %v4855 = vpop.f32.mrb[0].mxu0
    %v4856 = vadd.f32 %v4803, %v4855
    %v4857 = vpop.f32.mrb[0].mxu0
    %v4858 = vadd.f32 %v4805, %v4857
    %4859 = vdwg.mxu0
    %v4860 = vmax.f32 %v4842, 0.0
    %v4861 = vmax.f32 %v4844, 0.0
    %v4862 = vmax.f32 %v4846, 0.0
    %v4863 = vmax.f32 %v4848, 0.0
    %v4864 = vmax.f32 %v4852, 0.0
    %v4865 = vmax.f32 %v4854, 0.0
    %v4866 = vmax.f32 %v4856, 0.0
    %v4867 = vmax.f32 %v4858, 0.0
    %v4868 = vld [vmem:[#allocation3] sm:$0xff]
    %v4869 = vld [vmem:[#allocation3 + $0x8] sm:$0xff]
    %v4870 = vld [vmem:[#allocation3 + $0x10] sm:$0xff]
    %v4871 = vld [vmem:[#allocation3 + $0x18] sm:$0xff]
    %v4872 = vld [vmem:[#allocation3 + $0x20] sm:$0xff]
    %v4873 = vld [vmem:[#allocation3 + $0x28] sm:$0xff]
    %v4874 = vld [vmem:[#allocation3 + $0x30] sm:$0xff]
    %v4875 = vld [vmem:[#allocation3 + $0x38] sm:$0xff]
    %v4876 = vadd.f32 %v4860, %v4868
    %v4877 = vadd.f32 %v4861, %v4869
    %v4878 = vadd.f32 %v4862, %v4870
    %v4879 = vadd.f32 %v4863, %v4871
    %v4880 = vadd.f32 %v4864, %v4872
    %v4881 = vadd.f32 %v4865, %v4873
    %v4882 = vadd.f32 %v4866, %v4874
    %v4883 = vadd.f32 %v4867, %v4875
    %4884 = vst [vmem:[%s17] sm:$0xff] %v4876
    %4885 = vst [vmem:[%s17 + $0x8] sm:$0xff] %v4877
    %4886 = vst [vmem:[%s17 + $0x10] sm:$0xff] %v4878
    %4887 = vst [vmem:[%s17 + $0x18] sm:$0xff] %v4879
    %4888 = vst [vmem:[%s17 + $0x20] sm:$0xff] %v4880
    %4889 = vst [vmem:[%s17 + $0x28] sm:$0xff] %v4881
    %4890 = vst [vmem:[%s17 + $0x30] sm:$0xff] %v4882
    %4891 = vst [vmem:[%s17 + $0x38] sm:$0xff] %v4883
    // Predicated region
    $region86: #{tinynet_forward.1} parent=1 // pred_check
      _
    $region87: #{tinynet_forward.1} parent=1 // pred_check_branch
      %4893 = sbr.rel (0) target = $region89
    $region88: #{tinynet_forward.1} parent=1 // pred_region
      _
    $region89: #{tinynet_forward.1} parent=1 // pred_fallthru
      _
    // Predicated region
    $region90: #{tinynet_forward.1} parent=1 // pred_check
      _
    $region91: #{tinynet_forward.1} parent=1 // pred_check_branch
      %4895 = sbr.rel (0) target = $region93
    $region92: #{tinynet_forward.1} parent=1 // pred_region
      _
    $region93: #{tinynet_forward.1} parent=1 // pred_fallthru
      _
    %4896 = vsyncpa [#allocation8], 1
    %4897 = vsyncpa [#allocation10], 1
    %4898 = vsyncpa [#allocation13], 1
    %4899 = vsyncpa [#allocation16], 1
    %4900 = vsyncpa [#allocation19], 1
    %4901 = vsyncpa [#allocation22], 1
  %4902 = vsyncmov [#allocation6]
  %s4903 = vpop.sfrf %4902
  %p4904 = scmp.eq.s32.totalorder %s4903, 0
  %p4905 = pneg %p4904
  %4907 = shalt.err (%p4905)
  %s4908 = scalar_lea.sflag [#allocation6], 1
  %4909 = vsyncmov %s4908
  %s4910 = vpop.sfrf %4909
  %p4911 = scmp.eq.s32.totalorder %s4910, 0
  %p4912 = pneg %p4911
  %4914 = shalt.err (%p4912)

</llo_original>
